<compile_context>
chip_gen: v7x
topology: tpu7x:2x2x1
jax: 0.10.0
libtpu: 0.0.40
codegen_flags: <defaults>
</compile_context>

<pallas_src>
import functools

import jax
import jax.numpy as jnp
import numpy as np
from jax.experimental import pallas as pl
from jax.experimental.pallas import tpu as pltpu

VMEM_SPEC = pl.BlockSpec(memory_space=pltpu.MemorySpace.VMEM)

# Padded geometry: lane-dense features, sublane-aligned rows, fixed edge budget.
FEAT_PAD = 128   # feature dim padded to a full vreg lane width
EDGE_PAD = 128   # per-relation edge budget (padded edges get dst = -1)
ROW_PAD = 8      # node rows padded to a sublane multiple


def _round_up(n, m):
    return ((n + m - 1) // m) * m


# ------------------------------ fused kernel -------------------------------

def _gnn_fused_kernel(
        # edge indices, relation order: m->job, job->job, job->m, m->m
        dst_mj_ref, src_mj_ref, dst_jj_ref, src_jj_ref,
        dst_jm_ref, src_jm_ref, dst_mm_ref, src_mm_ref,
        # node features / edge attributes (zero padded to (rows, 128))
        xjob_ref, xm_ref, ea_mj_ref, ea_jm_ref,
        # m_trans_fc
        wmt_ref, bmt_ref,
        # stacked per-layer relation MLP weights, index = 4*layer + relation
        w1a_ref, w1b_ref, b1_ref, w2_ref, b2_ref,
        # final per-type Linear
        wjob_ref, bjob_ref, wm_ref, bm_ref,
        # outputs
        ojob_ref, om_ref,
        *, num_layers):
    f32 = jnp.float32
    nj = xjob_ref.shape[0]
    nm = xm_ref.shape[0]

    def one_hot_rows(idx_ref, n_rows):
        # (n_rows, E): M[r, e] = 1.0 if idx[e] == r else 0.0 (padded idx = -1).
        it = jax.lax.broadcasted_iota(jnp.int32, (n_rows, idx_ref.shape[-1]), 0)
        return (it == idx_ref[...]).astype(f32)

    def scatter_and_adjacency(dst_ref, src_ref, n_dst, n_src):
        s = one_hot_rows(dst_ref, n_dst)          # scatter-add matrix (n_dst, E)
        gt = one_hot_rows(src_ref, n_src)         # gather matrix^T   (n_src, E)
        # A[i, j] = #edges j -> i  (gather + scatter fused), contracted over E.
        a = jax.lax.dot_general(s, gt, (((1,), (1,)), ((), ())),
                                preferred_element_type=f32)
        return s, a

    # Adjacencies are layer-invariant: build once, reuse every layer.
    s_mj, a_mj = scatter_and_adjacency(dst_mj_ref, src_mj_ref, nj, nm)  # m  ->job
    _, a_jj = scatter_and_adjacency(dst_jj_ref, src_jj_ref, nj, nj)     # job->job
    s_jm, a_jm = scatter_and_adjacency(dst_jm_ref, src_jm_ref, nm, nj)  # job->m
    _, a_mm = scatter_and_adjacency(dst_mm_ref, src_mm_ref, nm, nm)     # m  ->m

    # Edge-attribute half of the GINE message only depends on edge_attr, so
    # aggregate it once and reuse it in every layer.
    agg_e_mj = jnp.dot(s_mj, ea_mj_ref[...], preferred_element_type=f32)
    agg_e_jm = jnp.dot(s_jm, ea_jm_ref[...], preferred_element_type=f32)

    # x_dict['m'] = m_trans_fc(x_dict['m'])
    x_job = xjob_ref[...]
    x_m = (jnp.dot(xm_ref[...], wmt_ref[...], preferred_element_type=f32)
           + bmt_ref[...])

    def gine_mlp(layer, rel, agg_x, agg_e=None, edge_slot=0):
        # MLP([in, hid, hid]) == Linear -> ReLU -> Linear on the scatter-added
        # concat(x_j, edge_attr); the concat is a sum of two matmuls against
        # the split weight blocks W1a (node part) and W1b (edge-attr part).
        # TODO(synk): BatchNorm1d between the two Linears is omitted.
        i = 4 * layer + rel
        pre = jnp.dot(agg_x, w1a_ref[i], preferred_element_type=f32)
        if agg_e is not None:
            pre = pre + jnp.dot(agg_e, w1b_ref[2 * layer + edge_slot],
                                preferred_element_type=f32)
        h = jnp.maximum(pre + b1_ref[i], 0.0)
        return jnp.dot(h, w2_ref[i], preferred_element_type=f32) + b2_ref[i]

    for layer in range(num_layers):           # static unroll (num_layers small)
        agg_mj = jnp.dot(a_mj, x_m, preferred_element_type=f32)
        agg_jj = jnp.dot(a_jj, x_job, preferred_element_type=f32)
        agg_jm = jnp.dot(a_jm, x_job, preferred_element_type=f32)
        agg_mm = jnp.dot(a_mm, x_m, preferred_element_type=f32)

        out_mj = gine_mlp(layer, 0, agg_mj, agg_e_mj, 0)   # ('m','to','job')
        out_jj = gine_mlp(layer, 1, agg_jj)                # ('job','to','job')
        out_jm = gine_mlp(layer, 2, agg_jm, agg_e_jm, 1)   # ('job','to','m')
        out_mm = gine_mlp(layer, 3, agg_mm)                # ('m','to','m')

        # HeteroConv(aggr='sum') followed by the per-layer F.relu.
        x_job = jnp.maximum(out_mj + out_jj, 0.0)
        x_m = jnp.maximum(out_jm + out_mm, 0.0)

    ojob_ref[...] = (jnp.dot(x_job, wjob_ref[...], preferred_element_type=f32)
                     + bjob_ref[...])
    om_ref[...] = (jnp.dot(x_m, wm_ref[...], preferred_element_type=f32)
                   + bm_ref[...])


# ------------------------- parameter initialization ------------------------

def init_linear_params(key, fan_in, fan_out):
    kw, kb = jax.random.split(key)
    bound = 1.0 / (fan_in ** 0.5)
    w = jax.random.uniform(kw, (fan_in, fan_out), jnp.float32, -bound, bound)
    b = jax.random.uniform(kb, (1, fan_out), jnp.float32, -bound, bound)
    return w, b


def init_mlp_params(key, dims):
    """dims = [in, hidden, out] -> (W1, b1, W2, b2)."""
    k1, k2 = jax.random.split(key)
    w1, b1 = init_linear_params(k1, dims[0], dims[1])
    w2, b2 = init_linear_params(k2, dims[1], dims[2])
    return (w1, b1, w2, b2)


def init_gnn_params(key, num_layers, hidden_dim):
    keys = jax.random.split(key, 3 + num_layers)
    params = {
        "m_trans_fc": init_linear_params(keys[0], 4, 7),
        "job_fc": init_linear_params(keys[1], hidden_dim, hidden_dim),
        "m_fc": init_linear_params(keys[2], hidden_dim, hidden_dim),
        "convs": [],
    }
    in_dim = 7
    for li in range(num_layers):
        lk = jax.random.split(keys[3 + li], 4)
        params["convs"].append({
            "job_to_m":   init_mlp_params(lk[0], [in_dim + 4, hidden_dim, hidden_dim]),
            "m_to_job":   init_mlp_params(lk[1], [in_dim + 4, hidden_dim, hidden_dim]),
            "job_to_job": init_mlp_params(lk[2], [in_dim, hidden_dim, hidden_dim]),
            "m_to_m":     init_mlp_params(lk[3], [in_dim, hidden_dim, hidden_dim]),
        })
        in_dim = hidden_dim
    return params


# ------------------------- padding / weight packing -------------------------

def _pad2(a, rows, cols):
    out = jnp.zeros((rows, cols), jnp.float32)
    return out.at[:a.shape[0], :a.shape[1]].set(a.astype(jnp.float32))


def _pad_idx(idx, fill=-1):
    out = jnp.full((1, EDGE_PAD), fill, jnp.int32)
    return out.at[0, :idx.shape[0]].set(idx.astype(jnp.int32))


def pack_gnn_params(params):
    """Zero-pad all weights to lane-dense (128, 128) blocks and stack the
    per-layer relation MLPs so they can be indexed with a static int inside
    the kernel.  Relation order: [m->job, job->job, job->m, m->m]."""
    num_layers = len(params["convs"])
    hidden_dim = params["job_fc"][0].shape[0]

    packed = {
        "wmt": _pad2(params["m_trans_fc"][0], FEAT_PAD, FEAT_PAD),
        "bmt": _pad2(params["m_trans_fc"][1], 1, FEAT_PAD),
        "wjob": _pad2(params["job_fc"][0], FEAT_PAD, FEAT_PAD),
        "bjob": _pad2(params["job_fc"][1], 1, FEAT_PAD),
        "wm": _pad2(params["m_fc"][0], FEAT_PAD, FEAT_PAD),
        "bm": _pad2(params["m_fc"][1], 1, FEAT_PAD),
    }

    rel_keys = ["m_to_job", "job_to_job", "job_to_m", "m_to_m"]
    edge_rel_slot = {"m_to_job": 0, "job_to_m": 1}

    w1a = jnp.zeros((num_layers * 4, FEAT_PAD, FEAT_PAD), jnp.float32)
    w1b = jnp.zeros((num_layers * 2, FEAT_PAD, FEAT_PAD), jnp.float32)
    b1 = jnp.zeros((num_layers * 4, 1, FEAT_PAD), jnp.float32)
    w2 = jnp.zeros((num_layers * 4, FEAT_PAD, FEAT_PAD), jnp.float32)
    b2 = jnp.zeros((num_layers * 4, 1, FEAT_PAD), jnp.float32)

    in_dim = 7
    for l, layer_p in enumerate(params["convs"]):
        for r, key in enumerate(rel_keys):
            W1, B1, W2, B2 = layer_p[key]
            i = 4 * l + r
            w1a = w1a.at[i, :in_dim, :hidden_dim].set(W1[:in_dim])
            if key in edge_rel_slot:
                j = 2 * l + edge_rel_slot[key]
                w1b = w1b.at[j, :4, :hidden_dim].set(W1[in_dim:in_dim + 4])
            b1 = b1.at[i, :, :hidden_dim].set(B1)
            w2 = w2.at[i, :hidden_dim, :hidden_dim].set(W2)
            b2 = b2.at[i, :, :hidden_dim].set(B2)
        in_dim = hidden_dim

    packed.update(w1a=w1a, w1b=w1b, b1=b1, w2=w2, b2=b2)
    return packed


# ------------------------------- GNN forward -------------------------------

@jax.jit
def gnn_forward(params, x_job, x_m, edges, edge_attrs):
    """edges: dict rel -> (src_idx, dst_idx); edge_attrs: dict rel -> (E,4)."""
    num_layers = len(params["convs"])
    hidden_dim = params["job_fc"][0].shape[0]
    assert hidden_dim <= FEAT_PAD

    n_job, n_m = x_job.shape[0], x_m.shape[0]
    nj_p = max(_round_up(n_job, ROW_PAD), ROW_PAD)
    nm_p = max(_round_up(n_m, ROW_PAD), ROW_PAD)

    packed = pack_gnn_params(params)

    rels = [("m", "to", "job"), ("job", "to", "job"),
            ("job", "to", "m"), ("m", "to", "m")]
    idx_args = []
    for rel in rels:
        src_idx, dst_idx = edges[rel]
        assert src_idx.shape[0] <= EDGE_PAD
        idx_args.append(_pad_idx(dst_idx))   # padded edges: dst = -1 -> ignored
        idx_args.append(_pad_idx(src_idx))

    ea_mj = _pad2(edge_attrs[("m", "to", "job")], EDGE_PAD, FEAT_PAD)
    ea_jm = _pad2(edge_attrs[("job", "to", "m")], EDGE_PAD, FEAT_PAD)

    xj_p = _pad2(x_job, nj_p, FEAT_PAD)
    xm_p = _pad2(x_m, nm_p, FEAT_PAD)

    inputs = (*idx_args, xj_p, xm_p, ea_mj, ea_jm,
              packed["wmt"], packed["bmt"],
              packed["w1a"], packed["w1b"], packed["b1"],
              packed["w2"], packed["b2"],
              packed["wjob"], packed["bjob"], packed["wm"], packed["bm"])

    flops = 2 * FEAT_PAD * FEAT_PAD * (nj_p + nm_p) * (4 * num_layers + 3)
    bytes_accessed = int(sum(int(a.size) * 4 for a in inputs)
                         + 4 * FEAT_PAD * (nj_p + nm_p))

    out_job, out_m = pl.pallas_call(
        functools.partial(_gnn_fused_kernel, num_layers=num_layers),
        out_shape=(jax.ShapeDtypeStruct((nj_p, FEAT_PAD), jnp.float32),
                   jax.ShapeDtypeStruct((nm_p, FEAT_PAD), jnp.float32)),
        in_specs=[VMEM_SPEC] * len(inputs),
        out_specs=(VMEM_SPEC, VMEM_SPEC),
        cost_estimate=pl.CostEstimate(flops=flops, transcendentals=0,
                                      bytes_accessed=bytes_accessed),
    )(*inputs)

    return {"job": out_job[:n_job, :hidden_dim], "m": out_m[:n_m, :hidden_dim]}


# ----------------------- pure-JAX reference (checking) ----------------------

def gnn_forward_ref(params, x_job, x_m, edges, edge_attrs):
    x = {"job": x_job,
         "m": x_m @ params["m_trans_fc"][0] + params["m_trans_fc"][1]}
    n_nodes = {"job": x_job.shape[0], "m": x_m.shape[0]}

    def mlp(p, z):
        w1, b1, w2, b2 = p
        return jnp.maximum(z @ w1 + b1, 0.0) @ w2 + b2

    def rel_agg(rel, xd):
        src_t, _, dst_t = rel
        src_idx, dst_idx = edges[rel]
        msg = xd[src_t][src_idx]
        if rel in edge_attrs:
            msg = jnp.concatenate([msg, edge_attrs[rel]], axis=1)
        return jax.ops.segment_sum(msg, dst_idx, num_segments=n_nodes[dst_t])

    for layer_p in params["convs"]:
        agg_mj = rel_agg(("m", "to", "job"), x)
        agg_jj = rel_agg(("job", "to", "job"), x)
        agg_jm = rel_agg(("job", "to", "m"), x)
        agg_mm = rel_agg(("m", "to", "m"), x)
        new_job = jnp.maximum(mlp(layer_p["m_to_job"], agg_mj)
                              + mlp(layer_p["job_to_job"], agg_jj), 0.0)
        new_m = jnp.maximum(mlp(layer_p["job_to_m"], agg_jm)
                            + mlp(layer_p["m_to_m"], agg_mm), 0.0)
        x = {"job": new_job, "m": new_m}
    x["job"] = x["job"] @ params["job_fc"][0] + params["job_fc"][1]
    x["m"] = x["m"] @ params["m_fc"][0] + params["m_fc"][1]
    return x


# ----------------------------------- main -----------------------------------

if __name__ == "__main__":
    key = jax.random.PRNGKey(0)
    k_feat, k_edge, k_param = jax.random.split(key, 3)

    N_JOB, N_M = 8, 4
    HIDDEN_DIM, NUM_LAYERS = 32, 2
    E_JM, E_MJ, E_JJ, E_MM = 10, 10, 12, 6

    kj, km = jax.random.split(k_feat)
    x_job = jax.random.normal(kj, (N_JOB, 7), dtype=jnp.float32)
    x_m = jax.random.normal(km, (N_M, 4), dtype=jnp.float32)

    ek = jax.random.split(k_edge, 6)
    edges = {
        ("job", "to", "m"): (
            jax.random.randint(ek[0], (E_JM,), 0, N_JOB),
            jax.random.randint(ek[1], (E_JM,), 0, N_M),
        ),
        ("m", "to", "job"): (
            jax.random.randint(ek[2], (E_MJ,), 0, N_M),
            jax.random.randint(ek[3], (E_MJ,), 0, N_JOB),
        ),
        ("job", "to", "job"): (
            jax.random.randint(ek[4], (E_JJ,), 0, N_JOB),
            (jax.random.randint(ek[4], (E_JJ,), 0, N_JOB) + 1) % N_JOB,
        ),
        ("m", "to", "m"): (
            jax.random.randint(ek[5], (E_MM,), 0, N_M),
            (jax.random.randint(ek[5], (E_MM,), 0, N_M) + 1) % N_M,
        ),
    }
    ak1, ak2 = jax.random.split(jax.random.PRNGKey(42))
    edge_attrs = {
        ("job", "to", "m"): jax.random.normal(ak1, (E_JM, 4), dtype=jnp.float32),
        ("m", "to", "job"): jax.random.normal(ak2, (E_MJ, 4), dtype=jnp.float32),
    }

    params = init_gnn_params(k_param, NUM_LAYERS, HIDDEN_DIM)

    out = gnn_forward(params, x_job, x_m, edges, edge_attrs)
    jax.block_until_ready(out["job"])
    jax.block_until_ready(out["m"])

    assert out["job"].shape == (N_JOB, HIDDEN_DIM)
    assert out["m"].shape == (N_M, HIDDEN_DIM)

    ref = gnn_forward_ref(params, x_job, x_m, edges, edge_attrs)
    np.testing.assert_allclose(np.asarray(out["job"]), np.asarray(ref["job"]),
                               rtol=2e-2, atol=2e-2)
    np.testing.assert_allclose(np.asarray(out["m"]), np.asarray(ref["m"]),
                               rtol=2e-2, atol=2e-2)

    print("KERNEL_OK")
</pallas_src>

<mosaic_0001>
module attributes {stable_mosaic.version = 11 : i64} {
  func.func @_gnn_fused_kernel(%arg0: memref<1x128xi32, #tpu.memory_space<vmem>>, %arg1: memref<1x128xi32, #tpu.memory_space<vmem>>, %arg2: memref<1x128xi32, #tpu.memory_space<vmem>>, %arg3: memref<1x128xi32, #tpu.memory_space<vmem>>, %arg4: memref<1x128xi32, #tpu.memory_space<vmem>>, %arg5: memref<1x128xi32, #tpu.memory_space<vmem>>, %arg6: memref<1x128xi32, #tpu.memory_space<vmem>>, %arg7: memref<1x128xi32, #tpu.memory_space<vmem>>, %arg8: memref<8x128xf32, #tpu.memory_space<vmem>>, %arg9: memref<8x128xf32, #tpu.memory_space<vmem>>, %arg10: memref<128x128xf32, #tpu.memory_space<vmem>>, %arg11: memref<128x128xf32, #tpu.memory_space<vmem>>, %arg12: memref<128x128xf32, #tpu.memory_space<vmem>>, %arg13: memref<1x128xf32, #tpu.memory_space<vmem>>, %arg14: memref<8x128x128xf32, #tpu.memory_space<vmem>>, %arg15: memref<4x128x128xf32, #tpu.memory_space<vmem>>, %arg16: memref<8x1x128xf32, #tpu.memory_space<vmem>>, %arg17: memref<8x128x128xf32, #tpu.memory_space<vmem>>, %arg18: memref<8x1x128xf32, #tpu.memory_space<vmem>>, %arg19: memref<128x128xf32, #tpu.memory_space<vmem>>, %arg20: memref<1x128xf32, #tpu.memory_space<vmem>>, %arg21: memref<128x128xf32, #tpu.memory_space<vmem>>, %arg22: memref<1x128xf32, #tpu.memory_space<vmem>>, %arg23: memref<8x128xf32, #tpu.memory_space<vmem>>, %arg24: memref<8x128xf32, #tpu.memory_space<vmem>>) attributes {dimension_semantics = [], scalar_prefetch = 0 : i64, scratch_operands = 0 : i64, tpu.core_type = #tpu.core_type<tc>} {
    %0 = tpu.iota {dimensions = array<i32: 0>} : vector<8x128xi32>
    %c0 = arith.constant 0 : index
    %c0_0 = arith.constant 0 : index
    %1 = vector.load %arg0[%c0, %c0_0] : memref<1x128xi32, #tpu.memory_space<vmem>>, vector<1x128xi32>
    %2 = vector.broadcast %1 : vector<1x128xi32> to vector<8x128xi32>
    %3 = arith.cmpi eq, %0, %2 : vector<8x128xi32>
    %4 = arith.extui %3 : vector<8x128xi1> to vector<8x128xi32>
    %5 = arith.sitofp %4 : vector<8x128xi32> to vector<8x128xf32>
    %6 = tpu.iota {dimensions = array<i32: 0>} : vector<8x128xi32>
    %c0_1 = arith.constant 0 : index
    %c0_2 = arith.constant 0 : index
    %7 = vector.load %arg1[%c0_1, %c0_2] : memref<1x128xi32, #tpu.memory_space<vmem>>, vector<1x128xi32>
    %8 = vector.broadcast %7 : vector<1x128xi32> to vector<8x128xi32>
    %9 = arith.cmpi eq, %6, %8 : vector<8x128xi32>
    %10 = arith.extui %9 : vector<8x128xi1> to vector<8x128xi32>
    %11 = arith.sitofp %10 : vector<8x128xi32> to vector<8x128xf32>
    %cst = arith.constant dense<0.000000e+00> : vector<8x8xf32>
    %12 = tpu.matmul %5, %11, %cst {dimension_numbers = #tpu.dot_dimension_numbers<[1], [1], [0], [0], [0, 0, 1, 0], [], []>} : vector<8x128xf32>, vector<8x128xf32>, vector<8x8xf32> -> vector<8x8xf32>
    %13 = tpu.iota {dimensions = array<i32: 0>} : vector<8x128xi32>
    %c0_3 = arith.constant 0 : index
    %c0_4 = arith.constant 0 : index
    %14 = vector.load %arg2[%c0_3, %c0_4] : memref<1x128xi32, #tpu.memory_space<vmem>>, vector<1x128xi32>
    %15 = vector.broadcast %14 : vector<1x128xi32> to vector<8x128xi32>
    %16 = arith.cmpi eq, %13, %15 : vector<8x128xi32>
    %17 = arith.extui %16 : vector<8x128xi1> to vector<8x128xi32>
    %18 = arith.sitofp %17 : vector<8x128xi32> to vector<8x128xf32>
    %19 = tpu.iota {dimensions = array<i32: 0>} : vector<8x128xi32>
    %c0_5 = arith.constant 0 : index
    %c0_6 = arith.constant 0 : index
    %20 = vector.load %arg3[%c0_5, %c0_6] : memref<1x128xi32, #tpu.memory_space<vmem>>, vector<1x128xi32>
    %21 = vector.broadcast %20 : vector<1x128xi32> to vector<8x128xi32>
    %22 = arith.cmpi eq, %19, %21 : vector<8x128xi32>
    %23 = arith.extui %22 : vector<8x128xi1> to vector<8x128xi32>
    %24 = arith.sitofp %23 : vector<8x128xi32> to vector<8x128xf32>
    %cst_7 = arith.constant dense<0.000000e+00> : vector<8x8xf32>
    %25 = tpu.matmul %18, %24, %cst_7 {dimension_numbers = #tpu.dot_dimension_numbers<[1], [1], [0], [0], [0, 0, 1, 0], [], []>} : vector<8x128xf32>, vector<8x128xf32>, vector<8x8xf32> -> vector<8x8xf32>
    %26 = tpu.iota {dimensions = array<i32: 0>} : vector<8x128xi32>
    %c0_8 = arith.constant 0 : index
    %c0_9 = arith.constant 0 : index
    %27 = vector.load %arg4[%c0_8, %c0_9] : memref<1x128xi32, #tpu.memory_space<vmem>>, vector<1x128xi32>
    %28 = vector.broadcast %27 : vector<1x128xi32> to vector<8x128xi32>
    %29 = arith.cmpi eq, %26, %28 : vector<8x128xi32>
    %30 = arith.extui %29 : vector<8x128xi1> to vector<8x128xi32>
    %31 = arith.sitofp %30 : vector<8x128xi32> to vector<8x128xf32>
    %32 = tpu.iota {dimensions = array<i32: 0>} : vector<8x128xi32>
    %c0_10 = arith.constant 0 : index
    %c0_11 = arith.constant 0 : index
    %33 = vector.load %arg5[%c0_10, %c0_11] : memref<1x128xi32, #tpu.memory_space<vmem>>, vector<1x128xi32>
    %34 = vector.broadcast %33 : vector<1x128xi32> to vector<8x128xi32>
    %35 = arith.cmpi eq, %32, %34 : vector<8x128xi32>
    %36 = arith.extui %35 : vector<8x128xi1> to vector<8x128xi32>
    %37 = arith.sitofp %36 : vector<8x128xi32> to vector<8x128xf32>
    %cst_12 = arith.constant dense<0.000000e+00> : vector<8x8xf32>
    %38 = tpu.matmul %31, %37, %cst_12 {dimension_numbers = #tpu.dot_dimension_numbers<[1], [1], [0], [0], [0, 0, 1, 0], [], []>} : vector<8x128xf32>, vector<8x128xf32>, vector<8x8xf32> -> vector<8x8xf32>
    %39 = tpu.iota {dimensions = array<i32: 0>} : vector<8x128xi32>
    %c0_13 = arith.constant 0 : index
    %c0_14 = arith.constant 0 : index
    %40 = vector.load %arg6[%c0_13, %c0_14] : memref<1x128xi32, #tpu.memory_space<vmem>>, vector<1x128xi32>
    %41 = vector.broadcast %40 : vector<1x128xi32> to vector<8x128xi32>
    %42 = arith.cmpi eq, %39, %41 : vector<8x128xi32>
    %43 = arith.extui %42 : vector<8x128xi1> to vector<8x128xi32>
    %44 = arith.sitofp %43 : vector<8x128xi32> to vector<8x128xf32>
    %45 = tpu.iota {dimensions = array<i32: 0>} : vector<8x128xi32>
    %c0_15 = arith.constant 0 : index
    %c0_16 = arith.constant 0 : index
    %46 = vector.load %arg7[%c0_15, %c0_16] : memref<1x128xi32, #tpu.memory_space<vmem>>, vector<1x128xi32>
    %47 = vector.broadcast %46 : vector<1x128xi32> to vector<8x128xi32>
    %48 = arith.cmpi eq, %45, %47 : vector<8x128xi32>
    %49 = arith.extui %48 : vector<8x128xi1> to vector<8x128xi32>
    %50 = arith.sitofp %49 : vector<8x128xi32> to vector<8x128xf32>
    %cst_17 = arith.constant dense<0.000000e+00> : vector<8x8xf32>
    %51 = tpu.matmul %44, %50, %cst_17 {dimension_numbers = #tpu.dot_dimension_numbers<[1], [1], [0], [0], [0, 0, 1, 0], [], []>} : vector<8x128xf32>, vector<8x128xf32>, vector<8x8xf32> -> vector<8x8xf32>
    %c0_18 = arith.constant 0 : index
    %c0_19 = arith.constant 0 : index
    %52 = vector.load %arg10[%c0_18, %c0_19] : memref<128x128xf32, #tpu.memory_space<vmem>>, vector<128x128xf32>
    %cst_20 = arith.constant dense<0.000000e+00> : vector<8x128xf32>
    %53 = tpu.matmul %5, %52, %cst_20 {dimension_numbers = #tpu.dot_dimension_numbers<[1], [0], [0], [1], [0, 0, 1, 1], [], []>} : vector<8x128xf32>, vector<128x128xf32>, vector<8x128xf32> -> vector<8x128xf32>
    %c0_21 = arith.constant 0 : index
    %c0_22 = arith.constant 0 : index
    %54 = vector.load %arg11[%c0_21, %c0_22] : memref<128x128xf32, #tpu.memory_space<vmem>>, vector<128x128xf32>
    %cst_23 = arith.constant dense<0.000000e+00> : vector<8x128xf32>
    %55 = tpu.matmul %31, %54, %cst_23 {dimension_numbers = #tpu.dot_dimension_numbers<[1], [0], [0], [1], [0, 0, 1, 1], [], []>} : vector<8x128xf32>, vector<128x128xf32>, vector<8x128xf32> -> vector<8x128xf32>
    %c0_24 = arith.constant 0 : index
    %c0_25 = arith.constant 0 : index
    %56 = vector.load %arg8[%c0_24, %c0_25] : memref<8x128xf32, #tpu.memory_space<vmem>>, vector<8x128xf32>
    %c0_26 = arith.constant 0 : index
    %c0_27 = arith.constant 0 : index
    %57 = vector.load %arg9[%c0_26, %c0_27] : memref<8x128xf32, #tpu.memory_space<vmem>>, vector<8x128xf32>
    %c0_28 = arith.constant 0 : index
    %c0_29 = arith.constant 0 : index
    %58 = vector.load %arg12[%c0_28, %c0_29] : memref<128x128xf32, #tpu.memory_space<vmem>>, vector<128x128xf32>
    %cst_30 = arith.constant dense<0.000000e+00> : vector<8x128xf32>
    %59 = tpu.matmul %57, %58, %cst_30 {dimension_numbers = #tpu.dot_dimension_numbers<[1], [0], [0], [1], [0, 0, 1, 1], [], []>} : vector<8x128xf32>, vector<128x128xf32>, vector<8x128xf32> -> vector<8x128xf32>
    %c0_31 = arith.constant 0 : index
    %c0_32 = arith.constant 0 : index
    %60 = vector.load %arg13[%c0_31, %c0_32] : memref<1x128xf32, #tpu.memory_space<vmem>>, vector<1x128xf32>
    %61 = vector.broadcast %60 : vector<1x128xf32> to vector<8x128xf32>
    %62 = arith.addf %59, %61 : vector<8x128xf32>
    %cst_33 = arith.constant dense<0.000000e+00> : vector<8x128xf32>
    %63 = tpu.matmul %12, %62, %cst_33 {dimension_numbers = #tpu.dot_dimension_numbers<[1], [0], [0], [1], [0, 0, 1, 1], [], []>} : vector<8x8xf32>, vector<8x128xf32>, vector<8x128xf32> -> vector<8x128xf32>
    %cst_34 = arith.constant dense<0.000000e+00> : vector<8x128xf32>
    %64 = tpu.matmul %25, %56, %cst_34 {dimension_numbers = #tpu.dot_dimension_numbers<[1], [0], [0], [1], [0, 0, 1, 1], [], []>} : vector<8x8xf32>, vector<8x128xf32>, vector<8x128xf32> -> vector<8x128xf32>
    %cst_35 = arith.constant dense<0.000000e+00> : vector<8x128xf32>
    %65 = tpu.matmul %38, %56, %cst_35 {dimension_numbers = #tpu.dot_dimension_numbers<[1], [0], [0], [1], [0, 0, 1, 1], [], []>} : vector<8x8xf32>, vector<8x128xf32>, vector<8x128xf32> -> vector<8x128xf32>
    %cst_36 = arith.constant dense<0.000000e+00> : vector<8x128xf32>
    %66 = tpu.matmul %51, %62, %cst_36 {dimension_numbers = #tpu.dot_dimension_numbers<[1], [0], [0], [1], [0, 0, 1, 1], [], []>} : vector<8x8xf32>, vector<8x128xf32>, vector<8x128xf32> -> vector<8x128xf32>
    %c0_37 = arith.constant 0 : index
    %c0_38 = arith.constant 0 : index
    %c0_39 = arith.constant 0 : index
    %67 = vector.load %arg14[%c0_37, %c0_38, %c0_39] : memref<8x128x128xf32, #tpu.memory_space<vmem>>, vector<1x128x128xf32>
    %68 = vector.shape_cast %67 : vector<1x128x128xf32> to vector<128x128xf32>
    %cst_40 = arith.constant dense<0.000000e+00> : vector<8x128xf32>
    %69 = tpu.matmul %63, %68, %cst_40 {dimension_numbers = #tpu.dot_dimension_numbers<[1], [0], [0], [1], [0, 0, 1, 1], [], []>} : vector<8x128xf32>, vector<128x128xf32>, vector<8x128xf32> -> vector<8x128xf32>
    %c0_41 = arith.constant 0 : index
    %c0_42 = arith.constant 0 : index
    %c0_43 = arith.constant 0 : index
    %70 = vector.load %arg15[%c0_41, %c0_42, %c0_43] : memref<4x128x128xf32, #tpu.memory_space<vmem>>, vector<1x128x128xf32>
    %71 = vector.shape_cast %70 : vector<1x128x128xf32> to vector<128x128xf32>
    %cst_44 = arith.constant dense<0.000000e+00> : vector<8x128xf32>
    %72 = tpu.matmul %53, %71, %cst_44 {dimension_numbers = #tpu.dot_dimension_numbers<[1], [0], [0], [1], [0, 0, 1, 1], [], []>} : vector<8x128xf32>, vector<128x128xf32>, vector<8x128xf32> -> vector<8x128xf32>
    %73 = arith.addf %69, %72 : vector<8x128xf32>
    %c0_45 = arith.constant 0 : index
    %c0_46 = arith.constant 0 : index
    %c0_47 = arith.constant 0 : index
    %74 = vector.load %arg16[%c0_45, %c0_46, %c0_47] : memref<8x1x128xf32, #tpu.memory_space<vmem>>, vector<1x1x128xf32>
    %75 = vector.shape_cast %74 : vector<1x1x128xf32> to vector<1x128xf32>
    %76 = vector.broadcast %75 : vector<1x128xf32> to vector<8x128xf32>
    %77 = arith.addf %73, %76 : vector<8x128xf32>
    %cst_48 = arith.constant 0.000000e+00 : f32
    %78 = vector.broadcast %cst_48 : f32 to vector<8x128xf32>
    %79 = arith.maximumf %77, %78 : vector<8x128xf32>
    %c0_49 = arith.constant 0 : index
    %c0_50 = arith.constant 0 : index
    %c0_51 = arith.constant 0 : index
    %80 = vector.load %arg17[%c0_49, %c0_50, %c0_51] : memref<8x128x128xf32, #tpu.memory_space<vmem>>, vector<1x128x128xf32>
    %81 = vector.shape_cast %80 : vector<1x128x128xf32> to vector<128x128xf32>
    %cst_52 = arith.constant dense<0.000000e+00> : vector<8x128xf32>
    %82 = tpu.matmul %79, %81, %cst_52 {dimension_numbers = #tpu.dot_dimension_numbers<[1], [0], [0], [1], [0, 0, 1, 1], [], []>} : vector<8x128xf32>, vector<128x128xf32>, vector<8x128xf32> -> vector<8x128xf32>
    %c0_53 = arith.constant 0 : index
    %c0_54 = arith.constant 0 : index
    %c0_55 = arith.constant 0 : index
    %83 = vector.load %arg18[%c0_53, %c0_54, %c0_55] : memref<8x1x128xf32, #tpu.memory_space<vmem>>, vector<1x1x128xf32>
    %84 = vector.shape_cast %83 : vector<1x1x128xf32> to vector<1x128xf32>
    %85 = vector.broadcast %84 : vector<1x128xf32> to vector<8x128xf32>
    %86 = arith.addf %82, %85 : vector<8x128xf32>
    %c1 = arith.constant 1 : index
    %c0_56 = arith.constant 0 : index
    %c0_57 = arith.constant 0 : index
    %87 = vector.load %arg14[%c1, %c0_56, %c0_57] : memref<8x128x128xf32, #tpu.memory_space<vmem>>, vector<1x128x128xf32>
    %88 = vector.shape_cast %87 : vector<1x128x128xf32> to vector<128x128xf32>
    %cst_58 = arith.constant dense<0.000000e+00> : vector<8x128xf32>
    %89 = tpu.matmul %64, %88, %cst_58 {dimension_numbers = #tpu.dot_dimension_numbers<[1], [0], [0], [1], [0, 0, 1, 1], [], []>} : vector<8x128xf32>, vector<128x128xf32>, vector<8x128xf32> -> vector<8x128xf32>
    %c1_59 = arith.constant 1 : index
    %c0_60 = arith.constant 0 : index
    %c0_61 = arith.constant 0 : index
    %90 = vector.load %arg16[%c1_59, %c0_60, %c0_61] : memref<8x1x128xf32, #tpu.memory_space<vmem>>, vector<1x1x128xf32>
    %91 = vector.shape_cast %90 : vector<1x1x128xf32> to vector<1x128xf32>
    %92 = vector.broadcast %91 : vector<1x128xf32> to vector<8x128xf32>
    %93 = arith.addf %89, %92 : vector<8x128xf32>
    %cst_62 = arith.constant 0.000000e+00 : f32
    %94 = vector.broadcast %cst_62 : f32 to vector<8x128xf32>
    %95 = arith.maximumf %93, %94 : vector<8x128xf32>
    %c1_63 = arith.constant 1 : index
    %c0_64 = arith.constant 0 : index
    %c0_65 = arith.constant 0 : index
    %96 = vector.load %arg17[%c1_63, %c0_64, %c0_65] : memref<8x128x128xf32, #tpu.memory_space<vmem>>, vector<1x128x128xf32>
    %97 = vector.shape_cast %96 : vector<1x128x128xf32> to vector<128x128xf32>
    %cst_66 = arith.constant dense<0.000000e+00> : vector<8x128xf32>
    %98 = tpu.matmul %95, %97, %cst_66 {dimension_numbers = #tpu.dot_dimension_numbers<[1], [0], [0], [1], [0, 0, 1, 1], [], []>} : vector<8x128xf32>, vector<128x128xf32>, vector<8x128xf32> -> vector<8x128xf32>
    %c1_67 = arith.constant 1 : index
    %c0_68 = arith.constant 0 : index
    %c0_69 = arith.constant 0 : index
    %99 = vector.load %arg18[%c1_67, %c0_68, %c0_69] : memref<8x1x128xf32, #tpu.memory_space<vmem>>, vector<1x1x128xf32>
    %100 = vector.shape_cast %99 : vector<1x1x128xf32> to vector<1x128xf32>
    %101 = vector.broadcast %100 : vector<1x128xf32> to vector<8x128xf32>
    %102 = arith.addf %98, %101 : vector<8x128xf32>
    %c2 = arith.constant 2 : index
    %c0_70 = arith.constant 0 : index
    %c0_71 = arith.constant 0 : index
    %103 = vector.load %arg14[%c2, %c0_70, %c0_71] : memref<8x128x128xf32, #tpu.memory_space<vmem>>, vector<1x128x128xf32>
    %104 = vector.shape_cast %103 : vector<1x128x128xf32> to vector<128x128xf32>
    %cst_72 = arith.constant dense<0.000000e+00> : vector<8x128xf32>
    %105 = tpu.matmul %65, %104, %cst_72 {dimension_numbers = #tpu.dot_dimension_numbers<[1], [0], [0], [1], [0, 0, 1, 1], [], []>} : vector<8x128xf32>, vector<128x128xf32>, vector<8x128xf32> -> vector<8x128xf32>
    %c1_73 = arith.constant 1 : index
    %c0_74 = arith.constant 0 : index
    %c0_75 = arith.constant 0 : index
    %106 = vector.load %arg15[%c1_73, %c0_74, %c0_75] : memref<4x128x128xf32, #tpu.memory_space<vmem>>, vector<1x128x128xf32>
    %107 = vector.shape_cast %106 : vector<1x128x128xf32> to vector<128x128xf32>
    %cst_76 = arith.constant dense<0.000000e+00> : vector<8x128xf32>
    %108 = tpu.matmul %55, %107, %cst_76 {dimension_numbers = #tpu.dot_dimension_numbers<[1], [0], [0], [1], [0, 0, 1, 1], [], []>} : vector<8x128xf32>, vector<128x128xf32>, vector<8x128xf32> -> vector<8x128xf32>
    %109 = arith.addf %105, %108 : vector<8x128xf32>
    %c2_77 = arith.constant 2 : index
    %c0_78 = arith.constant 0 : index
    %c0_79 = arith.constant 0 : index
    %110 = vector.load %arg16[%c2_77, %c0_78, %c0_79] : memref<8x1x128xf32, #tpu.memory_space<vmem>>, vector<1x1x128xf32>
    %111 = vector.shape_cast %110 : vector<1x1x128xf32> to vector<1x128xf32>
    %112 = vector.broadcast %111 : vector<1x128xf32> to vector<8x128xf32>
    %113 = arith.addf %109, %112 : vector<8x128xf32>
    %cst_80 = arith.constant 0.000000e+00 : f32
    %114 = vector.broadcast %cst_80 : f32 to vector<8x128xf32>
    %115 = arith.maximumf %113, %114 : vector<8x128xf32>
    %c2_81 = arith.constant 2 : index
    %c0_82 = arith.constant 0 : index
    %c0_83 = arith.constant 0 : index
    %116 = vector.load %arg17[%c2_81, %c0_82, %c0_83] : memref<8x128x128xf32, #tpu.memory_space<vmem>>, vector<1x128x128xf32>
    %117 = vector.shape_cast %116 : vector<1x128x128xf32> to vector<128x128xf32>
    %cst_84 = arith.constant dense<0.000000e+00> : vector<8x128xf32>
    %118 = tpu.matmul %115, %117, %cst_84 {dimension_numbers = #tpu.dot_dimension_numbers<[1], [0], [0], [1], [0, 0, 1, 1], [], []>} : vector<8x128xf32>, vector<128x128xf32>, vector<8x128xf32> -> vector<8x128xf32>
    %c2_85 = arith.constant 2 : index
    %c0_86 = arith.constant 0 : index
    %c0_87 = arith.constant 0 : index
    %119 = vector.load %arg18[%c2_85, %c0_86, %c0_87] : memref<8x1x128xf32, #tpu.memory_space<vmem>>, vector<1x1x128xf32>
    %120 = vector.shape_cast %119 : vector<1x1x128xf32> to vector<1x128xf32>
    %121 = vector.broadcast %120 : vector<1x128xf32> to vector<8x128xf32>
    %122 = arith.addf %118, %121 : vector<8x128xf32>
    %c3 = arith.constant 3 : index
    %c0_88 = arith.constant 0 : index
    %c0_89 = arith.constant 0 : index
    %123 = vector.load %arg14[%c3, %c0_88, %c0_89] : memref<8x128x128xf32, #tpu.memory_space<vmem>>, vector<1x128x128xf32>
    %124 = vector.shape_cast %123 : vector<1x128x128xf32> to vector<128x128xf32>
    %cst_90 = arith.constant dense<0.000000e+00> : vector<8x128xf32>
    %125 = tpu.matmul %66, %124, %cst_90 {dimension_numbers = #tpu.dot_dimension_numbers<[1], [0], [0], [1], [0, 0, 1, 1], [], []>} : vector<8x128xf32>, vector<128x128xf32>, vector<8x128xf32> -> vector<8x128xf32>
    %c3_91 = arith.constant 3 : index
    %c0_92 = arith.constant 0 : index
    %c0_93 = arith.constant 0 : index
    %126 = vector.load %arg16[%c3_91, %c0_92, %c0_93] : memref<8x1x128xf32, #tpu.memory_space<vmem>>, vector<1x1x128xf32>
    %127 = vector.shape_cast %126 : vector<1x1x128xf32> to vector<1x128xf32>
    %128 = vector.broadcast %127 : vector<1x128xf32> to vector<8x128xf32>
    %129 = arith.addf %125, %128 : vector<8x128xf32>
    %cst_94 = arith.constant 0.000000e+00 : f32
    %130 = vector.broadcast %cst_94 : f32 to vector<8x128xf32>
    %131 = arith.maximumf %129, %130 : vector<8x128xf32>
    %c3_95 = arith.constant 3 : index
    %c0_96 = arith.constant 0 : index
    %c0_97 = arith.constant 0 : index
    %132 = vector.load %arg17[%c3_95, %c0_96, %c0_97] : memref<8x128x128xf32, #tpu.memory_space<vmem>>, vector<1x128x128xf32>
    %133 = vector.shape_cast %132 : vector<1x128x128xf32> to vector<128x128xf32>
    %cst_98 = arith.constant dense<0.000000e+00> : vector<8x128xf32>
    %134 = tpu.matmul %131, %133, %cst_98 {dimension_numbers = #tpu.dot_dimension_numbers<[1], [0], [0], [1], [0, 0, 1, 1], [], []>} : vector<8x128xf32>, vector<128x128xf32>, vector<8x128xf32> -> vector<8x128xf32>
    %c3_99 = arith.constant 3 : index
    %c0_100 = arith.constant 0 : index
    %c0_101 = arith.constant 0 : index
    %135 = vector.load %arg18[%c3_99, %c0_100, %c0_101] : memref<8x1x128xf32, #tpu.memory_space<vmem>>, vector<1x1x128xf32>
    %136 = vector.shape_cast %135 : vector<1x1x128xf32> to vector<1x128xf32>
    %137 = vector.broadcast %136 : vector<1x128xf32> to vector<8x128xf32>
    %138 = arith.addf %134, %137 : vector<8x128xf32>
    %139 = arith.addf %86, %102 : vector<8x128xf32>
    %cst_102 = arith.constant 0.000000e+00 : f32
    %140 = vector.broadcast %cst_102 : f32 to vector<8x128xf32>
    %141 = arith.maximumf %139, %140 : vector<8x128xf32>
    %142 = arith.addf %122, %138 : vector<8x128xf32>
    %cst_103 = arith.constant 0.000000e+00 : f32
    %143 = vector.broadcast %cst_103 : f32 to vector<8x128xf32>
    %144 = arith.maximumf %142, %143 : vector<8x128xf32>
    %cst_104 = arith.constant dense<0.000000e+00> : vector<8x128xf32>
    %145 = tpu.matmul %12, %144, %cst_104 {dimension_numbers = #tpu.dot_dimension_numbers<[1], [0], [0], [1], [0, 0, 1, 1], [], []>} : vector<8x8xf32>, vector<8x128xf32>, vector<8x128xf32> -> vector<8x128xf32>
    %cst_105 = arith.constant dense<0.000000e+00> : vector<8x128xf32>
    %146 = tpu.matmul %25, %141, %cst_105 {dimension_numbers = #tpu.dot_dimension_numbers<[1], [0], [0], [1], [0, 0, 1, 1], [], []>} : vector<8x8xf32>, vector<8x128xf32>, vector<8x128xf32> -> vector<8x128xf32>
    %cst_106 = arith.constant dense<0.000000e+00> : vector<8x128xf32>
    %147 = tpu.matmul %38, %141, %cst_106 {dimension_numbers = #tpu.dot_dimension_numbers<[1], [0], [0], [1], [0, 0, 1, 1], [], []>} : vector<8x8xf32>, vector<8x128xf32>, vector<8x128xf32> -> vector<8x128xf32>
    %cst_107 = arith.constant dense<0.000000e+00> : vector<8x128xf32>
    %148 = tpu.matmul %51, %144, %cst_107 {dimension_numbers = #tpu.dot_dimension_numbers<[1], [0], [0], [1], [0, 0, 1, 1], [], []>} : vector<8x8xf32>, vector<8x128xf32>, vector<8x128xf32> -> vector<8x128xf32>
    %c4 = arith.constant 4 : index
    %c0_108 = arith.constant 0 : index
    %c0_109 = arith.constant 0 : index
    %149 = vector.load %arg14[%c4, %c0_108, %c0_109] : memref<8x128x128xf32, #tpu.memory_space<vmem>>, vector<1x128x128xf32>
    %150 = vector.shape_cast %149 : vector<1x128x128xf32> to vector<128x128xf32>
    %cst_110 = arith.constant dense<0.000000e+00> : vector<8x128xf32>
    %151 = tpu.matmul %145, %150, %cst_110 {dimension_numbers = #tpu.dot_dimension_numbers<[1], [0], [0], [1], [0, 0, 1, 1], [], []>} : vector<8x128xf32>, vector<128x128xf32>, vector<8x128xf32> -> vector<8x128xf32>
    %c2_111 = arith.constant 2 : index
    %c0_112 = arith.constant 0 : index
    %c0_113 = arith.constant 0 : index
    %152 = vector.load %arg15[%c2_111, %c0_112, %c0_113] : memref<4x128x128xf32, #tpu.memory_space<vmem>>, vector<1x128x128xf32>
    %153 = vector.shape_cast %152 : vector<1x128x128xf32> to vector<128x128xf32>
    %cst_114 = arith.constant dense<0.000000e+00> : vector<8x128xf32>
    %154 = tpu.matmul %53, %153, %cst_114 {dimension_numbers = #tpu.dot_dimension_numbers<[1], [0], [0], [1], [0, 0, 1, 1], [], []>} : vector<8x128xf32>, vector<128x128xf32>, vector<8x128xf32> -> vector<8x128xf32>
    %155 = arith.addf %151, %154 : vector<8x128xf32>
    %c4_115 = arith.constant 4 : index
    %c0_116 = arith.constant 0 : index
    %c0_117 = arith.constant 0 : index
    %156 = vector.load %arg16[%c4_115, %c0_116, %c0_117] : memref<8x1x128xf32, #tpu.memory_space<vmem>>, vector<1x1x128xf32>
    %157 = vector.shape_cast %156 : vector<1x1x128xf32> to vector<1x128xf32>
    %158 = vector.broadcast %157 : vector<1x128xf32> to vector<8x128xf32>
    %159 = arith.addf %155, %158 : vector<8x128xf32>
    %cst_118 = arith.constant 0.000000e+00 : f32
    %160 = vector.broadcast %cst_118 : f32 to vector<8x128xf32>
    %161 = arith.maximumf %159, %160 : vector<8x128xf32>
    %c4_119 = arith.constant 4 : index
    %c0_120 = arith.constant 0 : index
    %c0_121 = arith.constant 0 : index
    %162 = vector.load %arg17[%c4_119, %c0_120, %c0_121] : memref<8x128x128xf32, #tpu.memory_space<vmem>>, vector<1x128x128xf32>
    %163 = vector.shape_cast %162 : vector<1x128x128xf32> to vector<128x128xf32>
    %cst_122 = arith.constant dense<0.000000e+00> : vector<8x128xf32>
    %164 = tpu.matmul %161, %163, %cst_122 {dimension_numbers = #tpu.dot_dimension_numbers<[1], [0], [0], [1], [0, 0, 1, 1], [], []>} : vector<8x128xf32>, vector<128x128xf32>, vector<8x128xf32> -> vector<8x128xf32>
    %c4_123 = arith.constant 4 : index
    %c0_124 = arith.constant 0 : index
    %c0_125 = arith.constant 0 : index
    %165 = vector.load %arg18[%c4_123, %c0_124, %c0_125] : memref<8x1x128xf32, #tpu.memory_space<vmem>>, vector<1x1x128xf32>
    %166 = vector.shape_cast %165 : vector<1x1x128xf32> to vector<1x128xf32>
    %167 = vector.broadcast %166 : vector<1x128xf32> to vector<8x128xf32>
    %168 = arith.addf %164, %167 : vector<8x128xf32>
    %c5 = arith.constant 5 : index
    %c0_126 = arith.constant 0 : index
    %c0_127 = arith.constant 0 : index
    %169 = vector.load %arg14[%c5, %c0_126, %c0_127] : memref<8x128x128xf32, #tpu.memory_space<vmem>>, vector<1x128x128xf32>
    %170 = vector.shape_cast %169 : vector<1x128x128xf32> to vector<128x128xf32>
    %cst_128 = arith.constant dense<0.000000e+00> : vector<8x128xf32>
    %171 = tpu.matmul %146, %170, %cst_128 {dimension_numbers = #tpu.dot_dimension_numbers<[1], [0], [0], [1], [0, 0, 1, 1], [], []>} : vector<8x128xf32>, vector<128x128xf32>, vector<8x128xf32> -> vector<8x128xf32>
    %c5_129 = arith.constant 5 : index
    %c0_130 = arith.constant 0 : index
    %c0_131 = arith.constant 0 : index
    %172 = vector.load %arg16[%c5_129, %c0_130, %c0_131] : memref<8x1x128xf32, #tpu.memory_space<vmem>>, vector<1x1x128xf32>
    %173 = vector.shape_cast %172 : vector<1x1x128xf32> to vector<1x128xf32>
    %174 = vector.broadcast %173 : vector<1x128xf32> to vector<8x128xf32>
    %175 = arith.addf %171, %174 : vector<8x128xf32>
    %cst_132 = arith.constant 0.000000e+00 : f32
    %176 = vector.broadcast %cst_132 : f32 to vector<8x128xf32>
    %177 = arith.maximumf %175, %176 : vector<8x128xf32>
    %c5_133 = arith.constant 5 : index
    %c0_134 = arith.constant 0 : index
    %c0_135 = arith.constant 0 : index
    %178 = vector.load %arg17[%c5_133, %c0_134, %c0_135] : memref<8x128x128xf32, #tpu.memory_space<vmem>>, vector<1x128x128xf32>
    %179 = vector.shape_cast %178 : vector<1x128x128xf32> to vector<128x128xf32>
    %cst_136 = arith.constant dense<0.000000e+00> : vector<8x128xf32>
    %180 = tpu.matmul %177, %179, %cst_136 {dimension_numbers = #tpu.dot_dimension_numbers<[1], [0], [0], [1], [0, 0, 1, 1], [], []>} : vector<8x128xf32>, vector<128x128xf32>, vector<8x128xf32> -> vector<8x128xf32>
    %c5_137 = arith.constant 5 : index
    %c0_138 = arith.constant 0 : index
    %c0_139 = arith.constant 0 : index
    %181 = vector.load %arg18[%c5_137, %c0_138, %c0_139] : memref<8x1x128xf32, #tpu.memory_space<vmem>>, vector<1x1x128xf32>
    %182 = vector.shape_cast %181 : vector<1x1x128xf32> to vector<1x128xf32>
    %183 = vector.broadcast %182 : vector<1x128xf32> to vector<8x128xf32>
    %184 = arith.addf %180, %183 : vector<8x128xf32>
    %c6 = arith.constant 6 : index
    %c0_140 = arith.constant 0 : index
    %c0_141 = arith.constant 0 : index
    %185 = vector.load %arg14[%c6, %c0_140, %c0_141] : memref<8x128x128xf32, #tpu.memory_space<vmem>>, vector<1x128x128xf32>
    %186 = vector.shape_cast %185 : vector<1x128x128xf32> to vector<128x128xf32>
    %cst_142 = arith.constant dense<0.000000e+00> : vector<8x128xf32>
    %187 = tpu.matmul %147, %186, %cst_142 {dimension_numbers = #tpu.dot_dimension_numbers<[1], [0], [0], [1], [0, 0, 1, 1], [], []>} : vector<8x128xf32>, vector<128x128xf32>, vector<8x128xf32> -> vector<8x128xf32>
    %c3_143 = arith.constant 3 : index
    %c0_144 = arith.constant 0 : index
    %c0_145 = arith.constant 0 : index
    %188 = vector.load %arg15[%c3_143, %c0_144, %c0_145] : memref<4x128x128xf32, #tpu.memory_space<vmem>>, vector<1x128x128xf32>
    %189 = vector.shape_cast %188 : vector<1x128x128xf32> to vector<128x128xf32>
    %cst_146 = arith.constant dense<0.000000e+00> : vector<8x128xf32>
    %190 = tpu.matmul %55, %189, %cst_146 {dimension_numbers = #tpu.dot_dimension_numbers<[1], [0], [0], [1], [0, 0, 1, 1], [], []>} : vector<8x128xf32>, vector<128x128xf32>, vector<8x128xf32> -> vector<8x128xf32>
    %191 = arith.addf %187, %190 : vector<8x128xf32>
    %c6_147 = arith.constant 6 : index
    %c0_148 = arith.constant 0 : index
    %c0_149 = arith.constant 0 : index
    %192 = vector.load %arg16[%c6_147, %c0_148, %c0_149] : memref<8x1x128xf32, #tpu.memory_space<vmem>>, vector<1x1x128xf32>
    %193 = vector.shape_cast %192 : vector<1x1x128xf32> to vector<1x128xf32>
    %194 = vector.broadcast %193 : vector<1x128xf32> to vector<8x128xf32>
    %195 = arith.addf %191, %194 : vector<8x128xf32>
    %cst_150 = arith.constant 0.000000e+00 : f32
    %196 = vector.broadcast %cst_150 : f32 to vector<8x128xf32>
    %197 = arith.maximumf %195, %196 : vector<8x128xf32>
    %c6_151 = arith.constant 6 : index
    %c0_152 = arith.constant 0 : index
    %c0_153 = arith.constant 0 : index
    %198 = vector.load %arg17[%c6_151, %c0_152, %c0_153] : memref<8x128x128xf32, #tpu.memory_space<vmem>>, vector<1x128x128xf32>
    %199 = vector.shape_cast %198 : vector<1x128x128xf32> to vector<128x128xf32>
    %cst_154 = arith.constant dense<0.000000e+00> : vector<8x128xf32>
    %200 = tpu.matmul %197, %199, %cst_154 {dimension_numbers = #tpu.dot_dimension_numbers<[1], [0], [0], [1], [0, 0, 1, 1], [], []>} : vector<8x128xf32>, vector<128x128xf32>, vector<8x128xf32> -> vector<8x128xf32>
    %c6_155 = arith.constant 6 : index
    %c0_156 = arith.constant 0 : index
    %c0_157 = arith.constant 0 : index
    %201 = vector.load %arg18[%c6_155, %c0_156, %c0_157] : memref<8x1x128xf32, #tpu.memory_space<vmem>>, vector<1x1x128xf32>
    %202 = vector.shape_cast %201 : vector<1x1x128xf32> to vector<1x128xf32>
    %203 = vector.broadcast %202 : vector<1x128xf32> to vector<8x128xf32>
    %204 = arith.addf %200, %203 : vector<8x128xf32>
    %c7 = arith.constant 7 : index
    %c0_158 = arith.constant 0 : index
    %c0_159 = arith.constant 0 : index
    %205 = vector.load %arg14[%c7, %c0_158, %c0_159] : memref<8x128x128xf32, #tpu.memory_space<vmem>>, vector<1x128x128xf32>
    %206 = vector.shape_cast %205 : vector<1x128x128xf32> to vector<128x128xf32>
    %cst_160 = arith.constant dense<0.000000e+00> : vector<8x128xf32>
    %207 = tpu.matmul %148, %206, %cst_160 {dimension_numbers = #tpu.dot_dimension_numbers<[1], [0], [0], [1], [0, 0, 1, 1], [], []>} : vector<8x128xf32>, vector<128x128xf32>, vector<8x128xf32> -> vector<8x128xf32>
    %c7_161 = arith.constant 7 : index
    %c0_162 = arith.constant 0 : index
    %c0_163 = arith.constant 0 : index
    %208 = vector.load %arg16[%c7_161, %c0_162, %c0_163] : memref<8x1x128xf32, #tpu.memory_space<vmem>>, vector<1x1x128xf32>
    %209 = vector.shape_cast %208 : vector<1x1x128xf32> to vector<1x128xf32>
    %210 = vector.broadcast %209 : vector<1x128xf32> to vector<8x128xf32>
    %211 = arith.addf %207, %210 : vector<8x128xf32>
    %cst_164 = arith.constant 0.000000e+00 : f32
    %212 = vector.broadcast %cst_164 : f32 to vector<8x128xf32>
    %213 = arith.maximumf %211, %212 : vector<8x128xf32>
    %c7_165 = arith.constant 7 : index
    %c0_166 = arith.constant 0 : index
    %c0_167 = arith.constant 0 : index
    %214 = vector.load %arg17[%c7_165, %c0_166, %c0_167] : memref<8x128x128xf32, #tpu.memory_space<vmem>>, vector<1x128x128xf32>
    %215 = vector.shape_cast %214 : vector<1x128x128xf32> to vector<128x128xf32>
    %cst_168 = arith.constant dense<0.000000e+00> : vector<8x128xf32>
    %216 = tpu.matmul %213, %215, %cst_168 {dimension_numbers = #tpu.dot_dimension_numbers<[1], [0], [0], [1], [0, 0, 1, 1], [], []>} : vector<8x128xf32>, vector<128x128xf32>, vector<8x128xf32> -> vector<8x128xf32>
    %c7_169 = arith.constant 7 : index
    %c0_170 = arith.constant 0 : index
    %c0_171 = arith.constant 0 : index
    %217 = vector.load %arg18[%c7_169, %c0_170, %c0_171] : memref<8x1x128xf32, #tpu.memory_space<vmem>>, vector<1x1x128xf32>
    %218 = vector.shape_cast %217 : vector<1x1x128xf32> to vector<1x128xf32>
    %219 = vector.broadcast %218 : vector<1x128xf32> to vector<8x128xf32>
    %220 = arith.addf %216, %219 : vector<8x128xf32>
    %221 = arith.addf %168, %184 : vector<8x128xf32>
    %cst_172 = arith.constant 0.000000e+00 : f32
    %222 = vector.broadcast %cst_172 : f32 to vector<8x128xf32>
    %223 = arith.maximumf %221, %222 : vector<8x128xf32>
    %224 = arith.addf %204, %220 : vector<8x128xf32>
    %cst_173 = arith.constant 0.000000e+00 : f32
    %225 = vector.broadcast %cst_173 : f32 to vector<8x128xf32>
    %226 = arith.maximumf %224, %225 : vector<8x128xf32>
    %c0_174 = arith.constant 0 : index
    %c0_175 = arith.constant 0 : index
    %227 = vector.load %arg19[%c0_174, %c0_175] : memref<128x128xf32, #tpu.memory_space<vmem>>, vector<128x128xf32>
    %cst_176 = arith.constant dense<0.000000e+00> : vector<8x128xf32>
    %228 = tpu.matmul %223, %227, %cst_176 {dimension_numbers = #tpu.dot_dimension_numbers<[1], [0], [0], [1], [0, 0, 1, 1], [], []>} : vector<8x128xf32>, vector<128x128xf32>, vector<8x128xf32> -> vector<8x128xf32>
    %c0_177 = arith.constant 0 : index
    %c0_178 = arith.constant 0 : index
    %229 = vector.load %arg20[%c0_177, %c0_178] : memref<1x128xf32, #tpu.memory_space<vmem>>, vector<1x128xf32>
    %230 = vector.broadcast %229 : vector<1x128xf32> to vector<8x128xf32>
    %231 = arith.addf %228, %230 : vector<8x128xf32>
    %c0_179 = arith.constant 0 : index
    %c0_180 = arith.constant 0 : index
    %232 = vector.load %arg23[%c0_179, %c0_180] : memref<8x128xf32, #tpu.memory_space<vmem>>, vector<8x128xf32>
    tpu.vector_store %arg23[%c0_179, %c0_180], %231 {strides = array<i32>} : memref<8x128xf32, #tpu.memory_space<vmem>>, vector<8x128xf32>,
    %c0_181 = arith.constant 0 : index
    %c0_182 = arith.constant 0 : index
    %233 = vector.load %arg21[%c0_181, %c0_182] : memref<128x128xf32, #tpu.memory_space<vmem>>, vector<128x128xf32>
    %cst_183 = arith.constant dense<0.000000e+00> : vector<8x128xf32>
    %234 = tpu.matmul %226, %233, %cst_183 {dimension_numbers = #tpu.dot_dimension_numbers<[1], [0], [0], [1], [0, 0, 1, 1], [], []>} : vector<8x128xf32>, vector<128x128xf32>, vector<8x128xf32> -> vector<8x128xf32>
    %c0_184 = arith.constant 0 : index
    %c0_185 = arith.constant 0 : index
    %235 = vector.load %arg22[%c0_184, %c0_185] : memref<1x128xf32, #tpu.memory_space<vmem>>, vector<1x128xf32>
    %236 = vector.broadcast %235 : vector<1x128xf32> to vector<8x128xf32>
    %237 = arith.addf %234, %236 : vector<8x128xf32>
    %c0_186 = arith.constant 0 : index
    %c0_187 = arith.constant 0 : index
    %238 = vector.load %arg24[%c0_186, %c0_187] : memref<8x128xf32, #tpu.memory_space<vmem>>, vector<8x128xf32>
    tpu.vector_store %arg24[%c0_186, %c0_187], %237 {strides = array<i32>} : memref<8x128xf32, #tpu.memory_space<vmem>>, vector<8x128xf32>,
    return
  }
}

</mosaic_0001>

<llo_original>
// kernel: gnn_forward.1
$region0: #{gnn_forward.1}
  #allocation0 [shape = 'u32[]', space=smem, size = 0x4, offset = 0x4, fixed_abs, tag = 'smem constant byte address 0x4 - core index']
  #allocation1 [shape = 'u32[144,128]{1,0:T(1,128)}', space=vmem, size = 0x12000, scoped, tag = 'internal scratch']
  %s0 = inlined_call_operand.vmem [shape: s32[1,128], index: 0, kind: input, shape index: {}]
  %s1 = inlined_call_operand.vmem [shape: s32[1,128], index: 1, kind: input, shape index: {}]
  %s2 = inlined_call_operand.vmem [shape: s32[1,128], index: 2, kind: input, shape index: {}]
  %s3 = inlined_call_operand.vmem [shape: s32[1,128], index: 3, kind: input, shape index: {}]
  %s4 = inlined_call_operand.vmem [shape: s32[1,128], index: 4, kind: input, shape index: {}]
  %s5 = inlined_call_operand.vmem [shape: s32[1,128], index: 5, kind: input, shape index: {}]
  %s6 = inlined_call_operand.vmem [shape: s32[1,128], index: 6, kind: input, shape index: {}]
  %s7 = inlined_call_operand.vmem [shape: s32[1,128], index: 7, kind: input, shape index: {}]
  %s8 = inlined_call_operand.vmem [shape: f32[8,128], index: 8, kind: input, shape index: {}]
  %s9 = inlined_call_operand.vmem [shape: f32[8,128], index: 9, kind: input, shape index: {}]
  %s10 = inlined_call_operand.vmem [shape: f32[128,128], index: 10, kind: input, shape index: {}]
  %s11 = inlined_call_operand.vmem [shape: f32[128,128], index: 11, kind: input, shape index: {}]
  %s12 = inlined_call_operand.vmem [shape: f32[128,128], index: 12, kind: input, shape index: {}]
  %s13 = inlined_call_operand.vmem [shape: f32[1,128], index: 13, kind: input, shape index: {}]
  %s14 = inlined_call_operand.vmem [shape: f32[8,128,128], index: 14, kind: input, shape index: {}]
  %s15 = inlined_call_operand.vmem [shape: f32[4,128,128], index: 15, kind: input, shape index: {}]
  %s16 = inlined_call_operand.vmem [shape: f32[8,1,128], index: 16, kind: input, shape index: {}]
  %s17 = inlined_call_operand.vmem [shape: f32[8,128,128], index: 17, kind: input, shape index: {}]
  %s18 = inlined_call_operand.vmem [shape: f32[8,1,128], index: 18, kind: input, shape index: {}]
  %s19 = inlined_call_operand.vmem [shape: f32[128,128], index: 19, kind: input, shape index: {}]
  %s20 = inlined_call_operand.vmem [shape: f32[1,128], index: 20, kind: input, shape index: {}]
  %s21 = inlined_call_operand.vmem [shape: f32[128,128], index: 21, kind: input, shape index: {}]
  %s22 = inlined_call_operand.vmem [shape: f32[1,128], index: 22, kind: input, shape index: {}]
  %s23 = inlined_call_operand.hbm [shape: f32[8,128], index: 23, kind: output, shape index: {0}]
  %s24 = inlined_call_operand.vmem [shape: f32[8,128], index: 24, kind: output, shape index: {1}]
  %25 = xla_tuple %s23, %s24
  %s26 = sld [smem:[#allocation0]]
  $region110: #{gnn_forward.1} parent=0
    _
  %s28 = ssub.s32 1, %s26
  %s29 = scalar_select 0, %s28, %s26
  $region1: #{gnn_forward.1} parent=0
    #allocation2 [shape = 'u8[4096]{0}', space=vmem, size = 0x1000, scoped, tag = 'output window, operand 0, single buffered']
    #allocation3 [shape = 's32[1]{0}', space=sflag, size = 0x4, scoped, tag = 'scoped memory for gnn_forward.1']
    %30 = vsyncpa [#allocation3], 0
    // Predicated region
    $region2: #{gnn_forward.1} parent=1 // pred_check
      _
    $region3: #{gnn_forward.1} parent=1 // pred_check_branch
      %32 = sbr.rel (0) target = $region5
    $region4: #{gnn_forward.1} parent=1 // pred_region
      _
    $region5: #{gnn_forward.1} parent=1 // pred_fallthru
      _
    // Predicated region
    $region6: #{gnn_forward.1} parent=1 // pred_check
      _
    $region7: #{gnn_forward.1} parent=1 // pred_check_branch
      %34 = sbr.rel (0) target = $region9
    $region8: #{gnn_forward.1} parent=1 // pred_region
      _
    $region9: #{gnn_forward.1} parent=1 // pred_fallthru
      _
    // Predicated region
    $region10: #{gnn_forward.1} parent=1 // pred_check
      _
    $region11: #{gnn_forward.1} parent=1 // pred_check_branch
      %36 = sbr.rel (0) target = $region13
    $region12: #{gnn_forward.1} parent=1 // pred_region
      _
    $region13: #{gnn_forward.1} parent=1 // pred_fallthru
      _
    // Predicated region
    $region14: #{gnn_forward.1} parent=1 // pred_check
      _
    $region15: #{gnn_forward.1} parent=1 // pred_check_branch
      %38 = sbr.rel (0) target = $region17
    $region16: #{gnn_forward.1} parent=1 // pred_region
      _
    $region17: #{gnn_forward.1} parent=1 // pred_fallthru
      _
    // Predicated region
    $region18: #{gnn_forward.1} parent=1 // pred_check
      _
    $region19: #{gnn_forward.1} parent=1 // pred_check_branch
      %40 = sbr.rel (0) target = $region21
    $region20: #{gnn_forward.1} parent=1 // pred_region
      _
    $region21: #{gnn_forward.1} parent=1 // pred_fallthru
      _
    // Predicated region
    $region22: #{gnn_forward.1} parent=1 // pred_check
      _
    $region23: #{gnn_forward.1} parent=1 // pred_check_branch
      %42 = sbr.rel (0) target = $region25
    $region24: #{gnn_forward.1} parent=1 // pred_region
      _
    $region25: #{gnn_forward.1} parent=1 // pred_fallthru
      _
    // Predicated region
    $region26: #{gnn_forward.1} parent=1 // pred_check
      _
    $region27: #{gnn_forward.1} parent=1 // pred_check_branch
      %44 = sbr.rel (0) target = $region29
    $region28: #{gnn_forward.1} parent=1 // pred_region
      _
    $region29: #{gnn_forward.1} parent=1 // pred_fallthru
      _
    // Predicated region
    $region30: #{gnn_forward.1} parent=1 // pred_check
      _
    $region31: #{gnn_forward.1} parent=1 // pred_check_branch
      %46 = sbr.rel (0) target = $region33
    $region32: #{gnn_forward.1} parent=1 // pred_region
      _
    $region33: #{gnn_forward.1} parent=1 // pred_fallthru
      _
    // Predicated region
    $region34: #{gnn_forward.1} parent=1 // pred_check
      _
    $region35: #{gnn_forward.1} parent=1 // pred_check_branch
      %48 = sbr.rel (0) target = $region37
    $region36: #{gnn_forward.1} parent=1 // pred_region
      _
    $region37: #{gnn_forward.1} parent=1 // pred_fallthru
      _
    // Predicated region
    $region38: #{gnn_forward.1} parent=1 // pred_check
      _
    $region39: #{gnn_forward.1} parent=1 // pred_check_branch
      %50 = sbr.rel (0) target = $region41
    $region40: #{gnn_forward.1} parent=1 // pred_region
      _
    $region41: #{gnn_forward.1} parent=1 // pred_fallthru
      _
    // Predicated region
    $region42: #{gnn_forward.1} parent=1 // pred_check
      _
    $region43: #{gnn_forward.1} parent=1 // pred_check_branch
      %52 = sbr.rel (0) target = $region45
    $region44: #{gnn_forward.1} parent=1 // pred_region
      _
    $region45: #{gnn_forward.1} parent=1 // pred_fallthru
      _
    // Predicated region
    $region46: #{gnn_forward.1} parent=1 // pred_check
      _
    $region47: #{gnn_forward.1} parent=1 // pred_check_branch
      %54 = sbr.rel (0) target = $region49
    $region48: #{gnn_forward.1} parent=1 // pred_region
      _
    $region49: #{gnn_forward.1} parent=1 // pred_fallthru
      _
    // Predicated region
    $region50: #{gnn_forward.1} parent=1 // pred_check
      _
    $region51: #{gnn_forward.1} parent=1 // pred_check_branch
      %56 = sbr.rel (0) target = $region53
    $region52: #{gnn_forward.1} parent=1 // pred_region
      _
    $region53: #{gnn_forward.1} parent=1 // pred_fallthru
      _
    // Predicated region
    $region54: #{gnn_forward.1} parent=1 // pred_check
      _
    $region55: #{gnn_forward.1} parent=1 // pred_check_branch
      %58 = sbr.rel (0) target = $region57
    $region56: #{gnn_forward.1} parent=1 // pred_region
      _
    $region57: #{gnn_forward.1} parent=1 // pred_fallthru
      _
    // Predicated region
    $region58: #{gnn_forward.1} parent=1 // pred_check
      _
    $region59: #{gnn_forward.1} parent=1 // pred_check_branch
      %60 = sbr.rel (0) target = $region61
    $region60: #{gnn_forward.1} parent=1 // pred_region
      _
    $region61: #{gnn_forward.1} parent=1 // pred_fallthru
      _
    // Predicated region
    $region62: #{gnn_forward.1} parent=1 // pred_check
      _
    $region63: #{gnn_forward.1} parent=1 // pred_check_branch
      %62 = sbr.rel (0) target = $region65
    $region64: #{gnn_forward.1} parent=1 // pred_region
      _
    $region65: #{gnn_forward.1} parent=1 // pred_fallthru
      _
    // Predicated region
    $region66: #{gnn_forward.1} parent=1 // pred_check
      _
    $region67: #{gnn_forward.1} parent=1 // pred_check_branch
      %64 = sbr.rel (0) target = $region69
    $region68: #{gnn_forward.1} parent=1 // pred_region
      _
    $region69: #{gnn_forward.1} parent=1 // pred_fallthru
      _
    // Predicated region
    $region70: #{gnn_forward.1} parent=1 // pred_check
      _
    $region71: #{gnn_forward.1} parent=1 // pred_check_branch
      %66 = sbr.rel (0) target = $region73
    $region72: #{gnn_forward.1} parent=1 // pred_region
      _
    $region73: #{gnn_forward.1} parent=1 // pred_fallthru
      _
    // Predicated region
    $region74: #{gnn_forward.1} parent=1 // pred_check
      _
    $region75: #{gnn_forward.1} parent=1 // pred_check_branch
      %68 = sbr.rel (0) target = $region77
    $region76: #{gnn_forward.1} parent=1 // pred_region
      _
    $region77: #{gnn_forward.1} parent=1 // pred_fallthru
      _
    // Predicated region
    $region78: #{gnn_forward.1} parent=1 // pred_check
      _
    $region79: #{gnn_forward.1} parent=1 // pred_check_branch
      %70 = sbr.rel (0) target = $region81
    $region80: #{gnn_forward.1} parent=1 // pred_region
      _
    $region81: #{gnn_forward.1} parent=1 // pred_fallthru
      _
    // Predicated region
    $region82: #{gnn_forward.1} parent=1 // pred_check
      _
    $region83: #{gnn_forward.1} parent=1 // pred_check_branch
      %72 = sbr.rel (0) target = $region85
    $region84: #{gnn_forward.1} parent=1 // pred_region
      _
    $region85: #{gnn_forward.1} parent=1 // pred_fallthru
      _
    // Predicated region
    $region86: #{gnn_forward.1} parent=1 // pred_check
      _
    $region87: #{gnn_forward.1} parent=1 // pred_check_branch
      %74 = sbr.rel (0) target = $region89
    $region88: #{gnn_forward.1} parent=1 // pred_region
      _
    $region89: #{gnn_forward.1} parent=1 // pred_fallthru
      _
    // Predicated region
    $region90: #{gnn_forward.1} parent=1 // pred_check
      _
    $region91: #{gnn_forward.1} parent=1 // pred_check_branch
      %76 = sbr.rel (0) target = $region93
    $region92: #{gnn_forward.1} parent=1 // pred_region
      _
    $region93: #{gnn_forward.1} parent=1 // pred_fallthru
      _
    %v77 = vlaneseq
    %v78 = vshrl.u32 %v77, 7
    %v79 = vld [vmem:[%s0] sm:$0x1]
    %v80 = vlaneseq
    %v81 = vshrl.u32 %v80, 7
    %v82 = vsub.s32 0, %v81
    %v83 = vrot.slane %v79, %v82
    %vm84 = vcmp.eq.s32.totalorder %v78, %v83
    %v85 = vsel %vm84, 1, 0
    %v86 = vcvt.s32.f32 %v85
    %v87 = vld [vmem:[%s1] sm:$0x1]
    %v88 = vlaneseq
    %v89 = vshrl.u32 %v88, 7
    %v90 = vsub.s32 0, %v89
    %v91 = vrot.slane %v87, %v90
    %vm92 = vcmp.eq.s32.totalorder %v78, %v91
    %v93 = vsel %vm92, 1, 0
    %v94 = vcvt.s32.f32 %v93
    %95 = vmatprep.subr.mxu0 0.0
    %96 = vmatpush1.xpose.msra.mxu0 %v94
    %97 = vmatprep.subr.mxu0 0.0
    %98 = vmatpush1.xpose.msra.mxu0 0.0
    %99 = vmatprep.subr.mxu0 0.0
    %100 = vmatpush1.xpose.msra.mxu0 0.0
    %101 = vmatprep.subr.mxu0 0.0
    %102 = vmatpush1.xpose.msra.mxu0 0.0
    %103 = vmatprep.subr.mxu0 0.0
    %104 = vmatpush1.xpose.msra.mxu0 0.0
    %105 = vmatprep.subr.mxu0 0.0
    %106 = vmatpush1.xpose.msra.mxu0 0.0
    %107 = vmatprep.subr.mxu0 0.0
    %108 = vmatpush1.xpose.msra.mxu0 0.0
    %109 = vmatprep.subr.mxu0 0.0
    %110 = vmatpush1.xpose.msra.mxu0 0.0
    %111 = vmatprep.subr.mxu0 0.0
    %112 = vmatpush1.xpose.msra.mxu0 0.0
    %113 = vmatprep.subr.mxu0 0.0
    %114 = vmatpush1.xpose.msra.mxu0 0.0
    %115 = vmatprep.subr.mxu0 0.0
    %116 = vmatpush1.xpose.msra.mxu0 0.0
    %117 = vmatprep.subr.mxu0 0.0
    %118 = vmatpush1.xpose.msra.mxu0 0.0
    %119 = vmatprep.subr.mxu0 0.0
    %120 = vmatpush1.xpose.msra.mxu0 0.0
    %121 = vmatprep.subr.mxu0 0.0
    %122 = vmatpush1.xpose.msra.mxu0 0.0
    %123 = vmatprep.subr.mxu0 0.0
    %124 = vmatpush1.xpose.msra.mxu0 0.0
    %125 = vmatprep.subr.mxu0 0.0
    %126 = vmatpush1.xpose.msra.mxu0 0.0
    %127 = vmatprep.subr.mxu0 0.0
    %128 = vmatpush1.xpose.msra.mxu0 0.0
    %129 = vmatprep.subr.mxu0 0.0
    %130 = vmatpush1.xpose.msra.mxu0 0.0
    %131 = vmatprep.subr.mxu0 0.0
    %132 = vmatpush1.xpose.msra.mxu0 0.0
    %133 = vmatprep.subr.mxu0 0.0
    %134 = vmatpush1.xpose.msra.mxu0 0.0
    %135 = vmatprep.subr.mxu0 0.0
    %136 = vmatpush1.xpose.msra.mxu0 0.0
    %137 = vmatprep.subr.mxu0 0.0
    %138 = vmatpush1.xpose.msra.mxu0 0.0
    %139 = vmatprep.subr.mxu0 0.0
    %140 = vmatpush1.xpose.msra.mxu0 0.0
    %141 = vmatprep.subr.mxu0 0.0
    %142 = vmatpush1.xpose.msra.mxu0 0.0
    %143 = vmatprep.subr.mxu0 0.0
    %144 = vmatpush1.xpose.msra.mxu0 0.0
    %145 = vmatprep.subr.mxu0 0.0
    %146 = vmatpush1.xpose.msra.mxu0 0.0
    %147 = vmatprep.subr.mxu0 0.0
    %148 = vmatpush1.xpose.msra.mxu0 0.0
    %149 = vmatprep.subr.mxu0 0.0
    %150 = vmatpush1.xpose.msra.mxu0 0.0
    %151 = vmatprep.subr.mxu0 0.0
    %152 = vmatpush1.xpose.msra.mxu0 0.0
    %153 = vmatprep.subr.mxu0 0.0
    %154 = vmatpush1.xpose.msra.mxu0 0.0
    %155 = vmatprep.subr.mxu0 0.0
    %156 = vmatpush1.xpose.msra.mxu0 0.0
    %157 = vmatprep.subr.mxu0 0.0
    %158 = vmatpush1.xpose.msra.mxu0 0.0
    %159 = vmatprep.mubr.f32.mxu0 0.0
    %160 = vmatmul.mubr.f32.gmra.mrb[0].mxu0 %v86
    %v161 = vpop.f32.mrb[0].mxu0
    %v162 = vadd.f32 0.0, %v161
    %v163 = vpop.f32.mrb[0].mxu0
    %164 = vdwg.mxu0
    %v165 = vld [vmem:[%s2] sm:$0x1]
    %v166 = vlaneseq
    %v167 = vshrl.u32 %v166, 7
    %v168 = vsub.s32 0, %v167
    %v169 = vrot.slane %v165, %v168
    %vm170 = vcmp.eq.s32.totalorder %v78, %v169
    %v171 = vsel %vm170, 1, 0
    %v172 = vcvt.s32.f32 %v171
    %v173 = vld [vmem:[%s3] sm:$0x1]
    %v174 = vlaneseq
    %v175 = vshrl.u32 %v174, 7
    %v176 = vsub.s32 0, %v175
    %v177 = vrot.slane %v173, %v176
    %vm178 = vcmp.eq.s32.totalorder %v78, %v177
    %v179 = vsel %vm178, 1, 0
    %v180 = vcvt.s32.f32 %v179
    %181 = vmatprep.subr.mxu0 0.0
    %182 = vmatpush1.xpose.msra.mxu0 %v180
    %183 = vmatprep.subr.mxu0 0.0
    %184 = vmatpush1.xpose.msra.mxu0 0.0
    %185 = vmatprep.subr.mxu0 0.0
    %186 = vmatpush1.xpose.msra.mxu0 0.0
    %187 = vmatprep.subr.mxu0 0.0
    %188 = vmatpush1.xpose.msra.mxu0 0.0
    %189 = vmatprep.subr.mxu0 0.0
    %190 = vmatpush1.xpose.msra.mxu0 0.0
    %191 = vmatprep.subr.mxu0 0.0
    %192 = vmatpush1.xpose.msra.mxu0 0.0
    %193 = vmatprep.subr.mxu0 0.0
    %194 = vmatpush1.xpose.msra.mxu0 0.0
    %195 = vmatprep.subr.mxu0 0.0
    %196 = vmatpush1.xpose.msra.mxu0 0.0
    %197 = vmatprep.subr.mxu0 0.0
    %198 = vmatpush1.xpose.msra.mxu0 0.0
    %199 = vmatprep.subr.mxu0 0.0
    %200 = vmatpush1.xpose.msra.mxu0 0.0
    %201 = vmatprep.subr.mxu0 0.0
    %202 = vmatpush1.xpose.msra.mxu0 0.0
    %203 = vmatprep.subr.mxu0 0.0
    %204 = vmatpush1.xpose.msra.mxu0 0.0
    %205 = vmatprep.subr.mxu0 0.0
    %206 = vmatpush1.xpose.msra.mxu0 0.0
    %207 = vmatprep.subr.mxu0 0.0
    %208 = vmatpush1.xpose.msra.mxu0 0.0
    %209 = vmatprep.subr.mxu0 0.0
    %210 = vmatpush1.xpose.msra.mxu0 0.0
    %211 = vmatprep.subr.mxu0 0.0
    %212 = vmatpush1.xpose.msra.mxu0 0.0
    %213 = vmatprep.subr.mxu0 0.0
    %214 = vmatpush1.xpose.msra.mxu0 0.0
    %215 = vmatprep.subr.mxu0 0.0
    %216 = vmatpush1.xpose.msra.mxu0 0.0
    %217 = vmatprep.subr.mxu0 0.0
    %218 = vmatpush1.xpose.msra.mxu0 0.0
    %219 = vmatprep.subr.mxu0 0.0
    %220 = vmatpush1.xpose.msra.mxu0 0.0
    %221 = vmatprep.subr.mxu0 0.0
    %222 = vmatpush1.xpose.msra.mxu0 0.0
    %223 = vmatprep.subr.mxu0 0.0
    %224 = vmatpush1.xpose.msra.mxu0 0.0
    %225 = vmatprep.subr.mxu0 0.0
    %226 = vmatpush1.xpose.msra.mxu0 0.0
    %227 = vmatprep.subr.mxu0 0.0
    %228 = vmatpush1.xpose.msra.mxu0 0.0
    %229 = vmatprep.subr.mxu0 0.0
    %230 = vmatpush1.xpose.msra.mxu0 0.0
    %231 = vmatprep.subr.mxu0 0.0
    %232 = vmatpush1.xpose.msra.mxu0 0.0
    %233 = vmatprep.subr.mxu0 0.0
    %234 = vmatpush1.xpose.msra.mxu0 0.0
    %235 = vmatprep.subr.mxu0 0.0
    %236 = vmatpush1.xpose.msra.mxu0 0.0
    %237 = vmatprep.subr.mxu0 0.0
    %238 = vmatpush1.xpose.msra.mxu0 0.0
    %239 = vmatprep.subr.mxu0 0.0
    %240 = vmatpush1.xpose.msra.mxu0 0.0
    %241 = vmatprep.subr.mxu0 0.0
    %242 = vmatpush1.xpose.msra.mxu0 0.0
    %243 = vmatprep.subr.mxu0 0.0
    %244 = vmatpush1.xpose.msra.mxu0 0.0
    %245 = vmatprep.mubr.f32.mxu0 0.0
    %246 = vmatmul.mubr.f32.gmra.mrb[0].mxu0 %v172
    %v247 = vpop.f32.mrb[0].mxu0
    %v248 = vadd.f32 0.0, %v247
    %v249 = vpop.f32.mrb[0].mxu0
    %250 = vdwg.mxu0
    %v251 = vld [vmem:[%s4] sm:$0x1]
    %v252 = vlaneseq
    %v253 = vshrl.u32 %v252, 7
    %v254 = vsub.s32 0, %v253
    %v255 = vrot.slane %v251, %v254
    %vm256 = vcmp.eq.s32.totalorder %v78, %v255
    %v257 = vsel %vm256, 1, 0
    %v258 = vcvt.s32.f32 %v257
    %v259 = vld [vmem:[%s5] sm:$0x1]
    %v260 = vlaneseq
    %v261 = vshrl.u32 %v260, 7
    %v262 = vsub.s32 0, %v261
    %v263 = vrot.slane %v259, %v262
    %vm264 = vcmp.eq.s32.totalorder %v78, %v263
    %v265 = vsel %vm264, 1, 0
    %v266 = vcvt.s32.f32 %v265
    %267 = vmatprep.subr.mxu0 0.0
    %268 = vmatpush1.xpose.msra.mxu0 %v266
    %269 = vmatprep.subr.mxu0 0.0
    %270 = vmatpush1.xpose.msra.mxu0 0.0
    %271 = vmatprep.subr.mxu0 0.0
    %272 = vmatpush1.xpose.msra.mxu0 0.0
    %273 = vmatprep.subr.mxu0 0.0
    %274 = vmatpush1.xpose.msra.mxu0 0.0
    %275 = vmatprep.subr.mxu0 0.0
    %276 = vmatpush1.xpose.msra.mxu0 0.0
    %277 = vmatprep.subr.mxu0 0.0
    %278 = vmatpush1.xpose.msra.mxu0 0.0
    %279 = vmatprep.subr.mxu0 0.0
    %280 = vmatpush1.xpose.msra.mxu0 0.0
    %281 = vmatprep.subr.mxu0 0.0
    %282 = vmatpush1.xpose.msra.mxu0 0.0
    %283 = vmatprep.subr.mxu0 0.0
    %284 = vmatpush1.xpose.msra.mxu0 0.0
    %285 = vmatprep.subr.mxu0 0.0
    %286 = vmatpush1.xpose.msra.mxu0 0.0
    %287 = vmatprep.subr.mxu0 0.0
    %288 = vmatpush1.xpose.msra.mxu0 0.0
    %289 = vmatprep.subr.mxu0 0.0
    %290 = vmatpush1.xpose.msra.mxu0 0.0
    %291 = vmatprep.subr.mxu0 0.0
    %292 = vmatpush1.xpose.msra.mxu0 0.0
    %293 = vmatprep.subr.mxu0 0.0
    %294 = vmatpush1.xpose.msra.mxu0 0.0
    %295 = vmatprep.subr.mxu0 0.0
    %296 = vmatpush1.xpose.msra.mxu0 0.0
    %297 = vmatprep.subr.mxu0 0.0
    %298 = vmatpush1.xpose.msra.mxu0 0.0
    %299 = vmatprep.subr.mxu0 0.0
    %300 = vmatpush1.xpose.msra.mxu0 0.0
    %301 = vmatprep.subr.mxu0 0.0
    %302 = vmatpush1.xpose.msra.mxu0 0.0
    %303 = vmatprep.subr.mxu0 0.0
    %304 = vmatpush1.xpose.msra.mxu0 0.0
    %305 = vmatprep.subr.mxu0 0.0
    %306 = vmatpush1.xpose.msra.mxu0 0.0
    %307 = vmatprep.subr.mxu0 0.0
    %308 = vmatpush1.xpose.msra.mxu0 0.0
    %309 = vmatprep.subr.mxu0 0.0
    %310 = vmatpush1.xpose.msra.mxu0 0.0
    %311 = vmatprep.subr.mxu0 0.0
    %312 = vmatpush1.xpose.msra.mxu0 0.0
    %313 = vmatprep.subr.mxu0 0.0
    %314 = vmatpush1.xpose.msra.mxu0 0.0
    %315 = vmatprep.subr.mxu0 0.0
    %316 = vmatpush1.xpose.msra.mxu0 0.0
    %317 = vmatprep.subr.mxu0 0.0
    %318 = vmatpush1.xpose.msra.mxu0 0.0
    %319 = vmatprep.subr.mxu0 0.0
    %320 = vmatpush1.xpose.msra.mxu0 0.0
    %321 = vmatprep.subr.mxu0 0.0
    %322 = vmatpush1.xpose.msra.mxu0 0.0
    %323 = vmatprep.subr.mxu0 0.0
    %324 = vmatpush1.xpose.msra.mxu0 0.0
    %325 = vmatprep.subr.mxu0 0.0
    %326 = vmatpush1.xpose.msra.mxu0 0.0
    %327 = vmatprep.subr.mxu0 0.0
    %328 = vmatpush1.xpose.msra.mxu0 0.0
    %329 = vmatprep.subr.mxu0 0.0
    %330 = vmatpush1.xpose.msra.mxu0 0.0
    %331 = vmatprep.mubr.f32.mxu0 0.0
    %332 = vmatmul.mubr.f32.gmra.mrb[0].mxu0 %v258
    %v333 = vpop.f32.mrb[0].mxu0
    %v334 = vadd.f32 0.0, %v333
    %v335 = vpop.f32.mrb[0].mxu0
    %336 = vdwg.mxu0
    %v337 = vld [vmem:[%s6] sm:$0x1]
    %v338 = vlaneseq
    %v339 = vshrl.u32 %v338, 7
    %v340 = vsub.s32 0, %v339
    %v341 = vrot.slane %v337, %v340
    %vm342 = vcmp.eq.s32.totalorder %v78, %v341
    %v343 = vsel %vm342, 1, 0
    %v344 = vcvt.s32.f32 %v343
    %v345 = vld [vmem:[%s7] sm:$0x1]
    %v346 = vlaneseq
    %v347 = vshrl.u32 %v346, 7
    %v348 = vsub.s32 0, %v347
    %v349 = vrot.slane %v345, %v348
    %vm350 = vcmp.eq.s32.totalorder %v78, %v349
    %v351 = vsel %vm350, 1, 0
    %v352 = vcvt.s32.f32 %v351
    %353 = vmatprep.subr.mxu0 0.0
    %354 = vmatpush1.xpose.msra.mxu0 %v352
    %355 = vmatprep.subr.mxu0 0.0
    %356 = vmatpush1.xpose.msra.mxu0 0.0
    %357 = vmatprep.subr.mxu0 0.0
    %358 = vmatpush1.xpose.msra.mxu0 0.0
    %359 = vmatprep.subr.mxu0 0.0
    %360 = vmatpush1.xpose.msra.mxu0 0.0
    %361 = vmatprep.subr.mxu0 0.0
    %362 = vmatpush1.xpose.msra.mxu0 0.0
    %363 = vmatprep.subr.mxu0 0.0
    %364 = vmatpush1.xpose.msra.mxu0 0.0
    %365 = vmatprep.subr.mxu0 0.0
    %366 = vmatpush1.xpose.msra.mxu0 0.0
    %367 = vmatprep.subr.mxu0 0.0
    %368 = vmatpush1.xpose.msra.mxu0 0.0
    %369 = vmatprep.subr.mxu0 0.0
    %370 = vmatpush1.xpose.msra.mxu0 0.0
    %371 = vmatprep.subr.mxu0 0.0
    %372 = vmatpush1.xpose.msra.mxu0 0.0
    %373 = vmatprep.subr.mxu0 0.0
    %374 = vmatpush1.xpose.msra.mxu0 0.0
    %375 = vmatprep.subr.mxu0 0.0
    %376 = vmatpush1.xpose.msra.mxu0 0.0
    %377 = vmatprep.subr.mxu0 0.0
    %378 = vmatpush1.xpose.msra.mxu0 0.0
    %379 = vmatprep.subr.mxu0 0.0
    %380 = vmatpush1.xpose.msra.mxu0 0.0
    %381 = vmatprep.subr.mxu0 0.0
    %382 = vmatpush1.xpose.msra.mxu0 0.0
    %383 = vmatprep.subr.mxu0 0.0
    %384 = vmatpush1.xpose.msra.mxu0 0.0
    %385 = vmatprep.subr.mxu0 0.0
    %386 = vmatpush1.xpose.msra.mxu0 0.0
    %387 = vmatprep.subr.mxu0 0.0
    %388 = vmatpush1.xpose.msra.mxu0 0.0
    %389 = vmatprep.subr.mxu0 0.0
    %390 = vmatpush1.xpose.msra.mxu0 0.0
    %391 = vmatprep.subr.mxu0 0.0
    %392 = vmatpush1.xpose.msra.mxu0 0.0
    %393 = vmatprep.subr.mxu0 0.0
    %394 = vmatpush1.xpose.msra.mxu0 0.0
    %395 = vmatprep.subr.mxu0 0.0
    %396 = vmatpush1.xpose.msra.mxu0 0.0
    %397 = vmatprep.subr.mxu0 0.0
    %398 = vmatpush1.xpose.msra.mxu0 0.0
    %399 = vmatprep.subr.mxu0 0.0
    %400 = vmatpush1.xpose.msra.mxu0 0.0
    %401 = vmatprep.subr.mxu0 0.0
    %402 = vmatpush1.xpose.msra.mxu0 0.0
    %403 = vmatprep.subr.mxu0 0.0
    %404 = vmatpush1.xpose.msra.mxu0 0.0
    %405 = vmatprep.subr.mxu0 0.0
    %406 = vmatpush1.xpose.msra.mxu0 0.0
    %407 = vmatprep.subr.mxu0 0.0
    %408 = vmatpush1.xpose.msra.mxu0 0.0
    %409 = vmatprep.subr.mxu0 0.0
    %410 = vmatpush1.xpose.msra.mxu0 0.0
    %411 = vmatprep.subr.mxu0 0.0
    %412 = vmatpush1.xpose.msra.mxu0 0.0
    %413 = vmatprep.subr.mxu0 0.0
    %414 = vmatpush1.xpose.msra.mxu0 0.0
    %415 = vmatprep.subr.mxu0 0.0
    %416 = vmatpush1.xpose.msra.mxu0 0.0
    %417 = vmatprep.mubr.f32.mxu0 0.0
    %418 = vmatmul.mubr.f32.gmra.mrb[0].mxu0 %v344
    %v419 = vpop.f32.mrb[0].mxu0
    %v420 = vadd.f32 0.0, %v419
    %v421 = vpop.f32.mrb[0].mxu0
    %422 = vdwg.mxu0
    %v423 = vld [vmem:[%s10] sm:$0xff]
    %v424 = vld [vmem:[%s10 + $0x8] sm:$0xff]
    %v425 = vld [vmem:[%s10 + $0x10] sm:$0xff]
    %v426 = vld [vmem:[%s10 + $0x18] sm:$0xff]
    %v427 = vld [vmem:[%s10 + $0x20] sm:$0xff]
    %v428 = vld [vmem:[%s10 + $0x28] sm:$0xff]
    %v429 = vld [vmem:[%s10 + $0x30] sm:$0xff]
    %v430 = vld [vmem:[%s10 + $0x38] sm:$0xff]
    %v431 = vld [vmem:[%s10 + $0x40] sm:$0xff]
    %v432 = vld [vmem:[%s10 + $0x48] sm:$0xff]
    %v433 = vld [vmem:[%s10 + $0x50] sm:$0xff]
    %v434 = vld [vmem:[%s10 + $0x58] sm:$0xff]
    %v435 = vld [vmem:[%s10 + $0x60] sm:$0xff]
    %v436 = vld [vmem:[%s10 + $0x68] sm:$0xff]
    %v437 = vld [vmem:[%s10 + $0x70] sm:$0xff]
    %v438 = vld [vmem:[%s10 + $0x78] sm:$0xff]
    %439 = vmatprep.subr.mxu0 0.0
    %440 = vmatpush1.msra.mxu0 %v423
    %441 = vmatprep.subr.mxu0 0.0
    %442 = vmatpush1.msra.mxu0 %v424
    %443 = vmatprep.subr.mxu0 0.0
    %444 = vmatpush1.msra.mxu0 %v425
    %445 = vmatprep.subr.mxu0 0.0
    %446 = vmatpush1.msra.mxu0 %v426
    %447 = vmatprep.subr.mxu0 0.0
    %448 = vmatpush1.msra.mxu0 %v427
    %449 = vmatprep.subr.mxu0 0.0
    %450 = vmatpush1.msra.mxu0 %v428
    %451 = vmatprep.subr.mxu0 0.0
    %452 = vmatpush1.msra.mxu0 %v429
    %453 = vmatprep.subr.mxu0 0.0
    %454 = vmatpush1.msra.mxu0 %v430
    %455 = vmatprep.subr.mxu0 0.0
    %456 = vmatpush1.msra.mxu0 %v431
    %457 = vmatprep.subr.mxu0 0.0
    %458 = vmatpush1.msra.mxu0 %v432
    %459 = vmatprep.subr.mxu0 0.0
    %460 = vmatpush1.msra.mxu0 %v433
    %461 = vmatprep.subr.mxu0 0.0
    %462 = vmatpush1.msra.mxu0 %v434
    %463 = vmatprep.subr.mxu0 0.0
    %464 = vmatpush1.msra.mxu0 %v435
    %465 = vmatprep.subr.mxu0 0.0
    %466 = vmatpush1.msra.mxu0 %v436
    %467 = vmatprep.subr.mxu0 0.0
    %468 = vmatpush1.msra.mxu0 %v437
    %469 = vmatprep.subr.mxu0 0.0
    %470 = vmatpush1.msra.mxu0 %v438
    %471 = vmatprep.subr.mxu0 0.0
    %472 = vmatpush1.msra.mxu0 0.0
    %473 = vmatprep.subr.mxu0 0.0
    %474 = vmatpush1.msra.mxu0 0.0
    %475 = vmatprep.subr.mxu0 0.0
    %476 = vmatpush1.msra.mxu0 0.0
    %477 = vmatprep.subr.mxu0 0.0
    %478 = vmatpush1.msra.mxu0 0.0
    %479 = vmatprep.subr.mxu0 0.0
    %480 = vmatpush1.msra.mxu0 0.0
    %481 = vmatprep.subr.mxu0 0.0
    %482 = vmatpush1.msra.mxu0 0.0
    %483 = vmatprep.subr.mxu0 0.0
    %484 = vmatpush1.msra.mxu0 0.0
    %485 = vmatprep.subr.mxu0 0.0
    %486 = vmatpush1.msra.mxu0 0.0
    %487 = vmatprep.subr.mxu0 0.0
    %488 = vmatpush1.msra.mxu0 0.0
    %489 = vmatprep.subr.mxu0 0.0
    %490 = vmatpush1.msra.mxu0 0.0
    %491 = vmatprep.subr.mxu0 0.0
    %492 = vmatpush1.msra.mxu0 0.0
    %493 = vmatprep.subr.mxu0 0.0
    %494 = vmatpush1.msra.mxu0 0.0
    %495 = vmatprep.subr.mxu0 0.0
    %496 = vmatpush1.msra.mxu0 0.0
    %497 = vmatprep.subr.mxu0 0.0
    %498 = vmatpush1.msra.mxu0 0.0
    %499 = vmatprep.subr.mxu0 0.0
    %500 = vmatpush1.msra.mxu0 0.0
    %501 = vmatprep.subr.mxu0 0.0
    %502 = vmatpush1.msra.mxu0 0.0
    %503 = vmatprep.mubr.f32.mxu0 0.0
    %504 = vmatmul.mubr.f32.gmra.mrb[0].mxu0 %v86
    %v505 = vpop.f32.mrb[0].mxu0
    %v506 = vadd.f32 0.0, %v505
    %v507 = vpop.f32.mrb[0].mxu0
    %508 = vdwg.mxu0
    %v509 = vld [vmem:[%s11] sm:$0xff]
    %v510 = vld [vmem:[%s11 + $0x8] sm:$0xff]
    %v511 = vld [vmem:[%s11 + $0x10] sm:$0xff]
    %v512 = vld [vmem:[%s11 + $0x18] sm:$0xff]
    %v513 = vld [vmem:[%s11 + $0x20] sm:$0xff]
    %v514 = vld [vmem:[%s11 + $0x28] sm:$0xff]
    %v515 = vld [vmem:[%s11 + $0x30] sm:$0xff]
    %v516 = vld [vmem:[%s11 + $0x38] sm:$0xff]
    %v517 = vld [vmem:[%s11 + $0x40] sm:$0xff]
    %v518 = vld [vmem:[%s11 + $0x48] sm:$0xff]
    %v519 = vld [vmem:[%s11 + $0x50] sm:$0xff]
    %v520 = vld [vmem:[%s11 + $0x58] sm:$0xff]
    %v521 = vld [vmem:[%s11 + $0x60] sm:$0xff]
    %v522 = vld [vmem:[%s11 + $0x68] sm:$0xff]
    %v523 = vld [vmem:[%s11 + $0x70] sm:$0xff]
    %v524 = vld [vmem:[%s11 + $0x78] sm:$0xff]
    %525 = vmatprep.subr.mxu0 0.0
    %526 = vmatpush1.msra.mxu0 %v509
    %527 = vmatprep.subr.mxu0 0.0
    %528 = vmatpush1.msra.mxu0 %v510
    %529 = vmatprep.subr.mxu0 0.0
    %530 = vmatpush1.msra.mxu0 %v511
    %531 = vmatprep.subr.mxu0 0.0
    %532 = vmatpush1.msra.mxu0 %v512
    %533 = vmatprep.subr.mxu0 0.0
    %534 = vmatpush1.msra.mxu0 %v513
    %535 = vmatprep.subr.mxu0 0.0
    %536 = vmatpush1.msra.mxu0 %v514
    %537 = vmatprep.subr.mxu0 0.0
    %538 = vmatpush1.msra.mxu0 %v515
    %539 = vmatprep.subr.mxu0 0.0
    %540 = vmatpush1.msra.mxu0 %v516
    %541 = vmatprep.subr.mxu0 0.0
    %542 = vmatpush1.msra.mxu0 %v517
    %543 = vmatprep.subr.mxu0 0.0
    %544 = vmatpush1.msra.mxu0 %v518
    %545 = vmatprep.subr.mxu0 0.0
    %546 = vmatpush1.msra.mxu0 %v519
    %547 = vmatprep.subr.mxu0 0.0
    %548 = vmatpush1.msra.mxu0 %v520
    %549 = vmatprep.subr.mxu0 0.0
    %550 = vmatpush1.msra.mxu0 %v521
    %551 = vmatprep.subr.mxu0 0.0
    %552 = vmatpush1.msra.mxu0 %v522
    %553 = vmatprep.subr.mxu0 0.0
    %554 = vmatpush1.msra.mxu0 %v523
    %555 = vmatprep.subr.mxu0 0.0
    %556 = vmatpush1.msra.mxu0 %v524
    %557 = vmatprep.subr.mxu0 0.0
    %558 = vmatpush1.msra.mxu0 0.0
    %559 = vmatprep.subr.mxu0 0.0
    %560 = vmatpush1.msra.mxu0 0.0
    %561 = vmatprep.subr.mxu0 0.0
    %562 = vmatpush1.msra.mxu0 0.0
    %563 = vmatprep.subr.mxu0 0.0
    %564 = vmatpush1.msra.mxu0 0.0
    %565 = vmatprep.subr.mxu0 0.0
    %566 = vmatpush1.msra.mxu0 0.0
    %567 = vmatprep.subr.mxu0 0.0
    %568 = vmatpush1.msra.mxu0 0.0
    %569 = vmatprep.subr.mxu0 0.0
    %570 = vmatpush1.msra.mxu0 0.0
    %571 = vmatprep.subr.mxu0 0.0
    %572 = vmatpush1.msra.mxu0 0.0
    %573 = vmatprep.subr.mxu0 0.0
    %574 = vmatpush1.msra.mxu0 0.0
    %575 = vmatprep.subr.mxu0 0.0
    %576 = vmatpush1.msra.mxu0 0.0
    %577 = vmatprep.subr.mxu0 0.0
    %578 = vmatpush1.msra.mxu0 0.0
    %579 = vmatprep.subr.mxu0 0.0
    %580 = vmatpush1.msra.mxu0 0.0
    %581 = vmatprep.subr.mxu0 0.0
    %582 = vmatpush1.msra.mxu0 0.0
    %583 = vmatprep.subr.mxu0 0.0
    %584 = vmatpush1.msra.mxu0 0.0
    %585 = vmatprep.subr.mxu0 0.0
    %586 = vmatpush1.msra.mxu0 0.0
    %587 = vmatprep.subr.mxu0 0.0
    %588 = vmatpush1.msra.mxu0 0.0
    %589 = vmatprep.mubr.f32.mxu0 0.0
    %590 = vmatmul.mubr.f32.gmra.mrb[0].mxu0 %v258
    %v591 = vpop.f32.mrb[0].mxu0
    %v592 = vadd.f32 0.0, %v591
    %v593 = vpop.f32.mrb[0].mxu0
    %594 = vdwg.mxu0
    %v595 = vld [vmem:[%s8] sm:$0xff]
    %v596 = vld [vmem:[%s9] sm:$0xff]
    %v597 = vld [vmem:[%s12] sm:$0xff]
    %v598 = vld [vmem:[%s12 + $0x8] sm:$0xff]
    %v599 = vld [vmem:[%s12 + $0x10] sm:$0xff]
    %v600 = vld [vmem:[%s12 + $0x18] sm:$0xff]
    %v601 = vld [vmem:[%s12 + $0x20] sm:$0xff]
    %v602 = vld [vmem:[%s12 + $0x28] sm:$0xff]
    %v603 = vld [vmem:[%s12 + $0x30] sm:$0xff]
    %v604 = vld [vmem:[%s12 + $0x38] sm:$0xff]
    %v605 = vld [vmem:[%s12 + $0x40] sm:$0xff]
    %v606 = vld [vmem:[%s12 + $0x48] sm:$0xff]
    %v607 = vld [vmem:[%s12 + $0x50] sm:$0xff]
    %v608 = vld [vmem:[%s12 + $0x58] sm:$0xff]
    %v609 = vld [vmem:[%s12 + $0x60] sm:$0xff]
    %v610 = vld [vmem:[%s12 + $0x68] sm:$0xff]
    %v611 = vld [vmem:[%s12 + $0x70] sm:$0xff]
    %v612 = vld [vmem:[%s12 + $0x78] sm:$0xff]
    %v613 = vld [vmem:[%s13] sm:$0x1]
    %v615 = vlaneseq
    %v616 = vshrl.u32 %v615, 7
    %v617 = vsub.s32 0, %v616
    %v618 = vrot.slane %v613, %v617
    %620 = vmatprep.subr.mxu0 0.0
    %621 = vmatpush1.msra.mxu0 %v597
    %622 = vmatprep.subr.mxu0 0.0
    %623 = vmatpush1.msra.mxu0 %v598
    %624 = vmatprep.subr.mxu0 0.0
    %625 = vmatpush1.msra.mxu0 %v599
    %626 = vmatprep.subr.mxu0 0.0
    %627 = vmatpush1.msra.mxu0 %v600
    %628 = vmatprep.subr.mxu0 0.0
    %629 = vmatpush1.msra.mxu0 %v601
    %630 = vmatprep.subr.mxu0 0.0
    %631 = vmatpush1.msra.mxu0 %v602
    %632 = vmatprep.subr.mxu0 0.0
    %633 = vmatpush1.msra.mxu0 %v603
    %634 = vmatprep.subr.mxu0 0.0
    %635 = vmatpush1.msra.mxu0 %v604
    %636 = vmatprep.subr.mxu0 0.0
    %637 = vmatpush1.msra.mxu0 %v605
    %638 = vmatprep.subr.mxu0 0.0
    %639 = vmatpush1.msra.mxu0 %v606
    %640 = vmatprep.subr.mxu0 0.0
    %641 = vmatpush1.msra.mxu0 %v607
    %642 = vmatprep.subr.mxu0 0.0
    %643 = vmatpush1.msra.mxu0 %v608
    %644 = vmatprep.subr.mxu0 0.0
    %645 = vmatpush1.msra.mxu0 %v609
    %646 = vmatprep.subr.mxu0 0.0
    %647 = vmatpush1.msra.mxu0 %v610
    %648 = vmatprep.subr.mxu0 0.0
    %649 = vmatpush1.msra.mxu0 %v611
    %650 = vmatprep.subr.mxu0 0.0
    %651 = vmatpush1.msra.mxu0 %v612
    %652 = vmatprep.subr.mxu0 0.0
    %653 = vmatpush1.msra.mxu0 0.0
    %654 = vmatprep.subr.mxu0 0.0
    %655 = vmatpush1.msra.mxu0 0.0
    %656 = vmatprep.subr.mxu0 0.0
    %657 = vmatpush1.msra.mxu0 0.0
    %658 = vmatprep.subr.mxu0 0.0
    %659 = vmatpush1.msra.mxu0 0.0
    %660 = vmatprep.subr.mxu0 0.0
    %661 = vmatpush1.msra.mxu0 0.0
    %662 = vmatprep.subr.mxu0 0.0
    %663 = vmatpush1.msra.mxu0 0.0
    %664 = vmatprep.subr.mxu0 0.0
    %665 = vmatpush1.msra.mxu0 0.0
    %666 = vmatprep.subr.mxu0 0.0
    %667 = vmatpush1.msra.mxu0 0.0
    %668 = vmatprep.subr.mxu0 0.0
    %669 = vmatpush1.msra.mxu0 0.0
    %670 = vmatprep.subr.mxu0 0.0
    %671 = vmatpush1.msra.mxu0 0.0
    %672 = vmatprep.subr.mxu0 0.0
    %673 = vmatpush1.msra.mxu0 0.0
    %674 = vmatprep.subr.mxu0 0.0
    %675 = vmatpush1.msra.mxu0 0.0
    %676 = vmatprep.subr.mxu0 0.0
    %677 = vmatpush1.msra.mxu0 0.0
    %678 = vmatprep.subr.mxu0 0.0
    %679 = vmatpush1.msra.mxu0 0.0
    %680 = vmatprep.subr.mxu0 0.0
    %681 = vmatpush1.msra.mxu0 0.0
    %682 = vmatprep.subr.mxu0 0.0
    %683 = vmatpush1.msra.mxu0 0.0
    %684 = vmatprep.mubr.f32.mxu0 0.0
    %685 = vmatmul.mubr.f32.gmra.mrb[0].mxu0 %v596
    %v686 = vpop.f32.mrb[0].mxu0
    %v687 = vadd.f32 %v618, %v686
    %v688 = vpop.f32.mrb[0].mxu0
    %689 = vdwg.mxu0
    %vm690 = vcmask 64512
    %v692 = vsel %vm690, %v162, 0
    %694 = vmatprep.subr.mxu0 0.0
    %695 = vmatpush1.msra.mxu0 %v687
    %696 = vmatprep.subr.mxu0 0.0
    %697 = vmatpush1.msra.mxu0 0.0
    %698 = vmatprep.subr.mxu0 0.0
    %699 = vmatpush1.msra.mxu0 0.0
    %700 = vmatprep.subr.mxu0 0.0
    %701 = vmatpush1.msra.mxu0 0.0
    %702 = vmatprep.subr.mxu0 0.0
    %703 = vmatpush1.msra.mxu0 0.0
    %704 = vmatprep.subr.mxu0 0.0
    %705 = vmatpush1.msra.mxu0 0.0
    %706 = vmatprep.subr.mxu0 0.0
    %707 = vmatpush1.msra.mxu0 0.0
    %708 = vmatprep.subr.mxu0 0.0
    %709 = vmatpush1.msra.mxu0 0.0
    %710 = vmatprep.subr.mxu0 0.0
    %711 = vmatpush1.msra.mxu0 0.0
    %712 = vmatprep.subr.mxu0 0.0
    %713 = vmatpush1.msra.mxu0 0.0
    %714 = vmatprep.subr.mxu0 0.0
    %715 = vmatpush1.msra.mxu0 0.0
    %716 = vmatprep.subr.mxu0 0.0
    %717 = vmatpush1.msra.mxu0 0.0
    %718 = vmatprep.subr.mxu0 0.0
    %719 = vmatpush1.msra.mxu0 0.0
    %720 = vmatprep.subr.mxu0 0.0
    %721 = vmatpush1.msra.mxu0 0.0
    %722 = vmatprep.subr.mxu0 0.0
    %723 = vmatpush1.msra.mxu0 0.0
    %724 = vmatprep.subr.mxu0 0.0
    %725 = vmatpush1.msra.mxu0 0.0
    %726 = vmatprep.subr.mxu0 0.0
    %727 = vmatpush1.msra.mxu0 0.0
    %728 = vmatprep.subr.mxu0 0.0
    %729 = vmatpush1.msra.mxu0 0.0
    %730 = vmatprep.subr.mxu0 0.0
    %731 = vmatpush1.msra.mxu0 0.0
    %732 = vmatprep.subr.mxu0 0.0
    %733 = vmatpush1.msra.mxu0 0.0
    %734 = vmatprep.subr.mxu0 0.0
    %735 = vmatpush1.msra.mxu0 0.0
    %736 = vmatprep.subr.mxu0 0.0
    %737 = vmatpush1.msra.mxu0 0.0
    %738 = vmatprep.subr.mxu0 0.0
    %739 = vmatpush1.msra.mxu0 0.0
    %740 = vmatprep.subr.mxu0 0.0
    %741 = vmatpush1.msra.mxu0 0.0
    %742 = vmatprep.subr.mxu0 0.0
    %743 = vmatpush1.msra.mxu0 0.0
    %744 = vmatprep.subr.mxu0 0.0
    %745 = vmatpush1.msra.mxu0 0.0
    %746 = vmatprep.subr.mxu0 0.0
    %747 = vmatpush1.msra.mxu0 0.0
    %748 = vmatprep.subr.mxu0 0.0
    %749 = vmatpush1.msra.mxu0 0.0
    %750 = vmatprep.subr.mxu0 0.0
    %751 = vmatpush1.msra.mxu0 0.0
    %752 = vmatprep.subr.mxu0 0.0
    %753 = vmatpush1.msra.mxu0 0.0
    %754 = vmatprep.subr.mxu0 0.0
    %755 = vmatpush1.msra.mxu0 0.0
    %756 = vmatprep.subr.mxu0 0.0
    %757 = vmatpush1.msra.mxu0 0.0
    %758 = vmatprep.mubr.f32.mxu0 0.0
    %759 = vmatmul.mubr.f32.gmra.mrb[0].mxu0 %v692
    %v760 = vpop.f32.mrb[0].mxu0
    %v761 = vadd.f32 0.0, %v760
    %v762 = vpop.f32.mrb[0].mxu0
    %763 = vdwg.mxu0
    %v765 = vsel %vm690, %v248, 0
    %767 = vmatprep.subr.mxu0 0.0
    %768 = vmatpush1.msra.mxu0 %v595
    %769 = vmatprep.subr.mxu0 0.0
    %770 = vmatpush1.msra.mxu0 0.0
    %771 = vmatprep.subr.mxu0 0.0
    %772 = vmatpush1.msra.mxu0 0.0
    %773 = vmatprep.subr.mxu0 0.0
    %774 = vmatpush1.msra.mxu0 0.0
    %775 = vmatprep.subr.mxu0 0.0
    %776 = vmatpush1.msra.mxu0 0.0
    %777 = vmatprep.subr.mxu0 0.0
    %778 = vmatpush1.msra.mxu0 0.0
    %779 = vmatprep.subr.mxu0 0.0
    %780 = vmatpush1.msra.mxu0 0.0
    %781 = vmatprep.subr.mxu0 0.0
    %782 = vmatpush1.msra.mxu0 0.0
    %783 = vmatprep.subr.mxu0 0.0
    %784 = vmatpush1.msra.mxu0 0.0
    %785 = vmatprep.subr.mxu0 0.0
    %786 = vmatpush1.msra.mxu0 0.0
    %787 = vmatprep.subr.mxu0 0.0
    %788 = vmatpush1.msra.mxu0 0.0
    %789 = vmatprep.subr.mxu0 0.0
    %790 = vmatpush1.msra.mxu0 0.0
    %791 = vmatprep.subr.mxu0 0.0
    %792 = vmatpush1.msra.mxu0 0.0
    %793 = vmatprep.subr.mxu0 0.0
    %794 = vmatpush1.msra.mxu0 0.0
    %795 = vmatprep.subr.mxu0 0.0
    %796 = vmatpush1.msra.mxu0 0.0
    %797 = vmatprep.subr.mxu0 0.0
    %798 = vmatpush1.msra.mxu0 0.0
    %799 = vmatprep.subr.mxu0 0.0
    %800 = vmatpush1.msra.mxu0 0.0
    %801 = vmatprep.subr.mxu0 0.0
    %802 = vmatpush1.msra.mxu0 0.0
    %803 = vmatprep.subr.mxu0 0.0
    %804 = vmatpush1.msra.mxu0 0.0
    %805 = vmatprep.subr.mxu0 0.0
    %806 = vmatpush1.msra.mxu0 0.0
    %807 = vmatprep.subr.mxu0 0.0
    %808 = vmatpush1.msra.mxu0 0.0
    %809 = vmatprep.subr.mxu0 0.0
    %810 = vmatpush1.msra.mxu0 0.0
    %811 = vmatprep.subr.mxu0 0.0
    %812 = vmatpush1.msra.mxu0 0.0
    %813 = vmatprep.subr.mxu0 0.0
    %814 = vmatpush1.msra.mxu0 0.0
    %815 = vmatprep.subr.mxu0 0.0
    %816 = vmatpush1.msra.mxu0 0.0
    %817 = vmatprep.subr.mxu0 0.0
    %818 = vmatpush1.msra.mxu0 0.0
    %819 = vmatprep.subr.mxu0 0.0
    %820 = vmatpush1.msra.mxu0 0.0
    %821 = vmatprep.subr.mxu0 0.0
    %822 = vmatpush1.msra.mxu0 0.0
    %823 = vmatprep.subr.mxu0 0.0
    %824 = vmatpush1.msra.mxu0 0.0
    %825 = vmatprep.subr.mxu0 0.0
    %826 = vmatpush1.msra.mxu0 0.0
    %827 = vmatprep.subr.mxu0 0.0
    %828 = vmatpush1.msra.mxu0 0.0
    %829 = vmatprep.subr.mxu0 0.0
    %830 = vmatpush1.msra.mxu0 0.0
    %831 = vmatprep.mubr.f32.mxu0 0.0
    %832 = vmatmul.mubr.f32.gmra.mrb[0].mxu0 %v765
    %v833 = vpop.f32.mrb[0].mxu0
    %v834 = vadd.f32 0.0, %v833
    %v835 = vpop.f32.mrb[0].mxu0
    %836 = vdwg.mxu0
    %v838 = vsel %vm690, %v334, 0
    %840 = vmatprep.subr.mxu0 0.0
    %841 = vmatpush1.msra.mxu0 %v595
    %842 = vmatprep.subr.mxu0 0.0
    %843 = vmatpush1.msra.mxu0 0.0
    %844 = vmatprep.subr.mxu0 0.0
    %845 = vmatpush1.msra.mxu0 0.0
    %846 = vmatprep.subr.mxu0 0.0
    %847 = vmatpush1.msra.mxu0 0.0
    %848 = vmatprep.subr.mxu0 0.0
    %849 = vmatpush1.msra.mxu0 0.0
    %850 = vmatprep.subr.mxu0 0.0
    %851 = vmatpush1.msra.mxu0 0.0
    %852 = vmatprep.subr.mxu0 0.0
    %853 = vmatpush1.msra.mxu0 0.0
    %854 = vmatprep.subr.mxu0 0.0
    %855 = vmatpush1.msra.mxu0 0.0
    %856 = vmatprep.subr.mxu0 0.0
    %857 = vmatpush1.msra.mxu0 0.0
    %858 = vmatprep.subr.mxu0 0.0
    %859 = vmatpush1.msra.mxu0 0.0
    %860 = vmatprep.subr.mxu0 0.0
    %861 = vmatpush1.msra.mxu0 0.0
    %862 = vmatprep.subr.mxu0 0.0
    %863 = vmatpush1.msra.mxu0 0.0
    %864 = vmatprep.subr.mxu0 0.0
    %865 = vmatpush1.msra.mxu0 0.0
    %866 = vmatprep.subr.mxu0 0.0
    %867 = vmatpush1.msra.mxu0 0.0
    %868 = vmatprep.subr.mxu0 0.0
    %869 = vmatpush1.msra.mxu0 0.0
    %870 = vmatprep.subr.mxu0 0.0
    %871 = vmatpush1.msra.mxu0 0.0
    %872 = vmatprep.subr.mxu0 0.0
    %873 = vmatpush1.msra.mxu0 0.0
    %874 = vmatprep.subr.mxu0 0.0
    %875 = vmatpush1.msra.mxu0 0.0
    %876 = vmatprep.subr.mxu0 0.0
    %877 = vmatpush1.msra.mxu0 0.0
    %878 = vmatprep.subr.mxu0 0.0
    %879 = vmatpush1.msra.mxu0 0.0
    %880 = vmatprep.subr.mxu0 0.0
    %881 = vmatpush1.msra.mxu0 0.0
    %882 = vmatprep.subr.mxu0 0.0
    %883 = vmatpush1.msra.mxu0 0.0
    %884 = vmatprep.subr.mxu0 0.0
    %885 = vmatpush1.msra.mxu0 0.0
    %886 = vmatprep.subr.mxu0 0.0
    %887 = vmatpush1.msra.mxu0 0.0
    %888 = vmatprep.subr.mxu0 0.0
    %889 = vmatpush1.msra.mxu0 0.0
    %890 = vmatprep.subr.mxu0 0.0
    %891 = vmatpush1.msra.mxu0 0.0
    %892 = vmatprep.subr.mxu0 0.0
    %893 = vmatpush1.msra.mxu0 0.0
    %894 = vmatprep.subr.mxu0 0.0
    %895 = vmatpush1.msra.mxu0 0.0
    %896 = vmatprep.subr.mxu0 0.0
    %897 = vmatpush1.msra.mxu0 0.0
    %898 = vmatprep.subr.mxu0 0.0
    %899 = vmatpush1.msra.mxu0 0.0
    %900 = vmatprep.subr.mxu0 0.0
    %901 = vmatpush1.msra.mxu0 0.0
    %902 = vmatprep.subr.mxu0 0.0
    %903 = vmatpush1.msra.mxu0 0.0
    %904 = vmatprep.mubr.f32.mxu0 0.0
    %905 = vmatmul.mubr.f32.gmra.mrb[0].mxu0 %v838
    %v906 = vpop.f32.mrb[0].mxu0
    %v907 = vadd.f32 0.0, %v906
    %v908 = vpop.f32.mrb[0].mxu0
    %909 = vdwg.mxu0
    %v911 = vsel %vm690, %v420, 0
    %913 = vmatprep.subr.mxu0 0.0
    %914 = vmatpush1.msra.mxu0 %v687
    %915 = vmatprep.subr.mxu0 0.0
    %916 = vmatpush1.msra.mxu0 0.0
    %917 = vmatprep.subr.mxu0 0.0
    %918 = vmatpush1.msra.mxu0 0.0
    %919 = vmatprep.subr.mxu0 0.0
    %920 = vmatpush1.msra.mxu0 0.0
    %921 = vmatprep.subr.mxu0 0.0
    %922 = vmatpush1.msra.mxu0 0.0
    %923 = vmatprep.subr.mxu0 0.0
    %924 = vmatpush1.msra.mxu0 0.0
    %925 = vmatprep.subr.mxu0 0.0
    %926 = vmatpush1.msra.mxu0 0.0
    %927 = vmatprep.subr.mxu0 0.0
    %928 = vmatpush1.msra.mxu0 0.0
    %929 = vmatprep.subr.mxu0 0.0
    %930 = vmatpush1.msra.mxu0 0.0
    %931 = vmatprep.subr.mxu0 0.0
    %932 = vmatpush1.msra.mxu0 0.0
    %933 = vmatprep.subr.mxu0 0.0
    %934 = vmatpush1.msra.mxu0 0.0
    %935 = vmatprep.subr.mxu0 0.0
    %936 = vmatpush1.msra.mxu0 0.0
    %937 = vmatprep.subr.mxu0 0.0
    %938 = vmatpush1.msra.mxu0 0.0
    %939 = vmatprep.subr.mxu0 0.0
    %940 = vmatpush1.msra.mxu0 0.0
    %941 = vmatprep.subr.mxu0 0.0
    %942 = vmatpush1.msra.mxu0 0.0
    %943 = vmatprep.subr.mxu0 0.0
    %944 = vmatpush1.msra.mxu0 0.0
    %945 = vmatprep.subr.mxu0 0.0
    %946 = vmatpush1.msra.mxu0 0.0
    %947 = vmatprep.subr.mxu0 0.0
    %948 = vmatpush1.msra.mxu0 0.0
    %949 = vmatprep.subr.mxu0 0.0
    %950 = vmatpush1.msra.mxu0 0.0
    %951 = vmatprep.subr.mxu0 0.0
    %952 = vmatpush1.msra.mxu0 0.0
    %953 = vmatprep.subr.mxu0 0.0
    %954 = vmatpush1.msra.mxu0 0.0
    %955 = vmatprep.subr.mxu0 0.0
    %956 = vmatpush1.msra.mxu0 0.0
    %957 = vmatprep.subr.mxu0 0.0
    %958 = vmatpush1.msra.mxu0 0.0
    %959 = vmatprep.subr.mxu0 0.0
    %960 = vmatpush1.msra.mxu0 0.0
    %961 = vmatprep.subr.mxu0 0.0
    %962 = vmatpush1.msra.mxu0 0.0
    %963 = vmatprep.subr.mxu0 0.0
    %964 = vmatpush1.msra.mxu0 0.0
    %965 = vmatprep.subr.mxu0 0.0
    %966 = vmatpush1.msra.mxu0 0.0
    %967 = vmatprep.subr.mxu0 0.0
    %968 = vmatpush1.msra.mxu0 0.0
    %969 = vmatprep.subr.mxu0 0.0
    %970 = vmatpush1.msra.mxu0 0.0
    %971 = vmatprep.subr.mxu0 0.0
    %972 = vmatpush1.msra.mxu0 0.0
    %973 = vmatprep.subr.mxu0 0.0
    %974 = vmatpush1.msra.mxu0 0.0
    %975 = vmatprep.subr.mxu0 0.0
    %976 = vmatpush1.msra.mxu0 0.0
    %977 = vmatprep.mubr.f32.mxu0 0.0
    %978 = vmatmul.mubr.f32.gmra.mrb[0].mxu0 %v911
    %v979 = vpop.f32.mrb[0].mxu0
    %v980 = vadd.f32 0.0, %v979
    %v981 = vpop.f32.mrb[0].mxu0
    %982 = vdwg.mxu0
    %v983 = vld [vmem:[%s14] sm:$0xff]
    %v984 = vld [vmem:[%s14 + $0x8] sm:$0xff]
    %v985 = vld [vmem:[%s14 + $0x10] sm:$0xff]
    %v986 = vld [vmem:[%s14 + $0x18] sm:$0xff]
    %v987 = vld [vmem:[%s14 + $0x20] sm:$0xff]
    %v988 = vld [vmem:[%s14 + $0x28] sm:$0xff]
    %v989 = vld [vmem:[%s14 + $0x30] sm:$0xff]
    %v990 = vld [vmem:[%s14 + $0x38] sm:$0xff]
    %v991 = vld [vmem:[%s14 + $0x40] sm:$0xff]
    %v992 = vld [vmem:[%s14 + $0x48] sm:$0xff]
    %v993 = vld [vmem:[%s14 + $0x50] sm:$0xff]
    %v994 = vld [vmem:[%s14 + $0x58] sm:$0xff]
    %v995 = vld [vmem:[%s14 + $0x60] sm:$0xff]
    %v996 = vld [vmem:[%s14 + $0x68] sm:$0xff]
    %v997 = vld [vmem:[%s14 + $0x70] sm:$0xff]
    %v998 = vld [vmem:[%s14 + $0x78] sm:$0xff]
    %v999 = vld [vmem:[%s15] sm:$0xff]
    %v1000 = vld [vmem:[%s15 + $0x8] sm:$0xff]
    %v1001 = vld [vmem:[%s15 + $0x10] sm:$0xff]
    %v1002 = vld [vmem:[%s15 + $0x18] sm:$0xff]
    %v1003 = vld [vmem:[%s15 + $0x20] sm:$0xff]
    %v1004 = vld [vmem:[%s15 + $0x28] sm:$0xff]
    %v1005 = vld [vmem:[%s15 + $0x30] sm:$0xff]
    %v1006 = vld [vmem:[%s15 + $0x38] sm:$0xff]
    %v1007 = vld [vmem:[%s15 + $0x40] sm:$0xff]
    %v1008 = vld [vmem:[%s15 + $0x48] sm:$0xff]
    %v1009 = vld [vmem:[%s15 + $0x50] sm:$0xff]
    %v1010 = vld [vmem:[%s15 + $0x58] sm:$0xff]
    %v1011 = vld [vmem:[%s15 + $0x60] sm:$0xff]
    %v1012 = vld [vmem:[%s15 + $0x68] sm:$0xff]
    %v1013 = vld [vmem:[%s15 + $0x70] sm:$0xff]
    %v1014 = vld [vmem:[%s15 + $0x78] sm:$0xff]
    %1015 = vmatprep.subr.mxu0 0.0
    %1016 = vmatpush1.msra.mxu0 %v999
    %1017 = vmatprep.subr.mxu0 0.0
    %1018 = vmatpush1.msra.mxu0 %v1000
    %1019 = vmatprep.subr.mxu0 0.0
    %1020 = vmatpush1.msra.mxu0 %v1001
    %1021 = vmatprep.subr.mxu0 0.0
    %1022 = vmatpush1.msra.mxu0 %v1002
    %1023 = vmatprep.subr.mxu0 0.0
    %1024 = vmatpush1.msra.mxu0 %v1003
    %1025 = vmatprep.subr.mxu0 0.0
    %1026 = vmatpush1.msra.mxu0 %v1004
    %1027 = vmatprep.subr.mxu0 0.0
    %1028 = vmatpush1.msra.mxu0 %v1005
    %1029 = vmatprep.subr.mxu0 0.0
    %1030 = vmatpush1.msra.mxu0 %v1006
    %1031 = vmatprep.subr.mxu0 0.0
    %1032 = vmatpush1.msra.mxu0 %v1007
    %1033 = vmatprep.subr.mxu0 0.0
    %1034 = vmatpush1.msra.mxu0 %v1008
    %1035 = vmatprep.subr.mxu0 0.0
    %1036 = vmatpush1.msra.mxu0 %v1009
    %1037 = vmatprep.subr.mxu0 0.0
    %1038 = vmatpush1.msra.mxu0 %v1010
    %1039 = vmatprep.subr.mxu0 0.0
    %1040 = vmatpush1.msra.mxu0 %v1011
    %1041 = vmatprep.subr.mxu0 0.0
    %1042 = vmatpush1.msra.mxu0 %v1012
    %1043 = vmatprep.subr.mxu0 0.0
    %1044 = vmatpush1.msra.mxu0 %v1013
    %1045 = vmatprep.subr.mxu0 0.0
    %1046 = vmatpush1.msra.mxu0 %v1014
    %1047 = vmatprep.subr.mxu0 0.0
    %1048 = vmatpush1.msra.mxu0 0.0
    %1049 = vmatprep.subr.mxu0 0.0
    %1050 = vmatpush1.msra.mxu0 0.0
    %1051 = vmatprep.subr.mxu0 0.0
    %1052 = vmatpush1.msra.mxu0 0.0
    %1053 = vmatprep.subr.mxu0 0.0
    %1054 = vmatpush1.msra.mxu0 0.0
    %1055 = vmatprep.subr.mxu0 0.0
    %1056 = vmatpush1.msra.mxu0 0.0
    %1057 = vmatprep.subr.mxu0 0.0
    %1058 = vmatpush1.msra.mxu0 0.0
    %1059 = vmatprep.subr.mxu0 0.0
    %1060 = vmatpush1.msra.mxu0 0.0
    %1061 = vmatprep.subr.mxu0 0.0
    %1062 = vmatpush1.msra.mxu0 0.0
    %1063 = vmatprep.subr.mxu0 0.0
    %1064 = vmatpush1.msra.mxu0 0.0
    %1065 = vmatprep.subr.mxu0 0.0
    %1066 = vmatpush1.msra.mxu0 0.0
    %1067 = vmatprep.subr.mxu0 0.0
    %1068 = vmatpush1.msra.mxu0 0.0
    %1069 = vmatprep.subr.mxu0 0.0
    %1070 = vmatpush1.msra.mxu0 0.0
    %1071 = vmatprep.subr.mxu0 0.0
    %1072 = vmatpush1.msra.mxu0 0.0
    %1073 = vmatprep.subr.mxu0 0.0
    %1074 = vmatpush1.msra.mxu0 0.0
    %1075 = vmatprep.subr.mxu0 0.0
    %1076 = vmatpush1.msra.mxu0 0.0
    %1077 = vmatprep.subr.mxu0 0.0
    %1078 = vmatpush1.msra.mxu0 0.0
    %1079 = vmatprep.mubr.f32.mxu0 0.0
    %1080 = vmatmul.mubr.f32.gmra.mrb[0].mxu0 %v506
    %v1081 = vpop.f32.mrb[0].mxu0
    %v1082 = vadd.f32 0.0, %v1081
    %v1083 = vpop.f32.mrb[0].mxu0
    %1084 = vdwg.mxu0
    %1085 = vmatprep.subr.mxu0 0.0
    %1086 = vmatpush1.msra.mxu0 %v983
    %1087 = vmatprep.subr.mxu0 0.0
    %1088 = vmatpush1.msra.mxu0 %v984
    %1089 = vmatprep.subr.mxu0 0.0
    %1090 = vmatpush1.msra.mxu0 %v985
    %1091 = vmatprep.subr.mxu0 0.0
    %1092 = vmatpush1.msra.mxu0 %v986
    %1093 = vmatprep.subr.mxu0 0.0
    %1094 = vmatpush1.msra.mxu0 %v987
    %1095 = vmatprep.subr.mxu0 0.0
    %1096 = vmatpush1.msra.mxu0 %v988
    %1097 = vmatprep.subr.mxu0 0.0
    %1098 = vmatpush1.msra.mxu0 %v989
    %1099 = vmatprep.subr.mxu0 0.0
    %1100 = vmatpush1.msra.mxu0 %v990
    %1101 = vmatprep.subr.mxu0 0.0
    %1102 = vmatpush1.msra.mxu0 %v991
    %1103 = vmatprep.subr.mxu0 0.0
    %1104 = vmatpush1.msra.mxu0 %v992
    %1105 = vmatprep.subr.mxu0 0.0
    %1106 = vmatpush1.msra.mxu0 %v993
    %1107 = vmatprep.subr.mxu0 0.0
    %1108 = vmatpush1.msra.mxu0 %v994
    %1109 = vmatprep.subr.mxu0 0.0
    %1110 = vmatpush1.msra.mxu0 %v995
    %1111 = vmatprep.subr.mxu0 0.0
    %1112 = vmatpush1.msra.mxu0 %v996
    %1113 = vmatprep.subr.mxu0 0.0
    %1114 = vmatpush1.msra.mxu0 %v997
    %1115 = vmatprep.subr.mxu0 0.0
    %1116 = vmatpush1.msra.mxu0 %v998
    %1117 = vmatprep.subr.mxu0 0.0
    %1118 = vmatpush1.msra.mxu0 0.0
    %1119 = vmatprep.subr.mxu0 0.0
    %1120 = vmatpush1.msra.mxu0 0.0
    %1121 = vmatprep.subr.mxu0 0.0
    %1122 = vmatpush1.msra.mxu0 0.0
    %1123 = vmatprep.subr.mxu0 0.0
    %1124 = vmatpush1.msra.mxu0 0.0
    %1125 = vmatprep.subr.mxu0 0.0
    %1126 = vmatpush1.msra.mxu0 0.0
    %1127 = vmatprep.subr.mxu0 0.0
    %1128 = vmatpush1.msra.mxu0 0.0
    %1129 = vmatprep.subr.mxu0 0.0
    %1130 = vmatpush1.msra.mxu0 0.0
    %1131 = vmatprep.subr.mxu0 0.0
    %1132 = vmatpush1.msra.mxu0 0.0
    %1133 = vmatprep.subr.mxu0 0.0
    %1134 = vmatpush1.msra.mxu0 0.0
    %1135 = vmatprep.subr.mxu0 0.0
    %1136 = vmatpush1.msra.mxu0 0.0
    %1137 = vmatprep.subr.mxu0 0.0
    %1138 = vmatpush1.msra.mxu0 0.0
    %1139 = vmatprep.subr.mxu0 0.0
    %1140 = vmatpush1.msra.mxu0 0.0
    %1141 = vmatprep.subr.mxu0 0.0
    %1142 = vmatpush1.msra.mxu0 0.0
    %1143 = vmatprep.subr.mxu0 0.0
    %1144 = vmatpush1.msra.mxu0 0.0
    %1145 = vmatprep.subr.mxu0 0.0
    %1146 = vmatpush1.msra.mxu0 0.0
    %1147 = vmatprep.subr.mxu0 0.0
    %1148 = vmatpush1.msra.mxu0 0.0
    %1149 = vmatprep.mubr.f32.mxu0 0.0
    %1150 = vmatmul.mubr.f32.gmra.mrb[0].mxu0 %v761
    %v1151 = vpop.f32.mrb[0].mxu0
    %v1152 = vadd.f32 %v1082, %v1151
    %v1153 = vpop.f32.mrb[0].mxu0
    %1154 = vdwg.mxu0
    %v1155 = vld [vmem:[%s16] sm:$0x1]
    %v1157 = vlaneseq
    %v1158 = vshrl.u32 %v1157, 7
    %v1159 = vsub.s32 0, %v1158
    %v1160 = vrot.slane %v1155, %v1159
    %v1162 = vadd.f32 %v1152, %v1160
    %v1163 = vmax.f32 %v1162, 0.0
    %v1164 = vld [vmem:[%s17] sm:$0xff]
    %v1165 = vld [vmem:[%s17 + $0x8] sm:$0xff]
    %v1166 = vld [vmem:[%s17 + $0x10] sm:$0xff]
    %v1167 = vld [vmem:[%s17 + $0x18] sm:$0xff]
    %v1168 = vld [vmem:[%s17 + $0x20] sm:$0xff]
    %v1169 = vld [vmem:[%s17 + $0x28] sm:$0xff]
    %v1170 = vld [vmem:[%s17 + $0x30] sm:$0xff]
    %v1171 = vld [vmem:[%s17 + $0x38] sm:$0xff]
    %v1172 = vld [vmem:[%s17 + $0x40] sm:$0xff]
    %v1173 = vld [vmem:[%s17 + $0x48] sm:$0xff]
    %v1174 = vld [vmem:[%s17 + $0x50] sm:$0xff]
    %v1175 = vld [vmem:[%s17 + $0x58] sm:$0xff]
    %v1176 = vld [vmem:[%s17 + $0x60] sm:$0xff]
    %v1177 = vld [vmem:[%s17 + $0x68] sm:$0xff]
    %v1178 = vld [vmem:[%s17 + $0x70] sm:$0xff]
    %v1179 = vld [vmem:[%s17 + $0x78] sm:$0xff]
    %v1180 = vld [vmem:[%s18] sm:$0x1]
    %v1182 = vlaneseq
    %v1183 = vshrl.u32 %v1182, 7
    %v1184 = vsub.s32 0, %v1183
    %v1185 = vrot.slane %v1180, %v1184
    %1187 = vmatprep.subr.mxu0 0.0
    %1188 = vmatpush1.msra.mxu0 %v1164
    %1189 = vmatprep.subr.mxu0 0.0
    %1190 = vmatpush1.msra.mxu0 %v1165
    %1191 = vmatprep.subr.mxu0 0.0
    %1192 = vmatpush1.msra.mxu0 %v1166
    %1193 = vmatprep.subr.mxu0 0.0
    %1194 = vmatpush1.msra.mxu0 %v1167
    %1195 = vmatprep.subr.mxu0 0.0
    %1196 = vmatpush1.msra.mxu0 %v1168
    %1197 = vmatprep.subr.mxu0 0.0
    %1198 = vmatpush1.msra.mxu0 %v1169
    %1199 = vmatprep.subr.mxu0 0.0
    %1200 = vmatpush1.msra.mxu0 %v1170
    %1201 = vmatprep.subr.mxu0 0.0
    %1202 = vmatpush1.msra.mxu0 %v1171
    %1203 = vmatprep.subr.mxu0 0.0
    %1204 = vmatpush1.msra.mxu0 %v1172
    %1205 = vmatprep.subr.mxu0 0.0
    %1206 = vmatpush1.msra.mxu0 %v1173
    %1207 = vmatprep.subr.mxu0 0.0
    %1208 = vmatpush1.msra.mxu0 %v1174
    %1209 = vmatprep.subr.mxu0 0.0
    %1210 = vmatpush1.msra.mxu0 %v1175
    %1211 = vmatprep.subr.mxu0 0.0
    %1212 = vmatpush1.msra.mxu0 %v1176
    %1213 = vmatprep.subr.mxu0 0.0
    %1214 = vmatpush1.msra.mxu0 %v1177
    %1215 = vmatprep.subr.mxu0 0.0
    %1216 = vmatpush1.msra.mxu0 %v1178
    %1217 = vmatprep.subr.mxu0 0.0
    %1218 = vmatpush1.msra.mxu0 %v1179
    %1219 = vmatprep.subr.mxu0 0.0
    %1220 = vmatpush1.msra.mxu0 0.0
    %1221 = vmatprep.subr.mxu0 0.0
    %1222 = vmatpush1.msra.mxu0 0.0
    %1223 = vmatprep.subr.mxu0 0.0
    %1224 = vmatpush1.msra.mxu0 0.0
    %1225 = vmatprep.subr.mxu0 0.0
    %1226 = vmatpush1.msra.mxu0 0.0
    %1227 = vmatprep.subr.mxu0 0.0
    %1228 = vmatpush1.msra.mxu0 0.0
    %1229 = vmatprep.subr.mxu0 0.0
    %1230 = vmatpush1.msra.mxu0 0.0
    %1231 = vmatprep.subr.mxu0 0.0
    %1232 = vmatpush1.msra.mxu0 0.0
    %1233 = vmatprep.subr.mxu0 0.0
    %1234 = vmatpush1.msra.mxu0 0.0
    %1235 = vmatprep.subr.mxu0 0.0
    %1236 = vmatpush1.msra.mxu0 0.0
    %1237 = vmatprep.subr.mxu0 0.0
    %1238 = vmatpush1.msra.mxu0 0.0
    %1239 = vmatprep.subr.mxu0 0.0
    %1240 = vmatpush1.msra.mxu0 0.0
    %1241 = vmatprep.subr.mxu0 0.0
    %1242 = vmatpush1.msra.mxu0 0.0
    %1243 = vmatprep.subr.mxu0 0.0
    %1244 = vmatpush1.msra.mxu0 0.0
    %1245 = vmatprep.subr.mxu0 0.0
    %1246 = vmatpush1.msra.mxu0 0.0
    %1247 = vmatprep.subr.mxu0 0.0
    %1248 = vmatpush1.msra.mxu0 0.0
    %1249 = vmatprep.subr.mxu0 0.0
    %1250 = vmatpush1.msra.mxu0 0.0
    %1251 = vmatprep.mubr.f32.mxu0 0.0
    %1252 = vmatmul.mubr.f32.gmra.mrb[0].mxu0 %v1163
    %v1253 = vpop.f32.mrb[0].mxu0
    %v1254 = vadd.f32 %v1185, %v1253
    %v1255 = vpop.f32.mrb[0].mxu0
    %1256 = vdwg.mxu0
    %s1257 = scalar_lea.vmem %s14, 128
    %v1258 = vld [vmem:[%s1257] sm:$0xff]
    %v1259 = vld [vmem:[%s1257 + $0x8] sm:$0xff]
    %v1260 = vld [vmem:[%s1257 + $0x10] sm:$0xff]
    %v1261 = vld [vmem:[%s1257 + $0x18] sm:$0xff]
    %v1262 = vld [vmem:[%s1257 + $0x20] sm:$0xff]
    %v1263 = vld [vmem:[%s1257 + $0x28] sm:$0xff]
    %v1264 = vld [vmem:[%s1257 + $0x30] sm:$0xff]
    %v1265 = vld [vmem:[%s1257 + $0x38] sm:$0xff]
    %v1266 = vld [vmem:[%s1257 + $0x40] sm:$0xff]
    %v1267 = vld [vmem:[%s1257 + $0x48] sm:$0xff]
    %v1268 = vld [vmem:[%s1257 + $0x50] sm:$0xff]
    %v1269 = vld [vmem:[%s1257 + $0x58] sm:$0xff]
    %v1270 = vld [vmem:[%s1257 + $0x60] sm:$0xff]
    %v1271 = vld [vmem:[%s1257 + $0x68] sm:$0xff]
    %v1272 = vld [vmem:[%s1257 + $0x70] sm:$0xff]
    %v1273 = vld [vmem:[%s1257 + $0x78] sm:$0xff]
    %s1274 = scalar_lea.vmem %s16, 1
    %v1275 = vld [vmem:[%s1274] sm:$0x1]
    %v1277 = vlaneseq
    %v1278 = vshrl.u32 %v1277, 7
    %v1279 = vsub.s32 0, %v1278
    %v1280 = vrot.slane %v1275, %v1279
    %1282 = vmatprep.subr.mxu0 0.0
    %1283 = vmatpush1.msra.mxu0 %v1258
    %1284 = vmatprep.subr.mxu0 0.0
    %1285 = vmatpush1.msra.mxu0 %v1259
    %1286 = vmatprep.subr.mxu0 0.0
    %1287 = vmatpush1.msra.mxu0 %v1260
    %1288 = vmatprep.subr.mxu0 0.0
    %1289 = vmatpush1.msra.mxu0 %v1261
    %1290 = vmatprep.subr.mxu0 0.0
    %1291 = vmatpush1.msra.mxu0 %v1262
    %1292 = vmatprep.subr.mxu0 0.0
    %1293 = vmatpush1.msra.mxu0 %v1263
    %1294 = vmatprep.subr.mxu0 0.0
    %1295 = vmatpush1.msra.mxu0 %v1264
    %1296 = vmatprep.subr.mxu0 0.0
    %1297 = vmatpush1.msra.mxu0 %v1265
    %1298 = vmatprep.subr.mxu0 0.0
    %1299 = vmatpush1.msra.mxu0 %v1266
    %1300 = vmatprep.subr.mxu0 0.0
    %1301 = vmatpush1.msra.mxu0 %v1267
    %1302 = vmatprep.subr.mxu0 0.0
    %1303 = vmatpush1.msra.mxu0 %v1268
    %1304 = vmatprep.subr.mxu0 0.0
    %1305 = vmatpush1.msra.mxu0 %v1269
    %1306 = vmatprep.subr.mxu0 0.0
    %1307 = vmatpush1.msra.mxu0 %v1270
    %1308 = vmatprep.subr.mxu0 0.0
    %1309 = vmatpush1.msra.mxu0 %v1271
    %1310 = vmatprep.subr.mxu0 0.0
    %1311 = vmatpush1.msra.mxu0 %v1272
    %1312 = vmatprep.subr.mxu0 0.0
    %1313 = vmatpush1.msra.mxu0 %v1273
    %1314 = vmatprep.subr.mxu0 0.0
    %1315 = vmatpush1.msra.mxu0 0.0
    %1316 = vmatprep.subr.mxu0 0.0
    %1317 = vmatpush1.msra.mxu0 0.0
    %1318 = vmatprep.subr.mxu0 0.0
    %1319 = vmatpush1.msra.mxu0 0.0
    %1320 = vmatprep.subr.mxu0 0.0
    %1321 = vmatpush1.msra.mxu0 0.0
    %1322 = vmatprep.subr.mxu0 0.0
    %1323 = vmatpush1.msra.mxu0 0.0
    %1324 = vmatprep.subr.mxu0 0.0
    %1325 = vmatpush1.msra.mxu0 0.0
    %1326 = vmatprep.subr.mxu0 0.0
    %1327 = vmatpush1.msra.mxu0 0.0
    %1328 = vmatprep.subr.mxu0 0.0
    %1329 = vmatpush1.msra.mxu0 0.0
    %1330 = vmatprep.subr.mxu0 0.0
    %1331 = vmatpush1.msra.mxu0 0.0
    %1332 = vmatprep.subr.mxu0 0.0
    %1333 = vmatpush1.msra.mxu0 0.0
    %1334 = vmatprep.subr.mxu0 0.0
    %1335 = vmatpush1.msra.mxu0 0.0
    %1336 = vmatprep.subr.mxu0 0.0
    %1337 = vmatpush1.msra.mxu0 0.0
    %1338 = vmatprep.subr.mxu0 0.0
    %1339 = vmatpush1.msra.mxu0 0.0
    %1340 = vmatprep.subr.mxu0 0.0
    %1341 = vmatpush1.msra.mxu0 0.0
    %1342 = vmatprep.subr.mxu0 0.0
    %1343 = vmatpush1.msra.mxu0 0.0
    %1344 = vmatprep.subr.mxu0 0.0
    %1345 = vmatpush1.msra.mxu0 0.0
    %1346 = vmatprep.mubr.f32.mxu0 0.0
    %1347 = vmatmul.mubr.f32.gmra.mrb[0].mxu0 %v834
    %v1348 = vpop.f32.mrb[0].mxu0
    %v1349 = vadd.f32 %v1280, %v1348
    %v1350 = vpop.f32.mrb[0].mxu0
    %1351 = vdwg.mxu0
    %v1352 = vmax.f32 %v1349, 0.0
    %s1353 = scalar_lea.vmem %s17, 128
    %v1354 = vld [vmem:[%s1353] sm:$0xff]
    %v1355 = vld [vmem:[%s1353 + $0x8] sm:$0xff]
    %v1356 = vld [vmem:[%s1353 + $0x10] sm:$0xff]
    %v1357 = vld [vmem:[%s1353 + $0x18] sm:$0xff]
    %v1358 = vld [vmem:[%s1353 + $0x20] sm:$0xff]
    %v1359 = vld [vmem:[%s1353 + $0x28] sm:$0xff]
    %v1360 = vld [vmem:[%s1353 + $0x30] sm:$0xff]
    %v1361 = vld [vmem:[%s1353 + $0x38] sm:$0xff]
    %v1362 = vld [vmem:[%s1353 + $0x40] sm:$0xff]
    %v1363 = vld [vmem:[%s1353 + $0x48] sm:$0xff]
    %v1364 = vld [vmem:[%s1353 + $0x50] sm:$0xff]
    %v1365 = vld [vmem:[%s1353 + $0x58] sm:$0xff]
    %v1366 = vld [vmem:[%s1353 + $0x60] sm:$0xff]
    %v1367 = vld [vmem:[%s1353 + $0x68] sm:$0xff]
    %v1368 = vld [vmem:[%s1353 + $0x70] sm:$0xff]
    %v1369 = vld [vmem:[%s1353 + $0x78] sm:$0xff]
    %s1370 = scalar_lea.vmem %s18, 1
    %v1371 = vld [vmem:[%s1370] sm:$0x1]
    %v1373 = vlaneseq
    %v1374 = vshrl.u32 %v1373, 7
    %v1375 = vsub.s32 0, %v1374
    %v1376 = vrot.slane %v1371, %v1375
    %1378 = vmatprep.subr.mxu0 0.0
    %1379 = vmatpush1.msra.mxu0 %v1354
    %1380 = vmatprep.subr.mxu0 0.0
    %1381 = vmatpush1.msra.mxu0 %v1355
    %1382 = vmatprep.subr.mxu0 0.0
    %1383 = vmatpush1.msra.mxu0 %v1356
    %1384 = vmatprep.subr.mxu0 0.0
    %1385 = vmatpush1.msra.mxu0 %v1357
    %1386 = vmatprep.subr.mxu0 0.0
    %1387 = vmatpush1.msra.mxu0 %v1358
    %1388 = vmatprep.subr.mxu0 0.0
    %1389 = vmatpush1.msra.mxu0 %v1359
    %1390 = vmatprep.subr.mxu0 0.0
    %1391 = vmatpush1.msra.mxu0 %v1360
    %1392 = vmatprep.subr.mxu0 0.0
    %1393 = vmatpush1.msra.mxu0 %v1361
    %1394 = vmatprep.subr.mxu0 0.0
    %1395 = vmatpush1.msra.mxu0 %v1362
    %1396 = vmatprep.subr.mxu0 0.0
    %1397 = vmatpush1.msra.mxu0 %v1363
    %1398 = vmatprep.subr.mxu0 0.0
    %1399 = vmatpush1.msra.mxu0 %v1364
    %1400 = vmatprep.subr.mxu0 0.0
    %1401 = vmatpush1.msra.mxu0 %v1365
    %1402 = vmatprep.subr.mxu0 0.0
    %1403 = vmatpush1.msra.mxu0 %v1366
    %1404 = vmatprep.subr.mxu0 0.0
    %1405 = vmatpush1.msra.mxu0 %v1367
    %1406 = vmatprep.subr.mxu0 0.0
    %1407 = vmatpush1.msra.mxu0 %v1368
    %1408 = vmatprep.subr.mxu0 0.0
    %1409 = vmatpush1.msra.mxu0 %v1369
    %1410 = vmatprep.subr.mxu0 0.0
    %1411 = vmatpush1.msra.mxu0 0.0
    %1412 = vmatprep.subr.mxu0 0.0
    %1413 = vmatpush1.msra.mxu0 0.0
    %1414 = vmatprep.subr.mxu0 0.0
    %1415 = vmatpush1.msra.mxu0 0.0
    %1416 = vmatprep.subr.mxu0 0.0
    %1417 = vmatpush1.msra.mxu0 0.0
    %1418 = vmatprep.subr.mxu0 0.0
    %1419 = vmatpush1.msra.mxu0 0.0
    %1420 = vmatprep.subr.mxu0 0.0
    %1421 = vmatpush1.msra.mxu0 0.0
    %1422 = vmatprep.subr.mxu0 0.0
    %1423 = vmatpush1.msra.mxu0 0.0
    %1424 = vmatprep.subr.mxu0 0.0
    %1425 = vmatpush1.msra.mxu0 0.0
    %1426 = vmatprep.subr.mxu0 0.0
    %1427 = vmatpush1.msra.mxu0 0.0
    %1428 = vmatprep.subr.mxu0 0.0
    %1429 = vmatpush1.msra.mxu0 0.0
    %1430 = vmatprep.subr.mxu0 0.0
    %1431 = vmatpush1.msra.mxu0 0.0
    %1432 = vmatprep.subr.mxu0 0.0
    %1433 = vmatpush1.msra.mxu0 0.0
    %1434 = vmatprep.subr.mxu0 0.0
    %1435 = vmatpush1.msra.mxu0 0.0
    %1436 = vmatprep.subr.mxu0 0.0
    %1437 = vmatpush1.msra.mxu0 0.0
    %1438 = vmatprep.subr.mxu0 0.0
    %1439 = vmatpush1.msra.mxu0 0.0
    %1440 = vmatprep.subr.mxu0 0.0
    %1441 = vmatpush1.msra.mxu0 0.0
    %1442 = vmatprep.mubr.f32.mxu0 0.0
    %1443 = vmatmul.mubr.f32.gmra.mrb[0].mxu0 %v1352
    %v1444 = vpop.f32.mrb[0].mxu0
    %v1445 = vadd.f32 %v1376, %v1444
    %v1446 = vpop.f32.mrb[0].mxu0
    %1447 = vdwg.mxu0
    %s1448 = scalar_lea.vmem %s14, 256
    %v1449 = vld [vmem:[%s1448] sm:$0xff]
    %v1450 = vld [vmem:[%s1448 + $0x8] sm:$0xff]
    %v1451 = vld [vmem:[%s1448 + $0x10] sm:$0xff]
    %v1452 = vld [vmem:[%s1448 + $0x18] sm:$0xff]
    %v1453 = vld [vmem:[%s1448 + $0x20] sm:$0xff]
    %v1454 = vld [vmem:[%s1448 + $0x28] sm:$0xff]
    %v1455 = vld [vmem:[%s1448 + $0x30] sm:$0xff]
    %v1456 = vld [vmem:[%s1448 + $0x38] sm:$0xff]
    %v1457 = vld [vmem:[%s1448 + $0x40] sm:$0xff]
    %v1458 = vld [vmem:[%s1448 + $0x48] sm:$0xff]
    %v1459 = vld [vmem:[%s1448 + $0x50] sm:$0xff]
    %v1460 = vld [vmem:[%s1448 + $0x58] sm:$0xff]
    %v1461 = vld [vmem:[%s1448 + $0x60] sm:$0xff]
    %v1462 = vld [vmem:[%s1448 + $0x68] sm:$0xff]
    %v1463 = vld [vmem:[%s1448 + $0x70] sm:$0xff]
    %v1464 = vld [vmem:[%s1448 + $0x78] sm:$0xff]
    %s1465 = scalar_lea.vmem %s15, 128
    %v1466 = vld [vmem:[%s1465] sm:$0xff]
    %v1467 = vld [vmem:[%s1465 + $0x8] sm:$0xff]
    %v1468 = vld [vmem:[%s1465 + $0x10] sm:$0xff]
    %v1469 = vld [vmem:[%s1465 + $0x18] sm:$0xff]
    %v1470 = vld [vmem:[%s1465 + $0x20] sm:$0xff]
    %v1471 = vld [vmem:[%s1465 + $0x28] sm:$0xff]
    %v1472 = vld [vmem:[%s1465 + $0x30] sm:$0xff]
    %v1473 = vld [vmem:[%s1465 + $0x38] sm:$0xff]
    %v1474 = vld [vmem:[%s1465 + $0x40] sm:$0xff]
    %v1475 = vld [vmem:[%s1465 + $0x48] sm:$0xff]
    %v1476 = vld [vmem:[%s1465 + $0x50] sm:$0xff]
    %v1477 = vld [vmem:[%s1465 + $0x58] sm:$0xff]
    %v1478 = vld [vmem:[%s1465 + $0x60] sm:$0xff]
    %v1479 = vld [vmem:[%s1465 + $0x68] sm:$0xff]
    %v1480 = vld [vmem:[%s1465 + $0x70] sm:$0xff]
    %v1481 = vld [vmem:[%s1465 + $0x78] sm:$0xff]
    %1482 = vmatprep.subr.mxu0 0.0
    %1483 = vmatpush1.msra.mxu0 %v1466
    %1484 = vmatprep.subr.mxu0 0.0
    %1485 = vmatpush1.msra.mxu0 %v1467
    %1486 = vmatprep.subr.mxu0 0.0
    %1487 = vmatpush1.msra.mxu0 %v1468
    %1488 = vmatprep.subr.mxu0 0.0
    %1489 = vmatpush1.msra.mxu0 %v1469
    %1490 = vmatprep.subr.mxu0 0.0
    %1491 = vmatpush1.msra.mxu0 %v1470
    %1492 = vmatprep.subr.mxu0 0.0
    %1493 = vmatpush1.msra.mxu0 %v1471
    %1494 = vmatprep.subr.mxu0 0.0
    %1495 = vmatpush1.msra.mxu0 %v1472
    %1496 = vmatprep.subr.mxu0 0.0
    %1497 = vmatpush1.msra.mxu0 %v1473
    %1498 = vmatprep.subr.mxu0 0.0
    %1499 = vmatpush1.msra.mxu0 %v1474
    %1500 = vmatprep.subr.mxu0 0.0
    %1501 = vmatpush1.msra.mxu0 %v1475
    %1502 = vmatprep.subr.mxu0 0.0
    %1503 = vmatpush1.msra.mxu0 %v1476
    %1504 = vmatprep.subr.mxu0 0.0
    %1505 = vmatpush1.msra.mxu0 %v1477
    %1506 = vmatprep.subr.mxu0 0.0
    %1507 = vmatpush1.msra.mxu0 %v1478
    %1508 = vmatprep.subr.mxu0 0.0
    %1509 = vmatpush1.msra.mxu0 %v1479
    %1510 = vmatprep.subr.mxu0 0.0
    %1511 = vmatpush1.msra.mxu0 %v1480
    %1512 = vmatprep.subr.mxu0 0.0
    %1513 = vmatpush1.msra.mxu0 %v1481
    %1514 = vmatprep.subr.mxu0 0.0
    %1515 = vmatpush1.msra.mxu0 0.0
    %1516 = vmatprep.subr.mxu0 0.0
    %1517 = vmatpush1.msra.mxu0 0.0
    %1518 = vmatprep.subr.mxu0 0.0
    %1519 = vmatpush1.msra.mxu0 0.0
    %1520 = vmatprep.subr.mxu0 0.0
    %1521 = vmatpush1.msra.mxu0 0.0
    %1522 = vmatprep.subr.mxu0 0.0
    %1523 = vmatpush1.msra.mxu0 0.0
    %1524 = vmatprep.subr.mxu0 0.0
    %1525 = vmatpush1.msra.mxu0 0.0
    %1526 = vmatprep.subr.mxu0 0.0
    %1527 = vmatpush1.msra.mxu0 0.0
    %1528 = vmatprep.subr.mxu0 0.0
    %1529 = vmatpush1.msra.mxu0 0.0
    %1530 = vmatprep.subr.mxu0 0.0
    %1531 = vmatpush1.msra.mxu0 0.0
    %1532 = vmatprep.subr.mxu0 0.0
    %1533 = vmatpush1.msra.mxu0 0.0
    %1534 = vmatprep.subr.mxu0 0.0
    %1535 = vmatpush1.msra.mxu0 0.0
    %1536 = vmatprep.subr.mxu0 0.0
    %1537 = vmatpush1.msra.mxu0 0.0
    %1538 = vmatprep.subr.mxu0 0.0
    %1539 = vmatpush1.msra.mxu0 0.0
    %1540 = vmatprep.subr.mxu0 0.0
    %1541 = vmatpush1.msra.mxu0 0.0
    %1542 = vmatprep.subr.mxu0 0.0
    %1543 = vmatpush1.msra.mxu0 0.0
    %1544 = vmatprep.subr.mxu0 0.0
    %1545 = vmatpush1.msra.mxu0 0.0
    %1546 = vmatprep.mubr.f32.mxu0 0.0
    %1547 = vmatmul.mubr.f32.gmra.mrb[0].mxu0 %v592
    %v1548 = vpop.f32.mrb[0].mxu0
    %v1549 = vadd.f32 0.0, %v1548
    %v1550 = vpop.f32.mrb[0].mxu0
    %1551 = vdwg.mxu0
    %1552 = vmatprep.subr.mxu0 0.0
    %1553 = vmatpush1.msra.mxu0 %v1449
    %1554 = vmatprep.subr.mxu0 0.0
    %1555 = vmatpush1.msra.mxu0 %v1450
    %1556 = vmatprep.subr.mxu0 0.0
    %1557 = vmatpush1.msra.mxu0 %v1451
    %1558 = vmatprep.subr.mxu0 0.0
    %1559 = vmatpush1.msra.mxu0 %v1452
    %1560 = vmatprep.subr.mxu0 0.0
    %1561 = vmatpush1.msra.mxu0 %v1453
    %1562 = vmatprep.subr.mxu0 0.0
    %1563 = vmatpush1.msra.mxu0 %v1454
    %1564 = vmatprep.subr.mxu0 0.0
    %1565 = vmatpush1.msra.mxu0 %v1455
    %1566 = vmatprep.subr.mxu0 0.0
    %1567 = vmatpush1.msra.mxu0 %v1456
    %1568 = vmatprep.subr.mxu0 0.0
    %1569 = vmatpush1.msra.mxu0 %v1457
    %1570 = vmatprep.subr.mxu0 0.0
    %1571 = vmatpush1.msra.mxu0 %v1458
    %1572 = vmatprep.subr.mxu0 0.0
    %1573 = vmatpush1.msra.mxu0 %v1459
    %1574 = vmatprep.subr.mxu0 0.0
    %1575 = vmatpush1.msra.mxu0 %v1460
    %1576 = vmatprep.subr.mxu0 0.0
    %1577 = vmatpush1.msra.mxu0 %v1461
    %1578 = vmatprep.subr.mxu0 0.0
    %1579 = vmatpush1.msra.mxu0 %v1462
    %1580 = vmatprep.subr.mxu0 0.0
    %1581 = vmatpush1.msra.mxu0 %v1463
    %1582 = vmatprep.subr.mxu0 0.0
    %1583 = vmatpush1.msra.mxu0 %v1464
    %1584 = vmatprep.subr.mxu0 0.0
    %1585 = vmatpush1.msra.mxu0 0.0
    %1586 = vmatprep.subr.mxu0 0.0
    %1587 = vmatpush1.msra.mxu0 0.0
    %1588 = vmatprep.subr.mxu0 0.0
    %1589 = vmatpush1.msra.mxu0 0.0
    %1590 = vmatprep.subr.mxu0 0.0
    %1591 = vmatpush1.msra.mxu0 0.0
    %1592 = vmatprep.subr.mxu0 0.0
    %1593 = vmatpush1.msra.mxu0 0.0
    %1594 = vmatprep.subr.mxu0 0.0
    %1595 = vmatpush1.msra.mxu0 0.0
    %1596 = vmatprep.subr.mxu0 0.0
    %1597 = vmatpush1.msra.mxu0 0.0
    %1598 = vmatprep.subr.mxu0 0.0
    %1599 = vmatpush1.msra.mxu0 0.0
    %1600 = vmatprep.subr.mxu0 0.0
    %1601 = vmatpush1.msra.mxu0 0.0
    %1602 = vmatprep.subr.mxu0 0.0
    %1603 = vmatpush1.msra.mxu0 0.0
    %1604 = vmatprep.subr.mxu0 0.0
    %1605 = vmatpush1.msra.mxu0 0.0
    %1606 = vmatprep.subr.mxu0 0.0
    %1607 = vmatpush1.msra.mxu0 0.0
    %1608 = vmatprep.subr.mxu0 0.0
    %1609 = vmatpush1.msra.mxu0 0.0
    %1610 = vmatprep.subr.mxu0 0.0
    %1611 = vmatpush1.msra.mxu0 0.0
    %1612 = vmatprep.subr.mxu0 0.0
    %1613 = vmatpush1.msra.mxu0 0.0
    %1614 = vmatprep.subr.mxu0 0.0
    %1615 = vmatpush1.msra.mxu0 0.0
    %1616 = vmatprep.mubr.f32.mxu0 0.0
    %1617 = vmatmul.mubr.f32.gmra.mrb[0].mxu0 %v907
    %v1618 = vpop.f32.mrb[0].mxu0
    %v1619 = vadd.f32 %v1549, %v1618
    %v1620 = vpop.f32.mrb[0].mxu0
    %1621 = vdwg.mxu0
    %s1622 = scalar_lea.vmem %s16, 2
    %v1623 = vld [vmem:[%s1622] sm:$0x1]
    %v1625 = vlaneseq
    %v1626 = vshrl.u32 %v1625, 7
    %v1627 = vsub.s32 0, %v1626
    %v1628 = vrot.slane %v1623, %v1627
    %v1630 = vadd.f32 %v1619, %v1628
    %v1631 = vmax.f32 %v1630, 0.0
    %s1632 = scalar_lea.vmem %s17, 256
    %v1633 = vld [vmem:[%s1632] sm:$0xff]
    %v1634 = vld [vmem:[%s1632 + $0x8] sm:$0xff]
    %v1635 = vld [vmem:[%s1632 + $0x10] sm:$0xff]
    %v1636 = vld [vmem:[%s1632 + $0x18] sm:$0xff]
    %v1637 = vld [vmem:[%s1632 + $0x20] sm:$0xff]
    %v1638 = vld [vmem:[%s1632 + $0x28] sm:$0xff]
    %v1639 = vld [vmem:[%s1632 + $0x30] sm:$0xff]
    %v1640 = vld [vmem:[%s1632 + $0x38] sm:$0xff]
    %v1641 = vld [vmem:[%s1632 + $0x40] sm:$0xff]
    %v1642 = vld [vmem:[%s1632 + $0x48] sm:$0xff]
    %v1643 = vld [vmem:[%s1632 + $0x50] sm:$0xff]
    %v1644 = vld [vmem:[%s1632 + $0x58] sm:$0xff]
    %v1645 = vld [vmem:[%s1632 + $0x60] sm:$0xff]
    %v1646 = vld [vmem:[%s1632 + $0x68] sm:$0xff]
    %v1647 = vld [vmem:[%s1632 + $0x70] sm:$0xff]
    %v1648 = vld [vmem:[%s1632 + $0x78] sm:$0xff]
    %s1649 = scalar_lea.vmem %s18, 2
    %v1650 = vld [vmem:[%s1649] sm:$0x1]
    %v1652 = vlaneseq
    %v1653 = vshrl.u32 %v1652, 7
    %v1654 = vsub.s32 0, %v1653
    %v1655 = vrot.slane %v1650, %v1654
    %1657 = vmatprep.subr.mxu0 0.0
    %1658 = vmatpush1.msra.mxu0 %v1633
    %1659 = vmatprep.subr.mxu0 0.0
    %1660 = vmatpush1.msra.mxu0 %v1634
    %1661 = vmatprep.subr.mxu0 0.0
    %1662 = vmatpush1.msra.mxu0 %v1635
    %1663 = vmatprep.subr.mxu0 0.0
    %1664 = vmatpush1.msra.mxu0 %v1636
    %1665 = vmatprep.subr.mxu0 0.0
    %1666 = vmatpush1.msra.mxu0 %v1637
    %1667 = vmatprep.subr.mxu0 0.0
    %1668 = vmatpush1.msra.mxu0 %v1638
    %1669 = vmatprep.subr.mxu0 0.0
    %1670 = vmatpush1.msra.mxu0 %v1639
    %1671 = vmatprep.subr.mxu0 0.0
    %1672 = vmatpush1.msra.mxu0 %v1640
    %1673 = vmatprep.subr.mxu0 0.0
    %1674 = vmatpush1.msra.mxu0 %v1641
    %1675 = vmatprep.subr.mxu0 0.0
    %1676 = vmatpush1.msra.mxu0 %v1642
    %1677 = vmatprep.subr.mxu0 0.0
    %1678 = vmatpush1.msra.mxu0 %v1643
    %1679 = vmatprep.subr.mxu0 0.0
    %1680 = vmatpush1.msra.mxu0 %v1644
    %1681 = vmatprep.subr.mxu0 0.0
    %1682 = vmatpush1.msra.mxu0 %v1645
    %1683 = vmatprep.subr.mxu0 0.0
    %1684 = vmatpush1.msra.mxu0 %v1646
    %1685 = vmatprep.subr.mxu0 0.0
    %1686 = vmatpush1.msra.mxu0 %v1647
    %1687 = vmatprep.subr.mxu0 0.0
    %1688 = vmatpush1.msra.mxu0 %v1648
    %1689 = vmatprep.subr.mxu0 0.0
    %1690 = vmatpush1.msra.mxu0 0.0
    %1691 = vmatprep.subr.mxu0 0.0
    %1692 = vmatpush1.msra.mxu0 0.0
    %1693 = vmatprep.subr.mxu0 0.0
    %1694 = vmatpush1.msra.mxu0 0.0
    %1695 = vmatprep.subr.mxu0 0.0
    %1696 = vmatpush1.msra.mxu0 0.0
    %1697 = vmatprep.subr.mxu0 0.0
    %1698 = vmatpush1.msra.mxu0 0.0
    %1699 = vmatprep.subr.mxu0 0.0
    %1700 = vmatpush1.msra.mxu0 0.0
    %1701 = vmatprep.subr.mxu0 0.0
    %1702 = vmatpush1.msra.mxu0 0.0
    %1703 = vmatprep.subr.mxu0 0.0
    %1704 = vmatpush1.msra.mxu0 0.0
    %1705 = vmatprep.subr.mxu0 0.0
    %1706 = vmatpush1.msra.mxu0 0.0
    %1707 = vmatprep.subr.mxu0 0.0
    %1708 = vmatpush1.msra.mxu0 0.0
    %1709 = vmatprep.subr.mxu0 0.0
    %1710 = vmatpush1.msra.mxu0 0.0
    %1711 = vmatprep.subr.mxu0 0.0
    %1712 = vmatpush1.msra.mxu0 0.0
    %1713 = vmatprep.subr.mxu0 0.0
    %1714 = vmatpush1.msra.mxu0 0.0
    %1715 = vmatprep.subr.mxu0 0.0
    %1716 = vmatpush1.msra.mxu0 0.0
    %1717 = vmatprep.subr.mxu0 0.0
    %1718 = vmatpush1.msra.mxu0 0.0
    %1719 = vmatprep.subr.mxu0 0.0
    %1720 = vmatpush1.msra.mxu0 0.0
    %1721 = vmatprep.mubr.f32.mxu0 0.0
    %1722 = vmatmul.mubr.f32.gmra.mrb[0].mxu0 %v1631
    %v1723 = vpop.f32.mrb[0].mxu0
    %v1724 = vadd.f32 %v1655, %v1723
    %v1725 = vpop.f32.mrb[0].mxu0
    %1726 = vdwg.mxu0
    %s1727 = scalar_lea.vmem %s14, 384
    %v1728 = vld [vmem:[%s1727] sm:$0xff]
    %v1729 = vld [vmem:[%s1727 + $0x8] sm:$0xff]
    %v1730 = vld [vmem:[%s1727 + $0x10] sm:$0xff]
    %v1731 = vld [vmem:[%s1727 + $0x18] sm:$0xff]
    %v1732 = vld [vmem:[%s1727 + $0x20] sm:$0xff]
    %v1733 = vld [vmem:[%s1727 + $0x28] sm:$0xff]
    %v1734 = vld [vmem:[%s1727 + $0x30] sm:$0xff]
    %v1735 = vld [vmem:[%s1727 + $0x38] sm:$0xff]
    %v1736 = vld [vmem:[%s1727 + $0x40] sm:$0xff]
    %v1737 = vld [vmem:[%s1727 + $0x48] sm:$0xff]
    %v1738 = vld [vmem:[%s1727 + $0x50] sm:$0xff]
    %v1739 = vld [vmem:[%s1727 + $0x58] sm:$0xff]
    %v1740 = vld [vmem:[%s1727 + $0x60] sm:$0xff]
    %v1741 = vld [vmem:[%s1727 + $0x68] sm:$0xff]
    %v1742 = vld [vmem:[%s1727 + $0x70] sm:$0xff]
    %v1743 = vld [vmem:[%s1727 + $0x78] sm:$0xff]
    %s1744 = scalar_lea.vmem %s16, 3
    %v1745 = vld [vmem:[%s1744] sm:$0x1]
    %v1747 = vlaneseq
    %v1748 = vshrl.u32 %v1747, 7
    %v1749 = vsub.s32 0, %v1748
    %v1750 = vrot.slane %v1745, %v1749
    %1752 = vmatprep.subr.mxu0 0.0
    %1753 = vmatpush1.msra.mxu0 %v1728
    %1754 = vmatprep.subr.mxu0 0.0
    %1755 = vmatpush1.msra.mxu0 %v1729
    %1756 = vmatprep.subr.mxu0 0.0
    %1757 = vmatpush1.msra.mxu0 %v1730
    %1758 = vmatprep.subr.mxu0 0.0
    %1759 = vmatpush1.msra.mxu0 %v1731
    %1760 = vmatprep.subr.mxu0 0.0
    %1761 = vmatpush1.msra.mxu0 %v1732
    %1762 = vmatprep.subr.mxu0 0.0
    %1763 = vmatpush1.msra.mxu0 %v1733
    %1764 = vmatprep.subr.mxu0 0.0
    %1765 = vmatpush1.msra.mxu0 %v1734
    %1766 = vmatprep.subr.mxu0 0.0
    %1767 = vmatpush1.msra.mxu0 %v1735
    %1768 = vmatprep.subr.mxu0 0.0
    %1769 = vmatpush1.msra.mxu0 %v1736
    %1770 = vmatprep.subr.mxu0 0.0
    %1771 = vmatpush1.msra.mxu0 %v1737
    %1772 = vmatprep.subr.mxu0 0.0
    %1773 = vmatpush1.msra.mxu0 %v1738
    %1774 = vmatprep.subr.mxu0 0.0
    %1775 = vmatpush1.msra.mxu0 %v1739
    %1776 = vmatprep.subr.mxu0 0.0
    %1777 = vmatpush1.msra.mxu0 %v1740
    %1778 = vmatprep.subr.mxu0 0.0
    %1779 = vmatpush1.msra.mxu0 %v1741
    %1780 = vmatprep.subr.mxu0 0.0
    %1781 = vmatpush1.msra.mxu0 %v1742
    %1782 = vmatprep.subr.mxu0 0.0
    %1783 = vmatpush1.msra.mxu0 %v1743
    %1784 = vmatprep.subr.mxu0 0.0
    %1785 = vmatpush1.msra.mxu0 0.0
    %1786 = vmatprep.subr.mxu0 0.0
    %1787 = vmatpush1.msra.mxu0 0.0
    %1788 = vmatprep.subr.mxu0 0.0
    %1789 = vmatpush1.msra.mxu0 0.0
    %1790 = vmatprep.subr.mxu0 0.0
    %1791 = vmatpush1.msra.mxu0 0.0
    %1792 = vmatprep.subr.mxu0 0.0
    %1793 = vmatpush1.msra.mxu0 0.0
    %1794 = vmatprep.subr.mxu0 0.0
    %1795 = vmatpush1.msra.mxu0 0.0
    %1796 = vmatprep.subr.mxu0 0.0
    %1797 = vmatpush1.msra.mxu0 0.0
    %1798 = vmatprep.subr.mxu0 0.0
    %1799 = vmatpush1.msra.mxu0 0.0
    %1800 = vmatprep.subr.mxu0 0.0
    %1801 = vmatpush1.msra.mxu0 0.0
    %1802 = vmatprep.subr.mxu0 0.0
    %1803 = vmatpush1.msra.mxu0 0.0
    %1804 = vmatprep.subr.mxu0 0.0
    %1805 = vmatpush1.msra.mxu0 0.0
    %1806 = vmatprep.subr.mxu0 0.0
    %1807 = vmatpush1.msra.mxu0 0.0
    %1808 = vmatprep.subr.mxu0 0.0
    %1809 = vmatpush1.msra.mxu0 0.0
    %1810 = vmatprep.subr.mxu0 0.0
    %1811 = vmatpush1.msra.mxu0 0.0
    %1812 = vmatprep.subr.mxu0 0.0
    %1813 = vmatpush1.msra.mxu0 0.0
    %1814 = vmatprep.subr.mxu0 0.0
    %1815 = vmatpush1.msra.mxu0 0.0
    %1816 = vmatprep.mubr.f32.mxu0 0.0
    %1817 = vmatmul.mubr.f32.gmra.mrb[0].mxu0 %v980
    %v1818 = vpop.f32.mrb[0].mxu0
    %v1819 = vadd.f32 %v1750, %v1818
    %v1820 = vpop.f32.mrb[0].mxu0
    %1821 = vdwg.mxu0
    %v1822 = vmax.f32 %v1819, 0.0
    %s1823 = scalar_lea.vmem %s17, 384
    %v1824 = vld [vmem:[%s1823] sm:$0xff]
    %v1825 = vld [vmem:[%s1823 + $0x8] sm:$0xff]
    %v1826 = vld [vmem:[%s1823 + $0x10] sm:$0xff]
    %v1827 = vld [vmem:[%s1823 + $0x18] sm:$0xff]
    %v1828 = vld [vmem:[%s1823 + $0x20] sm:$0xff]
    %v1829 = vld [vmem:[%s1823 + $0x28] sm:$0xff]
    %v1830 = vld [vmem:[%s1823 + $0x30] sm:$0xff]
    %v1831 = vld [vmem:[%s1823 + $0x38] sm:$0xff]
    %v1832 = vld [vmem:[%s1823 + $0x40] sm:$0xff]
    %v1833 = vld [vmem:[%s1823 + $0x48] sm:$0xff]
    %v1834 = vld [vmem:[%s1823 + $0x50] sm:$0xff]
    %v1835 = vld [vmem:[%s1823 + $0x58] sm:$0xff]
    %v1836 = vld [vmem:[%s1823 + $0x60] sm:$0xff]
    %v1837 = vld [vmem:[%s1823 + $0x68] sm:$0xff]
    %v1838 = vld [vmem:[%s1823 + $0x70] sm:$0xff]
    %v1839 = vld [vmem:[%s1823 + $0x78] sm:$0xff]
    %s1840 = scalar_lea.vmem %s18, 3
    %v1841 = vld [vmem:[%s1840] sm:$0x1]
    %v1843 = vlaneseq
    %v1844 = vshrl.u32 %v1843, 7
    %v1845 = vsub.s32 0, %v1844
    %v1846 = vrot.slane %v1841, %v1845
    %1848 = vmatprep.subr.mxu0 0.0
    %1849 = vmatpush1.msra.mxu0 %v1824
    %1850 = vmatprep.subr.mxu0 0.0
    %1851 = vmatpush1.msra.mxu0 %v1825
    %1852 = vmatprep.subr.mxu0 0.0
    %1853 = vmatpush1.msra.mxu0 %v1826
    %1854 = vmatprep.subr.mxu0 0.0
    %1855 = vmatpush1.msra.mxu0 %v1827
    %1856 = vmatprep.subr.mxu0 0.0
    %1857 = vmatpush1.msra.mxu0 %v1828
    %1858 = vmatprep.subr.mxu0 0.0
    %1859 = vmatpush1.msra.mxu0 %v1829
    %1860 = vmatprep.subr.mxu0 0.0
    %1861 = vmatpush1.msra.mxu0 %v1830
    %1862 = vmatprep.subr.mxu0 0.0
    %1863 = vmatpush1.msra.mxu0 %v1831
    %1864 = vmatprep.subr.mxu0 0.0
    %1865 = vmatpush1.msra.mxu0 %v1832
    %1866 = vmatprep.subr.mxu0 0.0
    %1867 = vmatpush1.msra.mxu0 %v1833
    %1868 = vmatprep.subr.mxu0 0.0
    %1869 = vmatpush1.msra.mxu0 %v1834
    %1870 = vmatprep.subr.mxu0 0.0
    %1871 = vmatpush1.msra.mxu0 %v1835
    %1872 = vmatprep.subr.mxu0 0.0
    %1873 = vmatpush1.msra.mxu0 %v1836
    %1874 = vmatprep.subr.mxu0 0.0
    %1875 = vmatpush1.msra.mxu0 %v1837
    %1876 = vmatprep.subr.mxu0 0.0
    %1877 = vmatpush1.msra.mxu0 %v1838
    %1878 = vmatprep.subr.mxu0 0.0
    %1879 = vmatpush1.msra.mxu0 %v1839
    %1880 = vmatprep.subr.mxu0 0.0
    %1881 = vmatpush1.msra.mxu0 0.0
    %1882 = vmatprep.subr.mxu0 0.0
    %1883 = vmatpush1.msra.mxu0 0.0
    %1884 = vmatprep.subr.mxu0 0.0
    %1885 = vmatpush1.msra.mxu0 0.0
    %1886 = vmatprep.subr.mxu0 0.0
    %1887 = vmatpush1.msra.mxu0 0.0
    %1888 = vmatprep.subr.mxu0 0.0
    %1889 = vmatpush1.msra.mxu0 0.0
    %1890 = vmatprep.subr.mxu0 0.0
    %1891 = vmatpush1.msra.mxu0 0.0
    %1892 = vmatprep.subr.mxu0 0.0
    %1893 = vmatpush1.msra.mxu0 0.0
    %1894 = vmatprep.subr.mxu0 0.0
    %1895 = vmatpush1.msra.mxu0 0.0
    %1896 = vmatprep.subr.mxu0 0.0
    %1897 = vmatpush1.msra.mxu0 0.0
    %1898 = vmatprep.subr.mxu0 0.0
    %1899 = vmatpush1.msra.mxu0 0.0
    %1900 = vmatprep.subr.mxu0 0.0
    %1901 = vmatpush1.msra.mxu0 0.0
    %1902 = vmatprep.subr.mxu0 0.0
    %1903 = vmatpush1.msra.mxu0 0.0
    %1904 = vmatprep.subr.mxu0 0.0
    %1905 = vmatpush1.msra.mxu0 0.0
    %1906 = vmatprep.subr.mxu0 0.0
    %1907 = vmatpush1.msra.mxu0 0.0
    %1908 = vmatprep.subr.mxu0 0.0
    %1909 = vmatpush1.msra.mxu0 0.0
    %1910 = vmatprep.subr.mxu0 0.0
    %1911 = vmatpush1.msra.mxu0 0.0
    %1912 = vmatprep.mubr.f32.mxu0 0.0
    %1913 = vmatmul.mubr.f32.gmra.mrb[0].mxu0 %v1822
    %v1914 = vpop.f32.mrb[0].mxu0
    %v1915 = vadd.f32 %v1846, %v1914
    %v1916 = vpop.f32.mrb[0].mxu0
    %1917 = vdwg.mxu0
    %v1918 = vadd.f32 %v1254, %v1445
    %v1919 = vmax.f32 %v1918, 0.0
    %v1920 = vadd.f32 %v1724, %v1915
    %v1921 = vmax.f32 %v1920, 0.0
    %1922 = vmatprep.subr.mxu0 0.0
    %1923 = vmatpush1.msra.mxu0 %v1921
    %1924 = vmatprep.subr.mxu0 0.0
    %1925 = vmatpush1.msra.mxu0 0.0
    %1926 = vmatprep.subr.mxu0 0.0
    %1927 = vmatpush1.msra.mxu0 0.0
    %1928 = vmatprep.subr.mxu0 0.0
    %1929 = vmatpush1.msra.mxu0 0.0
    %1930 = vmatprep.subr.mxu0 0.0
    %1931 = vmatpush1.msra.mxu0 0.0
    %1932 = vmatprep.subr.mxu0 0.0
    %1933 = vmatpush1.msra.mxu0 0.0
    %1934 = vmatprep.subr.mxu0 0.0
    %1935 = vmatpush1.msra.mxu0 0.0
    %1936 = vmatprep.subr.mxu0 0.0
    %1937 = vmatpush1.msra.mxu0 0.0
    %1938 = vmatprep.subr.mxu0 0.0
    %1939 = vmatpush1.msra.mxu0 0.0
    %1940 = vmatprep.subr.mxu0 0.0
    %1941 = vmatpush1.msra.mxu0 0.0
    %1942 = vmatprep.subr.mxu0 0.0
    %1943 = vmatpush1.msra.mxu0 0.0
    %1944 = vmatprep.subr.mxu0 0.0
    %1945 = vmatpush1.msra.mxu0 0.0
    %1946 = vmatprep.subr.mxu0 0.0
    %1947 = vmatpush1.msra.mxu0 0.0
    %1948 = vmatprep.subr.mxu0 0.0
    %1949 = vmatpush1.msra.mxu0 0.0
    %1950 = vmatprep.subr.mxu0 0.0
    %1951 = vmatpush1.msra.mxu0 0.0
    %1952 = vmatprep.subr.mxu0 0.0
    %1953 = vmatpush1.msra.mxu0 0.0
    %1954 = vmatprep.subr.mxu0 0.0
    %1955 = vmatpush1.msra.mxu0 0.0
    %1956 = vmatprep.subr.mxu0 0.0
    %1957 = vmatpush1.msra.mxu0 0.0
    %1958 = vmatprep.subr.mxu0 0.0
    %1959 = vmatpush1.msra.mxu0 0.0
    %1960 = vmatprep.subr.mxu0 0.0
    %1961 = vmatpush1.msra.mxu0 0.0
    %1962 = vmatprep.subr.mxu0 0.0
    %1963 = vmatpush1.msra.mxu0 0.0
    %1964 = vmatprep.subr.mxu0 0.0
    %1965 = vmatpush1.msra.mxu0 0.0
    %1966 = vmatprep.subr.mxu0 0.0
    %1967 = vmatpush1.msra.mxu0 0.0
    %1968 = vmatprep.subr.mxu0 0.0
    %1969 = vmatpush1.msra.mxu0 0.0
    %1970 = vmatprep.subr.mxu0 0.0
    %1971 = vmatpush1.msra.mxu0 0.0
    %1972 = vmatprep.subr.mxu0 0.0
    %1973 = vmatpush1.msra.mxu0 0.0
    %1974 = vmatprep.subr.mxu0 0.0
    %1975 = vmatpush1.msra.mxu0 0.0
    %1976 = vmatprep.subr.mxu0 0.0
    %1977 = vmatpush1.msra.mxu0 0.0
    %1978 = vmatprep.subr.mxu0 0.0
    %1979 = vmatpush1.msra.mxu0 0.0
    %1980 = vmatprep.subr.mxu0 0.0
    %1981 = vmatpush1.msra.mxu0 0.0
    %1982 = vmatprep.subr.mxu0 0.0
    %1983 = vmatpush1.msra.mxu0 0.0
    %1984 = vmatprep.subr.mxu0 0.0
    %1985 = vmatpush1.msra.mxu0 0.0
    %1986 = vmatprep.mubr.f32.mxu0 0.0
    %1987 = vmatmul.mubr.f32.gmra.mrb[0].mxu0 %v692
    %v1988 = vpop.f32.mrb[0].mxu0
    %v1989 = vadd.f32 0.0, %v1988
    %v1990 = vpop.f32.mrb[0].mxu0
    %1991 = vdwg.mxu0
    %1992 = vmatprep.subr.mxu0 0.0
    %1993 = vmatpush1.msra.mxu0 %v1919
    %1994 = vmatprep.subr.mxu0 0.0
    %1995 = vmatpush1.msra.mxu0 0.0
    %1996 = vmatprep.subr.mxu0 0.0
    %1997 = vmatpush1.msra.mxu0 0.0
    %1998 = vmatprep.subr.mxu0 0.0
    %1999 = vmatpush1.msra.mxu0 0.0
    %2000 = vmatprep.subr.mxu0 0.0
    %2001 = vmatpush1.msra.mxu0 0.0
    %2002 = vmatprep.subr.mxu0 0.0
    %2003 = vmatpush1.msra.mxu0 0.0
    %2004 = vmatprep.subr.mxu0 0.0
    %2005 = vmatpush1.msra.mxu0 0.0
    %2006 = vmatprep.subr.mxu0 0.0
    %2007 = vmatpush1.msra.mxu0 0.0
    %2008 = vmatprep.subr.mxu0 0.0
    %2009 = vmatpush1.msra.mxu0 0.0
    %2010 = vmatprep.subr.mxu0 0.0
    %2011 = vmatpush1.msra.mxu0 0.0
    %2012 = vmatprep.subr.mxu0 0.0
    %2013 = vmatpush1.msra.mxu0 0.0
    %2014 = vmatprep.subr.mxu0 0.0
    %2015 = vmatpush1.msra.mxu0 0.0
    %2016 = vmatprep.subr.mxu0 0.0
    %2017 = vmatpush1.msra.mxu0 0.0
    %2018 = vmatprep.subr.mxu0 0.0
    %2019 = vmatpush1.msra.mxu0 0.0
    %2020 = vmatprep.subr.mxu0 0.0
    %2021 = vmatpush1.msra.mxu0 0.0
    %2022 = vmatprep.subr.mxu0 0.0
    %2023 = vmatpush1.msra.mxu0 0.0
    %2024 = vmatprep.subr.mxu0 0.0
    %2025 = vmatpush1.msra.mxu0 0.0
    %2026 = vmatprep.subr.mxu0 0.0
    %2027 = vmatpush1.msra.mxu0 0.0
    %2028 = vmatprep.subr.mxu0 0.0
    %2029 = vmatpush1.msra.mxu0 0.0
    %2030 = vmatprep.subr.mxu0 0.0
    %2031 = vmatpush1.msra.mxu0 0.0
    %2032 = vmatprep.subr.mxu0 0.0
    %2033 = vmatpush1.msra.mxu0 0.0
    %2034 = vmatprep.subr.mxu0 0.0
    %2035 = vmatpush1.msra.mxu0 0.0
    %2036 = vmatprep.subr.mxu0 0.0
    %2037 = vmatpush1.msra.mxu0 0.0
    %2038 = vmatprep.subr.mxu0 0.0
    %2039 = vmatpush1.msra.mxu0 0.0
    %2040 = vmatprep.subr.mxu0 0.0
    %2041 = vmatpush1.msra.mxu0 0.0
    %2042 = vmatprep.subr.mxu0 0.0
    %2043 = vmatpush1.msra.mxu0 0.0
    %2044 = vmatprep.subr.mxu0 0.0
    %2045 = vmatpush1.msra.mxu0 0.0
    %2046 = vmatprep.subr.mxu0 0.0
    %2047 = vmatpush1.msra.mxu0 0.0
    %2048 = vmatprep.subr.mxu0 0.0
    %2049 = vmatpush1.msra.mxu0 0.0
    %2050 = vmatprep.subr.mxu0 0.0
    %2051 = vmatpush1.msra.mxu0 0.0
    %2052 = vmatprep.subr.mxu0 0.0
    %2053 = vmatpush1.msra.mxu0 0.0
    %2054 = vmatprep.subr.mxu0 0.0
    %2055 = vmatpush1.msra.mxu0 0.0
    %2056 = vmatprep.mubr.f32.mxu0 0.0
    %2057 = vmatmul.mubr.f32.gmra.mrb[0].mxu0 %v765
    %v2058 = vpop.f32.mrb[0].mxu0
    %v2059 = vadd.f32 0.0, %v2058
    %v2060 = vpop.f32.mrb[0].mxu0
    %2061 = vdwg.mxu0
    %2062 = vmatprep.subr.mxu0 0.0
    %2063 = vmatpush1.msra.mxu0 %v1919
    %2064 = vmatprep.subr.mxu0 0.0
    %2065 = vmatpush1.msra.mxu0 0.0
    %2066 = vmatprep.subr.mxu0 0.0
    %2067 = vmatpush1.msra.mxu0 0.0
    %2068 = vmatprep.subr.mxu0 0.0
    %2069 = vmatpush1.msra.mxu0 0.0
    %2070 = vmatprep.subr.mxu0 0.0
    %2071 = vmatpush1.msra.mxu0 0.0
    %2072 = vmatprep.subr.mxu0 0.0
    %2073 = vmatpush1.msra.mxu0 0.0
    %2074 = vmatprep.subr.mxu0 0.0
    %2075 = vmatpush1.msra.mxu0 0.0
    %2076 = vmatprep.subr.mxu0 0.0
    %2077 = vmatpush1.msra.mxu0 0.0
    %2078 = vmatprep.subr.mxu0 0.0
    %2079 = vmatpush1.msra.mxu0 0.0
    %2080 = vmatprep.subr.mxu0 0.0
    %2081 = vmatpush1.msra.mxu0 0.0
    %2082 = vmatprep.subr.mxu0 0.0
    %2083 = vmatpush1.msra.mxu0 0.0
    %2084 = vmatprep.subr.mxu0 0.0
    %2085 = vmatpush1.msra.mxu0 0.0
    %2086 = vmatprep.subr.mxu0 0.0
    %2087 = vmatpush1.msra.mxu0 0.0
    %2088 = vmatprep.subr.mxu0 0.0
    %2089 = vmatpush1.msra.mxu0 0.0
    %2090 = vmatprep.subr.mxu0 0.0
    %2091 = vmatpush1.msra.mxu0 0.0
    %2092 = vmatprep.subr.mxu0 0.0
    %2093 = vmatpush1.msra.mxu0 0.0
    %2094 = vmatprep.subr.mxu0 0.0
    %2095 = vmatpush1.msra.mxu0 0.0
    %2096 = vmatprep.subr.mxu0 0.0
    %2097 = vmatpush1.msra.mxu0 0.0
    %2098 = vmatprep.subr.mxu0 0.0
    %2099 = vmatpush1.msra.mxu0 0.0
    %2100 = vmatprep.subr.mxu0 0.0
    %2101 = vmatpush1.msra.mxu0 0.0
    %2102 = vmatprep.subr.mxu0 0.0
    %2103 = vmatpush1.msra.mxu0 0.0
    %2104 = vmatprep.subr.mxu0 0.0
    %2105 = vmatpush1.msra.mxu0 0.0
    %2106 = vmatprep.subr.mxu0 0.0
    %2107 = vmatpush1.msra.mxu0 0.0
    %2108 = vmatprep.subr.mxu0 0.0
    %2109 = vmatpush1.msra.mxu0 0.0
    %2110 = vmatprep.subr.mxu0 0.0
    %2111 = vmatpush1.msra.mxu0 0.0
    %2112 = vmatprep.subr.mxu0 0.0
    %2113 = vmatpush1.msra.mxu0 0.0
    %2114 = vmatprep.subr.mxu0 0.0
    %2115 = vmatpush1.msra.mxu0 0.0
    %2116 = vmatprep.subr.mxu0 0.0
    %2117 = vmatpush1.msra.mxu0 0.0
    %2118 = vmatprep.subr.mxu0 0.0
    %2119 = vmatpush1.msra.mxu0 0.0
    %2120 = vmatprep.subr.mxu0 0.0
    %2121 = vmatpush1.msra.mxu0 0.0
    %2122 = vmatprep.subr.mxu0 0.0
    %2123 = vmatpush1.msra.mxu0 0.0
    %2124 = vmatprep.subr.mxu0 0.0
    %2125 = vmatpush1.msra.mxu0 0.0
    %2126 = vmatprep.mubr.f32.mxu0 0.0
    %2127 = vmatmul.mubr.f32.gmra.mrb[0].mxu0 %v838
    %v2128 = vpop.f32.mrb[0].mxu0
    %v2129 = vadd.f32 0.0, %v2128
    %v2130 = vpop.f32.mrb[0].mxu0
    %2131 = vdwg.mxu0
    %2132 = vmatprep.subr.mxu0 0.0
    %2133 = vmatpush1.msra.mxu0 %v1921
    %2134 = vmatprep.subr.mxu0 0.0
    %2135 = vmatpush1.msra.mxu0 0.0
    %2136 = vmatprep.subr.mxu0 0.0
    %2137 = vmatpush1.msra.mxu0 0.0
    %2138 = vmatprep.subr.mxu0 0.0
    %2139 = vmatpush1.msra.mxu0 0.0
    %2140 = vmatprep.subr.mxu0 0.0
    %2141 = vmatpush1.msra.mxu0 0.0
    %2142 = vmatprep.subr.mxu0 0.0
    %2143 = vmatpush1.msra.mxu0 0.0
    %2144 = vmatprep.subr.mxu0 0.0
    %2145 = vmatpush1.msra.mxu0 0.0
    %2146 = vmatprep.subr.mxu0 0.0
    %2147 = vmatpush1.msra.mxu0 0.0
    %2148 = vmatprep.subr.mxu0 0.0
    %2149 = vmatpush1.msra.mxu0 0.0
    %2150 = vmatprep.subr.mxu0 0.0
    %2151 = vmatpush1.msra.mxu0 0.0
    %2152 = vmatprep.subr.mxu0 0.0
    %2153 = vmatpush1.msra.mxu0 0.0
    %2154 = vmatprep.subr.mxu0 0.0
    %2155 = vmatpush1.msra.mxu0 0.0
    %2156 = vmatprep.subr.mxu0 0.0
    %2157 = vmatpush1.msra.mxu0 0.0
    %2158 = vmatprep.subr.mxu0 0.0
    %2159 = vmatpush1.msra.mxu0 0.0
    %2160 = vmatprep.subr.mxu0 0.0
    %2161 = vmatpush1.msra.mxu0 0.0
    %2162 = vmatprep.subr.mxu0 0.0
    %2163 = vmatpush1.msra.mxu0 0.0
    %2164 = vmatprep.subr.mxu0 0.0
    %2165 = vmatpush1.msra.mxu0 0.0
    %2166 = vmatprep.subr.mxu0 0.0
    %2167 = vmatpush1.msra.mxu0 0.0
    %2168 = vmatprep.subr.mxu0 0.0
    %2169 = vmatpush1.msra.mxu0 0.0
    %2170 = vmatprep.subr.mxu0 0.0
    %2171 = vmatpush1.msra.mxu0 0.0
    %2172 = vmatprep.subr.mxu0 0.0
    %2173 = vmatpush1.msra.mxu0 0.0
    %2174 = vmatprep.subr.mxu0 0.0
    %2175 = vmatpush1.msra.mxu0 0.0
    %2176 = vmatprep.subr.mxu0 0.0
    %2177 = vmatpush1.msra.mxu0 0.0
    %2178 = vmatprep.subr.mxu0 0.0
    %2179 = vmatpush1.msra.mxu0 0.0
    %2180 = vmatprep.subr.mxu0 0.0
    %2181 = vmatpush1.msra.mxu0 0.0
    %2182 = vmatprep.subr.mxu0 0.0
    %2183 = vmatpush1.msra.mxu0 0.0
    %2184 = vmatprep.subr.mxu0 0.0
    %2185 = vmatpush1.msra.mxu0 0.0
    %2186 = vmatprep.subr.mxu0 0.0
    %2187 = vmatpush1.msra.mxu0 0.0
    %2188 = vmatprep.subr.mxu0 0.0
    %2189 = vmatpush1.msra.mxu0 0.0
    %2190 = vmatprep.subr.mxu0 0.0
    %2191 = vmatpush1.msra.mxu0 0.0
    %2192 = vmatprep.subr.mxu0 0.0
    %2193 = vmatpush1.msra.mxu0 0.0
    %2194 = vmatprep.subr.mxu0 0.0
    %2195 = vmatpush1.msra.mxu0 0.0
    %2196 = vmatprep.mubr.f32.mxu0 0.0
    %2197 = vmatmul.mubr.f32.gmra.mrb[0].mxu0 %v911
    %v2198 = vpop.f32.mrb[0].mxu0
    %v2199 = vadd.f32 0.0, %v2198
    %v2200 = vpop.f32.mrb[0].mxu0
    %2201 = vdwg.mxu0
    %s2202 = scalar_lea.vmem %s14, 512
    %v2203 = vld [vmem:[%s2202] sm:$0xff]
    %v2204 = vld [vmem:[%s2202 + $0x8] sm:$0xff]
    %v2205 = vld [vmem:[%s2202 + $0x10] sm:$0xff]
    %v2206 = vld [vmem:[%s2202 + $0x18] sm:$0xff]
    %v2207 = vld [vmem:[%s2202 + $0x20] sm:$0xff]
    %v2208 = vld [vmem:[%s2202 + $0x28] sm:$0xff]
    %v2209 = vld [vmem:[%s2202 + $0x30] sm:$0xff]
    %v2210 = vld [vmem:[%s2202 + $0x38] sm:$0xff]
    %v2211 = vld [vmem:[%s2202 + $0x40] sm:$0xff]
    %v2212 = vld [vmem:[%s2202 + $0x48] sm:$0xff]
    %v2213 = vld [vmem:[%s2202 + $0x50] sm:$0xff]
    %v2214 = vld [vmem:[%s2202 + $0x58] sm:$0xff]
    %v2215 = vld [vmem:[%s2202 + $0x60] sm:$0xff]
    %v2216 = vld [vmem:[%s2202 + $0x68] sm:$0xff]
    %v2217 = vld [vmem:[%s2202 + $0x70] sm:$0xff]
    %v2218 = vld [vmem:[%s2202 + $0x78] sm:$0xff]
    %s2219 = scalar_lea.vmem %s15, 256
    %v2220 = vld [vmem:[%s2219] sm:$0xff]
    %v2221 = vld [vmem:[%s2219 + $0x8] sm:$0xff]
    %v2222 = vld [vmem:[%s2219 + $0x10] sm:$0xff]
    %v2223 = vld [vmem:[%s2219 + $0x18] sm:$0xff]
    %v2224 = vld [vmem:[%s2219 + $0x20] sm:$0xff]
    %v2225 = vld [vmem:[%s2219 + $0x28] sm:$0xff]
    %v2226 = vld [vmem:[%s2219 + $0x30] sm:$0xff]
    %v2227 = vld [vmem:[%s2219 + $0x38] sm:$0xff]
    %v2228 = vld [vmem:[%s2219 + $0x40] sm:$0xff]
    %v2229 = vld [vmem:[%s2219 + $0x48] sm:$0xff]
    %v2230 = vld [vmem:[%s2219 + $0x50] sm:$0xff]
    %v2231 = vld [vmem:[%s2219 + $0x58] sm:$0xff]
    %v2232 = vld [vmem:[%s2219 + $0x60] sm:$0xff]
    %v2233 = vld [vmem:[%s2219 + $0x68] sm:$0xff]
    %v2234 = vld [vmem:[%s2219 + $0x70] sm:$0xff]
    %v2235 = vld [vmem:[%s2219 + $0x78] sm:$0xff]
    %2236 = vmatprep.subr.mxu0 0.0
    %2237 = vmatpush1.msra.mxu0 %v2220
    %2238 = vmatprep.subr.mxu0 0.0
    %2239 = vmatpush1.msra.mxu0 %v2221
    %2240 = vmatprep.subr.mxu0 0.0
    %2241 = vmatpush1.msra.mxu0 %v2222
    %2242 = vmatprep.subr.mxu0 0.0
    %2243 = vmatpush1.msra.mxu0 %v2223
    %2244 = vmatprep.subr.mxu0 0.0
    %2245 = vmatpush1.msra.mxu0 %v2224
    %2246 = vmatprep.subr.mxu0 0.0
    %2247 = vmatpush1.msra.mxu0 %v2225
    %2248 = vmatprep.subr.mxu0 0.0
    %2249 = vmatpush1.msra.mxu0 %v2226
    %2250 = vmatprep.subr.mxu0 0.0
    %2251 = vmatpush1.msra.mxu0 %v2227
    %2252 = vmatprep.subr.mxu0 0.0
    %2253 = vmatpush1.msra.mxu0 %v2228
    %2254 = vmatprep.subr.mxu0 0.0
    %2255 = vmatpush1.msra.mxu0 %v2229
    %2256 = vmatprep.subr.mxu0 0.0
    %2257 = vmatpush1.msra.mxu0 %v2230
    %2258 = vmatprep.subr.mxu0 0.0
    %2259 = vmatpush1.msra.mxu0 %v2231
    %2260 = vmatprep.subr.mxu0 0.0
    %2261 = vmatpush1.msra.mxu0 %v2232
    %2262 = vmatprep.subr.mxu0 0.0
    %2263 = vmatpush1.msra.mxu0 %v2233
    %2264 = vmatprep.subr.mxu0 0.0
    %2265 = vmatpush1.msra.mxu0 %v2234
    %2266 = vmatprep.subr.mxu0 0.0
    %2267 = vmatpush1.msra.mxu0 %v2235
    %2268 = vmatprep.subr.mxu0 0.0
    %2269 = vmatpush1.msra.mxu0 0.0
    %2270 = vmatprep.subr.mxu0 0.0
    %2271 = vmatpush1.msra.mxu0 0.0
    %2272 = vmatprep.subr.mxu0 0.0
    %2273 = vmatpush1.msra.mxu0 0.0
    %2274 = vmatprep.subr.mxu0 0.0
    %2275 = vmatpush1.msra.mxu0 0.0
    %2276 = vmatprep.subr.mxu0 0.0
    %2277 = vmatpush1.msra.mxu0 0.0
    %2278 = vmatprep.subr.mxu0 0.0
    %2279 = vmatpush1.msra.mxu0 0.0
    %2280 = vmatprep.subr.mxu0 0.0
    %2281 = vmatpush1.msra.mxu0 0.0
    %2282 = vmatprep.subr.mxu0 0.0
    %2283 = vmatpush1.msra.mxu0 0.0
    %2284 = vmatprep.subr.mxu0 0.0
    %2285 = vmatpush1.msra.mxu0 0.0
    %2286 = vmatprep.subr.mxu0 0.0
    %2287 = vmatpush1.msra.mxu0 0.0
    %2288 = vmatprep.subr.mxu0 0.0
    %2289 = vmatpush1.msra.mxu0 0.0
    %2290 = vmatprep.subr.mxu0 0.0
    %2291 = vmatpush1.msra.mxu0 0.0
    %2292 = vmatprep.subr.mxu0 0.0
    %2293 = vmatpush1.msra.mxu0 0.0
    %2294 = vmatprep.subr.mxu0 0.0
    %2295 = vmatpush1.msra.mxu0 0.0
    %2296 = vmatprep.subr.mxu0 0.0
    %2297 = vmatpush1.msra.mxu0 0.0
    %2298 = vmatprep.subr.mxu0 0.0
    %2299 = vmatpush1.msra.mxu0 0.0
    %2300 = vmatprep.mubr.f32.mxu0 0.0
    %2301 = vmatmul.mubr.f32.gmra.mrb[0].mxu0 %v506
    %v2302 = vpop.f32.mrb[0].mxu0
    %v2303 = vadd.f32 0.0, %v2302
    %v2304 = vpop.f32.mrb[0].mxu0
    %2305 = vdwg.mxu0
    %2306 = vmatprep.subr.mxu0 0.0
    %2307 = vmatpush1.msra.mxu0 %v2203
    %2308 = vmatprep.subr.mxu0 0.0
    %2309 = vmatpush1.msra.mxu0 %v2204
    %2310 = vmatprep.subr.mxu0 0.0
    %2311 = vmatpush1.msra.mxu0 %v2205
    %2312 = vmatprep.subr.mxu0 0.0
    %2313 = vmatpush1.msra.mxu0 %v2206
    %2314 = vmatprep.subr.mxu0 0.0
    %2315 = vmatpush1.msra.mxu0 %v2207
    %2316 = vmatprep.subr.mxu0 0.0
    %2317 = vmatpush1.msra.mxu0 %v2208
    %2318 = vmatprep.subr.mxu0 0.0
    %2319 = vmatpush1.msra.mxu0 %v2209
    %2320 = vmatprep.subr.mxu0 0.0
    %2321 = vmatpush1.msra.mxu0 %v2210
    %2322 = vmatprep.subr.mxu0 0.0
    %2323 = vmatpush1.msra.mxu0 %v2211
    %2324 = vmatprep.subr.mxu0 0.0
    %2325 = vmatpush1.msra.mxu0 %v2212
    %2326 = vmatprep.subr.mxu0 0.0
    %2327 = vmatpush1.msra.mxu0 %v2213
    %2328 = vmatprep.subr.mxu0 0.0
    %2329 = vmatpush1.msra.mxu0 %v2214
    %2330 = vmatprep.subr.mxu0 0.0
    %2331 = vmatpush1.msra.mxu0 %v2215
    %2332 = vmatprep.subr.mxu0 0.0
    %2333 = vmatpush1.msra.mxu0 %v2216
    %2334 = vmatprep.subr.mxu0 0.0
    %2335 = vmatpush1.msra.mxu0 %v2217
    %2336 = vmatprep.subr.mxu0 0.0
    %2337 = vmatpush1.msra.mxu0 %v2218
    %2338 = vmatprep.subr.mxu0 0.0
    %2339 = vmatpush1.msra.mxu0 0.0
    %2340 = vmatprep.subr.mxu0 0.0
    %2341 = vmatpush1.msra.mxu0 0.0
    %2342 = vmatprep.subr.mxu0 0.0
    %2343 = vmatpush1.msra.mxu0 0.0
    %2344 = vmatprep.subr.mxu0 0.0
    %2345 = vmatpush1.msra.mxu0 0.0
    %2346 = vmatprep.subr.mxu0 0.0
    %2347 = vmatpush1.msra.mxu0 0.0
    %2348 = vmatprep.subr.mxu0 0.0
    %2349 = vmatpush1.msra.mxu0 0.0
    %2350 = vmatprep.subr.mxu0 0.0
    %2351 = vmatpush1.msra.mxu0 0.0
    %2352 = vmatprep.subr.mxu0 0.0
    %2353 = vmatpush1.msra.mxu0 0.0
    %2354 = vmatprep.subr.mxu0 0.0
    %2355 = vmatpush1.msra.mxu0 0.0
    %2356 = vmatprep.subr.mxu0 0.0
    %2357 = vmatpush1.msra.mxu0 0.0
    %2358 = vmatprep.subr.mxu0 0.0
    %2359 = vmatpush1.msra.mxu0 0.0
    %2360 = vmatprep.subr.mxu0 0.0
    %2361 = vmatpush1.msra.mxu0 0.0
    %2362 = vmatprep.subr.mxu0 0.0
    %2363 = vmatpush1.msra.mxu0 0.0
    %2364 = vmatprep.subr.mxu0 0.0
    %2365 = vmatpush1.msra.mxu0 0.0
    %2366 = vmatprep.subr.mxu0 0.0
    %2367 = vmatpush1.msra.mxu0 0.0
    %2368 = vmatprep.subr.mxu0 0.0
    %2369 = vmatpush1.msra.mxu0 0.0
    %2370 = vmatprep.mubr.f32.mxu0 0.0
    %2371 = vmatmul.mubr.f32.gmra.mrb[0].mxu0 %v1989
    %v2372 = vpop.f32.mrb[0].mxu0
    %v2373 = vadd.f32 %v2303, %v2372
    %v2374 = vpop.f32.mrb[0].mxu0
    %2375 = vdwg.mxu0
    %s2376 = scalar_lea.vmem %s16, 4
    %v2377 = vld [vmem:[%s2376] sm:$0x1]
    %v2379 = vlaneseq
    %v2380 = vshrl.u32 %v2379, 7
    %v2381 = vsub.s32 0, %v2380
    %v2382 = vrot.slane %v2377, %v2381
    %v2384 = vadd.f32 %v2373, %v2382
    %v2385 = vmax.f32 %v2384, 0.0
    %s2386 = scalar_lea.vmem %s17, 512
    %v2387 = vld [vmem:[%s2386] sm:$0xff]
    %v2388 = vld [vmem:[%s2386 + $0x8] sm:$0xff]
    %v2389 = vld [vmem:[%s2386 + $0x10] sm:$0xff]
    %v2390 = vld [vmem:[%s2386 + $0x18] sm:$0xff]
    %v2391 = vld [vmem:[%s2386 + $0x20] sm:$0xff]
    %v2392 = vld [vmem:[%s2386 + $0x28] sm:$0xff]
    %v2393 = vld [vmem:[%s2386 + $0x30] sm:$0xff]
    %v2394 = vld [vmem:[%s2386 + $0x38] sm:$0xff]
    %v2395 = vld [vmem:[%s2386 + $0x40] sm:$0xff]
    %v2396 = vld [vmem:[%s2386 + $0x48] sm:$0xff]
    %v2397 = vld [vmem:[%s2386 + $0x50] sm:$0xff]
    %v2398 = vld [vmem:[%s2386 + $0x58] sm:$0xff]
    %v2399 = vld [vmem:[%s2386 + $0x60] sm:$0xff]
    %v2400 = vld [vmem:[%s2386 + $0x68] sm:$0xff]
    %v2401 = vld [vmem:[%s2386 + $0x70] sm:$0xff]
    %v2402 = vld [vmem:[%s2386 + $0x78] sm:$0xff]
    %s2403 = scalar_lea.vmem %s18, 4
    %v2404 = vld [vmem:[%s2403] sm:$0x1]
    %v2406 = vlaneseq
    %v2407 = vshrl.u32 %v2406, 7
    %v2408 = vsub.s32 0, %v2407
    %v2409 = vrot.slane %v2404, %v2408
    %2411 = vmatprep.subr.mxu0 0.0
    %2412 = vmatpush1.msra.mxu0 %v2387
    %2413 = vmatprep.subr.mxu0 0.0
    %2414 = vmatpush1.msra.mxu0 %v2388
    %2415 = vmatprep.subr.mxu0 0.0
    %2416 = vmatpush1.msra.mxu0 %v2389
    %2417 = vmatprep.subr.mxu0 0.0
    %2418 = vmatpush1.msra.mxu0 %v2390
    %2419 = vmatprep.subr.mxu0 0.0
    %2420 = vmatpush1.msra.mxu0 %v2391
    %2421 = vmatprep.subr.mxu0 0.0
    %2422 = vmatpush1.msra.mxu0 %v2392
    %2423 = vmatprep.subr.mxu0 0.0
    %2424 = vmatpush1.msra.mxu0 %v2393
    %2425 = vmatprep.subr.mxu0 0.0
    %2426 = vmatpush1.msra.mxu0 %v2394
    %2427 = vmatprep.subr.mxu0 0.0
    %2428 = vmatpush1.msra.mxu0 %v2395
    %2429 = vmatprep.subr.mxu0 0.0
    %2430 = vmatpush1.msra.mxu0 %v2396
    %2431 = vmatprep.subr.mxu0 0.0
    %2432 = vmatpush1.msra.mxu0 %v2397
    %2433 = vmatprep.subr.mxu0 0.0
    %2434 = vmatpush1.msra.mxu0 %v2398
    %2435 = vmatprep.subr.mxu0 0.0
    %2436 = vmatpush1.msra.mxu0 %v2399
    %2437 = vmatprep.subr.mxu0 0.0
    %2438 = vmatpush1.msra.mxu0 %v2400
    %2439 = vmatprep.subr.mxu0 0.0
    %2440 = vmatpush1.msra.mxu0 %v2401
    %2441 = vmatprep.subr.mxu0 0.0
    %2442 = vmatpush1.msra.mxu0 %v2402
    %2443 = vmatprep.subr.mxu0 0.0
    %2444 = vmatpush1.msra.mxu0 0.0
    %2445 = vmatprep.subr.mxu0 0.0
    %2446 = vmatpush1.msra.mxu0 0.0
    %2447 = vmatprep.subr.mxu0 0.0
    %2448 = vmatpush1.msra.mxu0 0.0
    %2449 = vmatprep.subr.mxu0 0.0
    %2450 = vmatpush1.msra.mxu0 0.0
    %2451 = vmatprep.subr.mxu0 0.0
    %2452 = vmatpush1.msra.mxu0 0.0
    %2453 = vmatprep.subr.mxu0 0.0
    %2454 = vmatpush1.msra.mxu0 0.0
    %2455 = vmatprep.subr.mxu0 0.0
    %2456 = vmatpush1.msra.mxu0 0.0
    %2457 = vmatprep.subr.mxu0 0.0
    %2458 = vmatpush1.msra.mxu0 0.0
    %2459 = vmatprep.subr.mxu0 0.0
    %2460 = vmatpush1.msra.mxu0 0.0
    %2461 = vmatprep.subr.mxu0 0.0
    %2462 = vmatpush1.msra.mxu0 0.0
    %2463 = vmatprep.subr.mxu0 0.0
    %2464 = vmatpush1.msra.mxu0 0.0
    %2465 = vmatprep.subr.mxu0 0.0
    %2466 = vmatpush1.msra.mxu0 0.0
    %2467 = vmatprep.subr.mxu0 0.0
    %2468 = vmatpush1.msra.mxu0 0.0
    %2469 = vmatprep.subr.mxu0 0.0
    %2470 = vmatpush1.msra.mxu0 0.0
    %2471 = vmatprep.subr.mxu0 0.0
    %2472 = vmatpush1.msra.mxu0 0.0
    %2473 = vmatprep.subr.mxu0 0.0
    %2474 = vmatpush1.msra.mxu0 0.0
    %2475 = vmatprep.mubr.f32.mxu0 0.0
    %2476 = vmatmul.mubr.f32.gmra.mrb[0].mxu0 %v2385
    %v2477 = vpop.f32.mrb[0].mxu0
    %v2478 = vadd.f32 %v2409, %v2477
    %v2479 = vpop.f32.mrb[0].mxu0
    %2480 = vdwg.mxu0
    %s2481 = scalar_lea.vmem %s14, 640
    %v2482 = vld [vmem:[%s2481] sm:$0xff]
    %v2483 = vld [vmem:[%s2481 + $0x8] sm:$0xff]
    %v2484 = vld [vmem:[%s2481 + $0x10] sm:$0xff]
    %v2485 = vld [vmem:[%s2481 + $0x18] sm:$0xff]
    %v2486 = vld [vmem:[%s2481 + $0x20] sm:$0xff]
    %v2487 = vld [vmem:[%s2481 + $0x28] sm:$0xff]
    %v2488 = vld [vmem:[%s2481 + $0x30] sm:$0xff]
    %v2489 = vld [vmem:[%s2481 + $0x38] sm:$0xff]
    %v2490 = vld [vmem:[%s2481 + $0x40] sm:$0xff]
    %v2491 = vld [vmem:[%s2481 + $0x48] sm:$0xff]
    %v2492 = vld [vmem:[%s2481 + $0x50] sm:$0xff]
    %v2493 = vld [vmem:[%s2481 + $0x58] sm:$0xff]
    %v2494 = vld [vmem:[%s2481 + $0x60] sm:$0xff]
    %v2495 = vld [vmem:[%s2481 + $0x68] sm:$0xff]
    %v2496 = vld [vmem:[%s2481 + $0x70] sm:$0xff]
    %v2497 = vld [vmem:[%s2481 + $0x78] sm:$0xff]
    %s2498 = scalar_lea.vmem %s16, 5
    %v2499 = vld [vmem:[%s2498] sm:$0x1]
    %v2501 = vlaneseq
    %v2502 = vshrl.u32 %v2501, 7
    %v2503 = vsub.s32 0, %v2502
    %v2504 = vrot.slane %v2499, %v2503
    %2506 = vmatprep.subr.mxu0 0.0
    %2507 = vmatpush1.msra.mxu0 %v2482
    %2508 = vmatprep.subr.mxu0 0.0
    %2509 = vmatpush1.msra.mxu0 %v2483
    %2510 = vmatprep.subr.mxu0 0.0
    %2511 = vmatpush1.msra.mxu0 %v2484
    %2512 = vmatprep.subr.mxu0 0.0
    %2513 = vmatpush1.msra.mxu0 %v2485
    %2514 = vmatprep.subr.mxu0 0.0
    %2515 = vmatpush1.msra.mxu0 %v2486
    %2516 = vmatprep.subr.mxu0 0.0
    %2517 = vmatpush1.msra.mxu0 %v2487
    %2518 = vmatprep.subr.mxu0 0.0
    %2519 = vmatpush1.msra.mxu0 %v2488
    %2520 = vmatprep.subr.mxu0 0.0
    %2521 = vmatpush1.msra.mxu0 %v2489
    %2522 = vmatprep.subr.mxu0 0.0
    %2523 = vmatpush1.msra.mxu0 %v2490
    %2524 = vmatprep.subr.mxu0 0.0
    %2525 = vmatpush1.msra.mxu0 %v2491
    %2526 = vmatprep.subr.mxu0 0.0
    %2527 = vmatpush1.msra.mxu0 %v2492
    %2528 = vmatprep.subr.mxu0 0.0
    %2529 = vmatpush1.msra.mxu0 %v2493
    %2530 = vmatprep.subr.mxu0 0.0
    %2531 = vmatpush1.msra.mxu0 %v2494
    %2532 = vmatprep.subr.mxu0 0.0
    %2533 = vmatpush1.msra.mxu0 %v2495
    %2534 = vmatprep.subr.mxu0 0.0
    %2535 = vmatpush1.msra.mxu0 %v2496
    %2536 = vmatprep.subr.mxu0 0.0
    %2537 = vmatpush1.msra.mxu0 %v2497
    %2538 = vmatprep.subr.mxu0 0.0
    %2539 = vmatpush1.msra.mxu0 0.0
    %2540 = vmatprep.subr.mxu0 0.0
    %2541 = vmatpush1.msra.mxu0 0.0
    %2542 = vmatprep.subr.mxu0 0.0
    %2543 = vmatpush1.msra.mxu0 0.0
    %2544 = vmatprep.subr.mxu0 0.0
    %2545 = vmatpush1.msra.mxu0 0.0
    %2546 = vmatprep.subr.mxu0 0.0
    %2547 = vmatpush1.msra.mxu0 0.0
    %2548 = vmatprep.subr.mxu0 0.0
    %2549 = vmatpush1.msra.mxu0 0.0
    %2550 = vmatprep.subr.mxu0 0.0
    %2551 = vmatpush1.msra.mxu0 0.0
    %2552 = vmatprep.subr.mxu0 0.0
    %2553 = vmatpush1.msra.mxu0 0.0
    %2554 = vmatprep.subr.mxu0 0.0
    %2555 = vmatpush1.msra.mxu0 0.0
    %2556 = vmatprep.subr.mxu0 0.0
    %2557 = vmatpush1.msra.mxu0 0.0
    %2558 = vmatprep.subr.mxu0 0.0
    %2559 = vmatpush1.msra.mxu0 0.0
    %2560 = vmatprep.subr.mxu0 0.0
    %2561 = vmatpush1.msra.mxu0 0.0
    %2562 = vmatprep.subr.mxu0 0.0
    %2563 = vmatpush1.msra.mxu0 0.0
    %2564 = vmatprep.subr.mxu0 0.0
    %2565 = vmatpush1.msra.mxu0 0.0
    %2566 = vmatprep.subr.mxu0 0.0
    %2567 = vmatpush1.msra.mxu0 0.0
    %2568 = vmatprep.subr.mxu0 0.0
    %2569 = vmatpush1.msra.mxu0 0.0
    %2570 = vmatprep.mubr.f32.mxu0 0.0
    %2571 = vmatmul.mubr.f32.gmra.mrb[0].mxu0 %v2059
    %v2572 = vpop.f32.mrb[0].mxu0
    %v2573 = vadd.f32 %v2504, %v2572
    %v2574 = vpop.f32.mrb[0].mxu0
    %2575 = vdwg.mxu0
    %v2576 = vmax.f32 %v2573, 0.0
    %s2577 = scalar_lea.vmem %s17, 640
    %v2578 = vld [vmem:[%s2577] sm:$0xff]
    %v2579 = vld [vmem:[%s2577 + $0x8] sm:$0xff]
    %v2580 = vld [vmem:[%s2577 + $0x10] sm:$0xff]
    %v2581 = vld [vmem:[%s2577 + $0x18] sm:$0xff]
    %v2582 = vld [vmem:[%s2577 + $0x20] sm:$0xff]
    %v2583 = vld [vmem:[%s2577 + $0x28] sm:$0xff]
    %v2584 = vld [vmem:[%s2577 + $0x30] sm:$0xff]
    %v2585 = vld [vmem:[%s2577 + $0x38] sm:$0xff]
    %v2586 = vld [vmem:[%s2577 + $0x40] sm:$0xff]
    %v2587 = vld [vmem:[%s2577 + $0x48] sm:$0xff]
    %v2588 = vld [vmem:[%s2577 + $0x50] sm:$0xff]
    %v2589 = vld [vmem:[%s2577 + $0x58] sm:$0xff]
    %v2590 = vld [vmem:[%s2577 + $0x60] sm:$0xff]
    %v2591 = vld [vmem:[%s2577 + $0x68] sm:$0xff]
    %v2592 = vld [vmem:[%s2577 + $0x70] sm:$0xff]
    %v2593 = vld [vmem:[%s2577 + $0x78] sm:$0xff]
    %s2594 = scalar_lea.vmem %s18, 5
    %v2595 = vld [vmem:[%s2594] sm:$0x1]
    %v2597 = vlaneseq
    %v2598 = vshrl.u32 %v2597, 7
    %v2599 = vsub.s32 0, %v2598
    %v2600 = vrot.slane %v2595, %v2599
    %2602 = vmatprep.subr.mxu0 0.0
    %2603 = vmatpush1.msra.mxu0 %v2578
    %2604 = vmatprep.subr.mxu0 0.0
    %2605 = vmatpush1.msra.mxu0 %v2579
    %2606 = vmatprep.subr.mxu0 0.0
    %2607 = vmatpush1.msra.mxu0 %v2580
    %2608 = vmatprep.subr.mxu0 0.0
    %2609 = vmatpush1.msra.mxu0 %v2581
    %2610 = vmatprep.subr.mxu0 0.0
    %2611 = vmatpush1.msra.mxu0 %v2582
    %2612 = vmatprep.subr.mxu0 0.0
    %2613 = vmatpush1.msra.mxu0 %v2583
    %2614 = vmatprep.subr.mxu0 0.0
    %2615 = vmatpush1.msra.mxu0 %v2584
    %2616 = vmatprep.subr.mxu0 0.0
    %2617 = vmatpush1.msra.mxu0 %v2585
    %2618 = vmatprep.subr.mxu0 0.0
    %2619 = vmatpush1.msra.mxu0 %v2586
    %2620 = vmatprep.subr.mxu0 0.0
    %2621 = vmatpush1.msra.mxu0 %v2587
    %2622 = vmatprep.subr.mxu0 0.0
    %2623 = vmatpush1.msra.mxu0 %v2588
    %2624 = vmatprep.subr.mxu0 0.0
    %2625 = vmatpush1.msra.mxu0 %v2589
    %2626 = vmatprep.subr.mxu0 0.0
    %2627 = vmatpush1.msra.mxu0 %v2590
    %2628 = vmatprep.subr.mxu0 0.0
    %2629 = vmatpush1.msra.mxu0 %v2591
    %2630 = vmatprep.subr.mxu0 0.0
    %2631 = vmatpush1.msra.mxu0 %v2592
    %2632 = vmatprep.subr.mxu0 0.0
    %2633 = vmatpush1.msra.mxu0 %v2593
    %2634 = vmatprep.subr.mxu0 0.0
    %2635 = vmatpush1.msra.mxu0 0.0
    %2636 = vmatprep.subr.mxu0 0.0
    %2637 = vmatpush1.msra.mxu0 0.0
    %2638 = vmatprep.subr.mxu0 0.0
    %2639 = vmatpush1.msra.mxu0 0.0
    %2640 = vmatprep.subr.mxu0 0.0
    %2641 = vmatpush1.msra.mxu0 0.0
    %2642 = vmatprep.subr.mxu0 0.0
    %2643 = vmatpush1.msra.mxu0 0.0
    %2644 = vmatprep.subr.mxu0 0.0
    %2645 = vmatpush1.msra.mxu0 0.0
    %2646 = vmatprep.subr.mxu0 0.0
    %2647 = vmatpush1.msra.mxu0 0.0
    %2648 = vmatprep.subr.mxu0 0.0
    %2649 = vmatpush1.msra.mxu0 0.0
    %2650 = vmatprep.subr.mxu0 0.0
    %2651 = vmatpush1.msra.mxu0 0.0
    %2652 = vmatprep.subr.mxu0 0.0
    %2653 = vmatpush1.msra.mxu0 0.0
    %2654 = vmatprep.subr.mxu0 0.0
    %2655 = vmatpush1.msra.mxu0 0.0
    %2656 = vmatprep.subr.mxu0 0.0
    %2657 = vmatpush1.msra.mxu0 0.0
    %2658 = vmatprep.subr.mxu0 0.0
    %2659 = vmatpush1.msra.mxu0 0.0
    %2660 = vmatprep.subr.mxu0 0.0
    %2661 = vmatpush1.msra.mxu0 0.0
    %2662 = vmatprep.subr.mxu0 0.0
    %2663 = vmatpush1.msra.mxu0 0.0
    %2664 = vmatprep.subr.mxu0 0.0
    %2665 = vmatpush1.msra.mxu0 0.0
    %2666 = vmatprep.mubr.f32.mxu0 0.0
    %2667 = vmatmul.mubr.f32.gmra.mrb[0].mxu0 %v2576
    %v2668 = vpop.f32.mrb[0].mxu0
    %v2669 = vadd.f32 %v2600, %v2668
    %v2670 = vpop.f32.mrb[0].mxu0
    %2671 = vdwg.mxu0
    %s2672 = scalar_lea.vmem %s14, 768
    %v2673 = vld [vmem:[%s2672] sm:$0xff]
    %v2674 = vld [vmem:[%s2672 + $0x8] sm:$0xff]
    %v2675 = vld [vmem:[%s2672 + $0x10] sm:$0xff]
    %v2676 = vld [vmem:[%s2672 + $0x18] sm:$0xff]
    %v2677 = vld [vmem:[%s2672 + $0x20] sm:$0xff]
    %v2678 = vld [vmem:[%s2672 + $0x28] sm:$0xff]
    %v2679 = vld [vmem:[%s2672 + $0x30] sm:$0xff]
    %v2680 = vld [vmem:[%s2672 + $0x38] sm:$0xff]
    %v2681 = vld [vmem:[%s2672 + $0x40] sm:$0xff]
    %v2682 = vld [vmem:[%s2672 + $0x48] sm:$0xff]
    %v2683 = vld [vmem:[%s2672 + $0x50] sm:$0xff]
    %v2684 = vld [vmem:[%s2672 + $0x58] sm:$0xff]
    %v2685 = vld [vmem:[%s2672 + $0x60] sm:$0xff]
    %v2686 = vld [vmem:[%s2672 + $0x68] sm:$0xff]
    %v2687 = vld [vmem:[%s2672 + $0x70] sm:$0xff]
    %v2688 = vld [vmem:[%s2672 + $0x78] sm:$0xff]
    %s2689 = scalar_lea.vmem %s15, 384
    %v2690 = vld [vmem:[%s2689] sm:$0xff]
    %v2691 = vld [vmem:[%s2689 + $0x8] sm:$0xff]
    %v2692 = vld [vmem:[%s2689 + $0x10] sm:$0xff]
    %v2693 = vld [vmem:[%s2689 + $0x18] sm:$0xff]
    %v2694 = vld [vmem:[%s2689 + $0x20] sm:$0xff]
    %v2695 = vld [vmem:[%s2689 + $0x28] sm:$0xff]
    %v2696 = vld [vmem:[%s2689 + $0x30] sm:$0xff]
    %v2697 = vld [vmem:[%s2689 + $0x38] sm:$0xff]
    %v2698 = vld [vmem:[%s2689 + $0x40] sm:$0xff]
    %v2699 = vld [vmem:[%s2689 + $0x48] sm:$0xff]
    %v2700 = vld [vmem:[%s2689 + $0x50] sm:$0xff]
    %v2701 = vld [vmem:[%s2689 + $0x58] sm:$0xff]
    %v2702 = vld [vmem:[%s2689 + $0x60] sm:$0xff]
    %v2703 = vld [vmem:[%s2689 + $0x68] sm:$0xff]
    %v2704 = vld [vmem:[%s2689 + $0x70] sm:$0xff]
    %v2705 = vld [vmem:[%s2689 + $0x78] sm:$0xff]
    %2706 = vmatprep.subr.mxu0 0.0
    %2707 = vmatpush1.msra.mxu0 %v2690
    %2708 = vmatprep.subr.mxu0 0.0
    %2709 = vmatpush1.msra.mxu0 %v2691
    %2710 = vmatprep.subr.mxu0 0.0
    %2711 = vmatpush1.msra.mxu0 %v2692
    %2712 = vmatprep.subr.mxu0 0.0
    %2713 = vmatpush1.msra.mxu0 %v2693
    %2714 = vmatprep.subr.mxu0 0.0
    %2715 = vmatpush1.msra.mxu0 %v2694
    %2716 = vmatprep.subr.mxu0 0.0
    %2717 = vmatpush1.msra.mxu0 %v2695
    %2718 = vmatprep.subr.mxu0 0.0
    %2719 = vmatpush1.msra.mxu0 %v2696
    %2720 = vmatprep.subr.mxu0 0.0
    %2721 = vmatpush1.msra.mxu0 %v2697
    %2722 = vmatprep.subr.mxu0 0.0
    %2723 = vmatpush1.msra.mxu0 %v2698
    %2724 = vmatprep.subr.mxu0 0.0
    %2725 = vmatpush1.msra.mxu0 %v2699
    %2726 = vmatprep.subr.mxu0 0.0
    %2727 = vmatpush1.msra.mxu0 %v2700
    %2728 = vmatprep.subr.mxu0 0.0
    %2729 = vmatpush1.msra.mxu0 %v2701
    %2730 = vmatprep.subr.mxu0 0.0
    %2731 = vmatpush1.msra.mxu0 %v2702
    %2732 = vmatprep.subr.mxu0 0.0
    %2733 = vmatpush1.msra.mxu0 %v2703
    %2734 = vmatprep.subr.mxu0 0.0
    %2735 = vmatpush1.msra.mxu0 %v2704
    %2736 = vmatprep.subr.mxu0 0.0
    %2737 = vmatpush1.msra.mxu0 %v2705
    %2738 = vmatprep.subr.mxu0 0.0
    %2739 = vmatpush1.msra.mxu0 0.0
    %2740 = vmatprep.subr.mxu0 0.0
    %2741 = vmatpush1.msra.mxu0 0.0
    %2742 = vmatprep.subr.mxu0 0.0
    %2743 = vmatpush1.msra.mxu0 0.0
    %2744 = vmatprep.subr.mxu0 0.0
    %2745 = vmatpush1.msra.mxu0 0.0
    %2746 = vmatprep.subr.mxu0 0.0
    %2747 = vmatpush1.msra.mxu0 0.0
    %2748 = vmatprep.subr.mxu0 0.0
    %2749 = vmatpush1.msra.mxu0 0.0
    %2750 = vmatprep.subr.mxu0 0.0
    %2751 = vmatpush1.msra.mxu0 0.0
    %2752 = vmatprep.subr.mxu0 0.0
    %2753 = vmatpush1.msra.mxu0 0.0
    %2754 = vmatprep.subr.mxu0 0.0
    %2755 = vmatpush1.msra.mxu0 0.0
    %2756 = vmatprep.subr.mxu0 0.0
    %2757 = vmatpush1.msra.mxu0 0.0
    %2758 = vmatprep.subr.mxu0 0.0
    %2759 = vmatpush1.msra.mxu0 0.0
    %2760 = vmatprep.subr.mxu0 0.0
    %2761 = vmatpush1.msra.mxu0 0.0
    %2762 = vmatprep.subr.mxu0 0.0
    %2763 = vmatpush1.msra.mxu0 0.0
    %2764 = vmatprep.subr.mxu0 0.0
    %2765 = vmatpush1.msra.mxu0 0.0
    %2766 = vmatprep.subr.mxu0 0.0
    %2767 = vmatpush1.msra.mxu0 0.0
    %2768 = vmatprep.subr.mxu0 0.0
    %2769 = vmatpush1.msra.mxu0 0.0
    %2770 = vmatprep.mubr.f32.mxu0 0.0
    %2771 = vmatmul.mubr.f32.gmra.mrb[0].mxu0 %v592
    %v2772 = vpop.f32.mrb[0].mxu0
    %v2773 = vadd.f32 0.0, %v2772
    %v2774 = vpop.f32.mrb[0].mxu0
    %2775 = vdwg.mxu0
    %2776 = vmatprep.subr.mxu0 0.0
    %2777 = vmatpush1.msra.mxu0 %v2673
    %2778 = vmatprep.subr.mxu0 0.0
    %2779 = vmatpush1.msra.mxu0 %v2674
    %2780 = vmatprep.subr.mxu0 0.0
    %2781 = vmatpush1.msra.mxu0 %v2675
    %2782 = vmatprep.subr.mxu0 0.0
    %2783 = vmatpush1.msra.mxu0 %v2676
    %2784 = vmatprep.subr.mxu0 0.0
    %2785 = vmatpush1.msra.mxu0 %v2677
    %2786 = vmatprep.subr.mxu0 0.0
    %2787 = vmatpush1.msra.mxu0 %v2678
    %2788 = vmatprep.subr.mxu0 0.0
    %2789 = vmatpush1.msra.mxu0 %v2679
    %2790 = vmatprep.subr.mxu0 0.0
    %2791 = vmatpush1.msra.mxu0 %v2680
    %2792 = vmatprep.subr.mxu0 0.0
    %2793 = vmatpush1.msra.mxu0 %v2681
    %2794 = vmatprep.subr.mxu0 0.0
    %2795 = vmatpush1.msra.mxu0 %v2682
    %2796 = vmatprep.subr.mxu0 0.0
    %2797 = vmatpush1.msra.mxu0 %v2683
    %2798 = vmatprep.subr.mxu0 0.0
    %2799 = vmatpush1.msra.mxu0 %v2684
    %2800 = vmatprep.subr.mxu0 0.0
    %2801 = vmatpush1.msra.mxu0 %v2685
    %2802 = vmatprep.subr.mxu0 0.0
    %2803 = vmatpush1.msra.mxu0 %v2686
    %2804 = vmatprep.subr.mxu0 0.0
    %2805 = vmatpush1.msra.mxu0 %v2687
    %2806 = vmatprep.subr.mxu0 0.0
    %2807 = vmatpush1.msra.mxu0 %v2688
    %2808 = vmatprep.subr.mxu0 0.0
    %2809 = vmatpush1.msra.mxu0 0.0
    %2810 = vmatprep.subr.mxu0 0.0
    %2811 = vmatpush1.msra.mxu0 0.0
    %2812 = vmatprep.subr.mxu0 0.0
    %2813 = vmatpush1.msra.mxu0 0.0
    %2814 = vmatprep.subr.mxu0 0.0
    %2815 = vmatpush1.msra.mxu0 0.0
    %2816 = vmatprep.subr.mxu0 0.0
    %2817 = vmatpush1.msra.mxu0 0.0
    %2818 = vmatprep.subr.mxu0 0.0
    %2819 = vmatpush1.msra.mxu0 0.0
    %2820 = vmatprep.subr.mxu0 0.0
    %2821 = vmatpush1.msra.mxu0 0.0
    %2822 = vmatprep.subr.mxu0 0.0
    %2823 = vmatpush1.msra.mxu0 0.0
    %2824 = vmatprep.subr.mxu0 0.0
    %2825 = vmatpush1.msra.mxu0 0.0
    %2826 = vmatprep.subr.mxu0 0.0
    %2827 = vmatpush1.msra.mxu0 0.0
    %2828 = vmatprep.subr.mxu0 0.0
    %2829 = vmatpush1.msra.mxu0 0.0
    %2830 = vmatprep.subr.mxu0 0.0
    %2831 = vmatpush1.msra.mxu0 0.0
    %2832 = vmatprep.subr.mxu0 0.0
    %2833 = vmatpush1.msra.mxu0 0.0
    %2834 = vmatprep.subr.mxu0 0.0
    %2835 = vmatpush1.msra.mxu0 0.0
    %2836 = vmatprep.subr.mxu0 0.0
    %2837 = vmatpush1.msra.mxu0 0.0
    %2838 = vmatprep.subr.mxu0 0.0
    %2839 = vmatpush1.msra.mxu0 0.0
    %2840 = vmatprep.mubr.f32.mxu0 0.0
    %2841 = vmatmul.mubr.f32.gmra.mrb[0].mxu0 %v2129
    %v2842 = vpop.f32.mrb[0].mxu0
    %v2843 = vadd.f32 %v2773, %v2842
    %v2844 = vpop.f32.mrb[0].mxu0
    %2845 = vdwg.mxu0
    %s2846 = scalar_lea.vmem %s16, 6
    %v2847 = vld [vmem:[%s2846] sm:$0x1]
    %v2849 = vlaneseq
    %v2850 = vshrl.u32 %v2849, 7
    %v2851 = vsub.s32 0, %v2850
    %v2852 = vrot.slane %v2847, %v2851
    %v2854 = vadd.f32 %v2843, %v2852
    %v2855 = vmax.f32 %v2854, 0.0
    %s2856 = scalar_lea.vmem %s17, 768
    %v2857 = vld [vmem:[%s2856] sm:$0xff]
    %v2858 = vld [vmem:[%s2856 + $0x8] sm:$0xff]
    %v2859 = vld [vmem:[%s2856 + $0x10] sm:$0xff]
    %v2860 = vld [vmem:[%s2856 + $0x18] sm:$0xff]
    %v2861 = vld [vmem:[%s2856 + $0x20] sm:$0xff]
    %v2862 = vld [vmem:[%s2856 + $0x28] sm:$0xff]
    %v2863 = vld [vmem:[%s2856 + $0x30] sm:$0xff]
    %v2864 = vld [vmem:[%s2856 + $0x38] sm:$0xff]
    %v2865 = vld [vmem:[%s2856 + $0x40] sm:$0xff]
    %v2866 = vld [vmem:[%s2856 + $0x48] sm:$0xff]
    %v2867 = vld [vmem:[%s2856 + $0x50] sm:$0xff]
    %v2868 = vld [vmem:[%s2856 + $0x58] sm:$0xff]
    %v2869 = vld [vmem:[%s2856 + $0x60] sm:$0xff]
    %v2870 = vld [vmem:[%s2856 + $0x68] sm:$0xff]
    %v2871 = vld [vmem:[%s2856 + $0x70] sm:$0xff]
    %v2872 = vld [vmem:[%s2856 + $0x78] sm:$0xff]
    %s2873 = scalar_lea.vmem %s18, 6
    %v2874 = vld [vmem:[%s2873] sm:$0x1]
    %v2876 = vlaneseq
    %v2877 = vshrl.u32 %v2876, 7
    %v2878 = vsub.s32 0, %v2877
    %v2879 = vrot.slane %v2874, %v2878
    %2881 = vmatprep.subr.mxu0 0.0
    %2882 = vmatpush1.msra.mxu0 %v2857
    %2883 = vmatprep.subr.mxu0 0.0
    %2884 = vmatpush1.msra.mxu0 %v2858
    %2885 = vmatprep.subr.mxu0 0.0
    %2886 = vmatpush1.msra.mxu0 %v2859
    %2887 = vmatprep.subr.mxu0 0.0
    %2888 = vmatpush1.msra.mxu0 %v2860
    %2889 = vmatprep.subr.mxu0 0.0
    %2890 = vmatpush1.msra.mxu0 %v2861
    %2891 = vmatprep.subr.mxu0 0.0
    %2892 = vmatpush1.msra.mxu0 %v2862
    %2893 = vmatprep.subr.mxu0 0.0
    %2894 = vmatpush1.msra.mxu0 %v2863
    %2895 = vmatprep.subr.mxu0 0.0
    %2896 = vmatpush1.msra.mxu0 %v2864
    %2897 = vmatprep.subr.mxu0 0.0
    %2898 = vmatpush1.msra.mxu0 %v2865
    %2899 = vmatprep.subr.mxu0 0.0
    %2900 = vmatpush1.msra.mxu0 %v2866
    %2901 = vmatprep.subr.mxu0 0.0
    %2902 = vmatpush1.msra.mxu0 %v2867
    %2903 = vmatprep.subr.mxu0 0.0
    %2904 = vmatpush1.msra.mxu0 %v2868
    %2905 = vmatprep.subr.mxu0 0.0
    %2906 = vmatpush1.msra.mxu0 %v2869
    %2907 = vmatprep.subr.mxu0 0.0
    %2908 = vmatpush1.msra.mxu0 %v2870
    %2909 = vmatprep.subr.mxu0 0.0
    %2910 = vmatpush1.msra.mxu0 %v2871
    %2911 = vmatprep.subr.mxu0 0.0
    %2912 = vmatpush1.msra.mxu0 %v2872
    %2913 = vmatprep.subr.mxu0 0.0
    %2914 = vmatpush1.msra.mxu0 0.0
    %2915 = vmatprep.subr.mxu0 0.0
    %2916 = vmatpush1.msra.mxu0 0.0
    %2917 = vmatprep.subr.mxu0 0.0
    %2918 = vmatpush1.msra.mxu0 0.0
    %2919 = vmatprep.subr.mxu0 0.0
    %2920 = vmatpush1.msra.mxu0 0.0
    %2921 = vmatprep.subr.mxu0 0.0
    %2922 = vmatpush1.msra.mxu0 0.0
    %2923 = vmatprep.subr.mxu0 0.0
    %2924 = vmatpush1.msra.mxu0 0.0
    %2925 = vmatprep.subr.mxu0 0.0
    %2926 = vmatpush1.msra.mxu0 0.0
    %2927 = vmatprep.subr.mxu0 0.0
    %2928 = vmatpush1.msra.mxu0 0.0
    %2929 = vmatprep.subr.mxu0 0.0
    %2930 = vmatpush1.msra.mxu0 0.0
    %2931 = vmatprep.subr.mxu0 0.0
    %2932 = vmatpush1.msra.mxu0 0.0
    %2933 = vmatprep.subr.mxu0 0.0
    %2934 = vmatpush1.msra.mxu0 0.0
    %2935 = vmatprep.subr.mxu0 0.0
    %2936 = vmatpush1.msra.mxu0 0.0
    %2937 = vmatprep.subr.mxu0 0.0
    %2938 = vmatpush1.msra.mxu0 0.0
    %2939 = vmatprep.subr.mxu0 0.0
    %2940 = vmatpush1.msra.mxu0 0.0
    %2941 = vmatprep.subr.mxu0 0.0
    %2942 = vmatpush1.msra.mxu0 0.0
    %2943 = vmatprep.subr.mxu0 0.0
    %2944 = vmatpush1.msra.mxu0 0.0
    %2945 = vmatprep.mubr.f32.mxu0 0.0
    %2946 = vmatmul.mubr.f32.gmra.mrb[0].mxu0 %v2855
    %v2947 = vpop.f32.mrb[0].mxu0
    %v2948 = vadd.f32 %v2879, %v2947
    %v2949 = vpop.f32.mrb[0].mxu0
    %2950 = vdwg.mxu0
    %s2951 = scalar_lea.vmem %s14, 896
    %v2952 = vld [vmem:[%s2951] sm:$0xff]
    %v2953 = vld [vmem:[%s2951 + $0x8] sm:$0xff]
    %v2954 = vld [vmem:[%s2951 + $0x10] sm:$0xff]
    %v2955 = vld [vmem:[%s2951 + $0x18] sm:$0xff]
    %v2956 = vld [vmem:[%s2951 + $0x20] sm:$0xff]
    %v2957 = vld [vmem:[%s2951 + $0x28] sm:$0xff]
    %v2958 = vld [vmem:[%s2951 + $0x30] sm:$0xff]
    %v2959 = vld [vmem:[%s2951 + $0x38] sm:$0xff]
    %v2960 = vld [vmem:[%s2951 + $0x40] sm:$0xff]
    %v2961 = vld [vmem:[%s2951 + $0x48] sm:$0xff]
    %v2962 = vld [vmem:[%s2951 + $0x50] sm:$0xff]
    %v2963 = vld [vmem:[%s2951 + $0x58] sm:$0xff]
    %v2964 = vld [vmem:[%s2951 + $0x60] sm:$0xff]
    %v2965 = vld [vmem:[%s2951 + $0x68] sm:$0xff]
    %v2966 = vld [vmem:[%s2951 + $0x70] sm:$0xff]
    %v2967 = vld [vmem:[%s2951 + $0x78] sm:$0xff]
    %s2968 = scalar_lea.vmem %s16, 7
    %v2969 = vld [vmem:[%s2968] sm:$0x1]
    %v2971 = vlaneseq
    %v2972 = vshrl.u32 %v2971, 7
    %v2973 = vsub.s32 0, %v2972
    %v2974 = vrot.slane %v2969, %v2973
    %2976 = vmatprep.subr.mxu0 0.0
    %2977 = vmatpush1.msra.mxu0 %v2952
    %2978 = vmatprep.subr.mxu0 0.0
    %2979 = vmatpush1.msra.mxu0 %v2953
    %2980 = vmatprep.subr.mxu0 0.0
    %2981 = vmatpush1.msra.mxu0 %v2954
    %2982 = vmatprep.subr.mxu0 0.0
    %2983 = vmatpush1.msra.mxu0 %v2955
    %2984 = vmatprep.subr.mxu0 0.0
    %2985 = vmatpush1.msra.mxu0 %v2956
    %2986 = vmatprep.subr.mxu0 0.0
    %2987 = vmatpush1.msra.mxu0 %v2957
    %2988 = vmatprep.subr.mxu0 0.0
    %2989 = vmatpush1.msra.mxu0 %v2958
    %2990 = vmatprep.subr.mxu0 0.0
    %2991 = vmatpush1.msra.mxu0 %v2959
    %2992 = vmatprep.subr.mxu0 0.0
    %2993 = vmatpush1.msra.mxu0 %v2960
    %2994 = vmatprep.subr.mxu0 0.0
    %2995 = vmatpush1.msra.mxu0 %v2961
    %2996 = vmatprep.subr.mxu0 0.0
    %2997 = vmatpush1.msra.mxu0 %v2962
    %2998 = vmatprep.subr.mxu0 0.0
    %2999 = vmatpush1.msra.mxu0 %v2963
    %3000 = vmatprep.subr.mxu0 0.0
    %3001 = vmatpush1.msra.mxu0 %v2964
    %3002 = vmatprep.subr.mxu0 0.0
    %3003 = vmatpush1.msra.mxu0 %v2965
    %3004 = vmatprep.subr.mxu0 0.0
    %3005 = vmatpush1.msra.mxu0 %v2966
    %3006 = vmatprep.subr.mxu0 0.0
    %3007 = vmatpush1.msra.mxu0 %v2967
    %3008 = vmatprep.subr.mxu0 0.0
    %3009 = vmatpush1.msra.mxu0 0.0
    %3010 = vmatprep.subr.mxu0 0.0
    %3011 = vmatpush1.msra.mxu0 0.0
    %3012 = vmatprep.subr.mxu0 0.0
    %3013 = vmatpush1.msra.mxu0 0.0
    %3014 = vmatprep.subr.mxu0 0.0
    %3015 = vmatpush1.msra.mxu0 0.0
    %3016 = vmatprep.subr.mxu0 0.0
    %3017 = vmatpush1.msra.mxu0 0.0
    %3018 = vmatprep.subr.mxu0 0.0
    %3019 = vmatpush1.msra.mxu0 0.0
    %3020 = vmatprep.subr.mxu0 0.0
    %3021 = vmatpush1.msra.mxu0 0.0
    %3022 = vmatprep.subr.mxu0 0.0
    %3023 = vmatpush1.msra.mxu0 0.0
    %3024 = vmatprep.subr.mxu0 0.0
    %3025 = vmatpush1.msra.mxu0 0.0
    %3026 = vmatprep.subr.mxu0 0.0
    %3027 = vmatpush1.msra.mxu0 0.0
    %3028 = vmatprep.subr.mxu0 0.0
    %3029 = vmatpush1.msra.mxu0 0.0
    %3030 = vmatprep.subr.mxu0 0.0
    %3031 = vmatpush1.msra.mxu0 0.0
    %3032 = vmatprep.subr.mxu0 0.0
    %3033 = vmatpush1.msra.mxu0 0.0
    %3034 = vmatprep.subr.mxu0 0.0
    %3035 = vmatpush1.msra.mxu0 0.0
    %3036 = vmatprep.subr.mxu0 0.0
    %3037 = vmatpush1.msra.mxu0 0.0
    %3038 = vmatprep.subr.mxu0 0.0
    %3039 = vmatpush1.msra.mxu0 0.0
    %3040 = vmatprep.mubr.f32.mxu0 0.0
    %3041 = vmatmul.mubr.f32.gmra.mrb[0].mxu0 %v2199
    %v3042 = vpop.f32.mrb[0].mxu0
    %v3043 = vadd.f32 %v2974, %v3042
    %v3044 = vpop.f32.mrb[0].mxu0
    %3045 = vdwg.mxu0
    %v3046 = vmax.f32 %v3043, 0.0
    %s3047 = scalar_lea.vmem %s17, 896
    %v3048 = vld [vmem:[%s3047] sm:$0xff]
    %v3049 = vld [vmem:[%s3047 + $0x8] sm:$0xff]
    %v3050 = vld [vmem:[%s3047 + $0x10] sm:$0xff]
    %v3051 = vld [vmem:[%s3047 + $0x18] sm:$0xff]
    %v3052 = vld [vmem:[%s3047 + $0x20] sm:$0xff]
    %v3053 = vld [vmem:[%s3047 + $0x28] sm:$0xff]
    %v3054 = vld [vmem:[%s3047 + $0x30] sm:$0xff]
    %v3055 = vld [vmem:[%s3047 + $0x38] sm:$0xff]
    %v3056 = vld [vmem:[%s3047 + $0x40] sm:$0xff]
    %v3057 = vld [vmem:[%s3047 + $0x48] sm:$0xff]
    %v3058 = vld [vmem:[%s3047 + $0x50] sm:$0xff]
    %v3059 = vld [vmem:[%s3047 + $0x58] sm:$0xff]
    %v3060 = vld [vmem:[%s3047 + $0x60] sm:$0xff]
    %v3061 = vld [vmem:[%s3047 + $0x68] sm:$0xff]
    %v3062 = vld [vmem:[%s3047 + $0x70] sm:$0xff]
    %v3063 = vld [vmem:[%s3047 + $0x78] sm:$0xff]
    %s3064 = scalar_lea.vmem %s18, 7
    %v3065 = vld [vmem:[%s3064] sm:$0x1]
    %v3067 = vlaneseq
    %v3068 = vshrl.u32 %v3067, 7
    %v3069 = vsub.s32 0, %v3068
    %v3070 = vrot.slane %v3065, %v3069
    %3072 = vmatprep.subr.mxu0 0.0
    %3073 = vmatpush1.msra.mxu0 %v3048
    %3074 = vmatprep.subr.mxu0 0.0
    %3075 = vmatpush1.msra.mxu0 %v3049
    %3076 = vmatprep.subr.mxu0 0.0
    %3077 = vmatpush1.msra.mxu0 %v3050
    %3078 = vmatprep.subr.mxu0 0.0
    %3079 = vmatpush1.msra.mxu0 %v3051
    %3080 = vmatprep.subr.mxu0 0.0
    %3081 = vmatpush1.msra.mxu0 %v3052
    %3082 = vmatprep.subr.mxu0 0.0
    %3083 = vmatpush1.msra.mxu0 %v3053
    %3084 = vmatprep.subr.mxu0 0.0
    %3085 = vmatpush1.msra.mxu0 %v3054
    %3086 = vmatprep.subr.mxu0 0.0
    %3087 = vmatpush1.msra.mxu0 %v3055
    %3088 = vmatprep.subr.mxu0 0.0
    %3089 = vmatpush1.msra.mxu0 %v3056
    %3090 = vmatprep.subr.mxu0 0.0
    %3091 = vmatpush1.msra.mxu0 %v3057
    %3092 = vmatprep.subr.mxu0 0.0
    %3093 = vmatpush1.msra.mxu0 %v3058
    %3094 = vmatprep.subr.mxu0 0.0
    %3095 = vmatpush1.msra.mxu0 %v3059
    %3096 = vmatprep.subr.mxu0 0.0
    %3097 = vmatpush1.msra.mxu0 %v3060
    %3098 = vmatprep.subr.mxu0 0.0
    %3099 = vmatpush1.msra.mxu0 %v3061
    %3100 = vmatprep.subr.mxu0 0.0
    %3101 = vmatpush1.msra.mxu0 %v3062
    %3102 = vmatprep.subr.mxu0 0.0
    %3103 = vmatpush1.msra.mxu0 %v3063
    %3104 = vmatprep.subr.mxu0 0.0
    %3105 = vmatpush1.msra.mxu0 0.0
    %3106 = vmatprep.subr.mxu0 0.0
    %3107 = vmatpush1.msra.mxu0 0.0
    %3108 = vmatprep.subr.mxu0 0.0
    %3109 = vmatpush1.msra.mxu0 0.0
    %3110 = vmatprep.subr.mxu0 0.0
    %3111 = vmatpush1.msra.mxu0 0.0
    %3112 = vmatprep.subr.mxu0 0.0
    %3113 = vmatpush1.msra.mxu0 0.0
    %3114 = vmatprep.subr.mxu0 0.0
    %3115 = vmatpush1.msra.mxu0 0.0
    %3116 = vmatprep.subr.mxu0 0.0
    %3117 = vmatpush1.msra.mxu0 0.0
    %3118 = vmatprep.subr.mxu0 0.0
    %3119 = vmatpush1.msra.mxu0 0.0
    %3120 = vmatprep.subr.mxu0 0.0
    %3121 = vmatpush1.msra.mxu0 0.0
    %3122 = vmatprep.subr.mxu0 0.0
    %3123 = vmatpush1.msra.mxu0 0.0
    %3124 = vmatprep.subr.mxu0 0.0
    %3125 = vmatpush1.msra.mxu0 0.0
    %3126 = vmatprep.subr.mxu0 0.0
    %3127 = vmatpush1.msra.mxu0 0.0
    %3128 = vmatprep.subr.mxu0 0.0
    %3129 = vmatpush1.msra.mxu0 0.0
    %3130 = vmatprep.subr.mxu0 0.0
    %3131 = vmatpush1.msra.mxu0 0.0
    %3132 = vmatprep.subr.mxu0 0.0
    %3133 = vmatpush1.msra.mxu0 0.0
    %3134 = vmatprep.subr.mxu0 0.0
    %3135 = vmatpush1.msra.mxu0 0.0
    %3136 = vmatprep.mubr.f32.mxu0 0.0
    %3137 = vmatmul.mubr.f32.gmra.mrb[0].mxu0 %v3046
    %v3138 = vpop.f32.mrb[0].mxu0
    %v3139 = vadd.f32 %v3070, %v3138
    %v3140 = vpop.f32.mrb[0].mxu0
    %3141 = vdwg.mxu0
    %v3142 = vadd.f32 %v2478, %v2669
    %v3143 = vmax.f32 %v3142, 0.0
    %v3144 = vadd.f32 %v2948, %v3139
    %v3145 = vmax.f32 %v3144, 0.0
    %v3146 = vld [vmem:[%s19] sm:$0xff]
    %v3147 = vld [vmem:[%s19 + $0x8] sm:$0xff]
    %v3148 = vld [vmem:[%s19 + $0x10] sm:$0xff]
    %v3149 = vld [vmem:[%s19 + $0x18] sm:$0xff]
    %v3150 = vld [vmem:[%s19 + $0x20] sm:$0xff]
    %v3151 = vld [vmem:[%s19 + $0x28] sm:$0xff]
    %v3152 = vld [vmem:[%s19 + $0x30] sm:$0xff]
    %v3153 = vld [vmem:[%s19 + $0x38] sm:$0xff]
    %v3154 = vld [vmem:[%s19 + $0x40] sm:$0xff]
    %v3155 = vld [vmem:[%s19 + $0x48] sm:$0xff]
    %v3156 = vld [vmem:[%s19 + $0x50] sm:$0xff]
    %v3157 = vld [vmem:[%s19 + $0x58] sm:$0xff]
    %v3158 = vld [vmem:[%s19 + $0x60] sm:$0xff]
    %v3159 = vld [vmem:[%s19 + $0x68] sm:$0xff]
    %v3160 = vld [vmem:[%s19 + $0x70] sm:$0xff]
    %v3161 = vld [vmem:[%s19 + $0x78] sm:$0xff]
    %v3162 = vld [vmem:[%s20] sm:$0x1]
    %v3164 = vlaneseq
    %v3165 = vshrl.u32 %v3164, 7
    %v3166 = vsub.s32 0, %v3165
    %v3167 = vrot.slane %v3162, %v3166
    %3169 = vmatprep.subr.mxu0 0.0
    %3170 = vmatpush1.msra.mxu0 %v3146
    %3171 = vmatprep.subr.mxu0 0.0
    %3172 = vmatpush1.msra.mxu0 %v3147
    %3173 = vmatprep.subr.mxu0 0.0
    %3174 = vmatpush1.msra.mxu0 %v3148
    %3175 = vmatprep.subr.mxu0 0.0
    %3176 = vmatpush1.msra.mxu0 %v3149
    %3177 = vmatprep.subr.mxu0 0.0
    %3178 = vmatpush1.msra.mxu0 %v3150
    %3179 = vmatprep.subr.mxu0 0.0
    %3180 = vmatpush1.msra.mxu0 %v3151
    %3181 = vmatprep.subr.mxu0 0.0
    %3182 = vmatpush1.msra.mxu0 %v3152
    %3183 = vmatprep.subr.mxu0 0.0
    %3184 = vmatpush1.msra.mxu0 %v3153
    %3185 = vmatprep.subr.mxu0 0.0
    %3186 = vmatpush1.msra.mxu0 %v3154
    %3187 = vmatprep.subr.mxu0 0.0
    %3188 = vmatpush1.msra.mxu0 %v3155
    %3189 = vmatprep.subr.mxu0 0.0
    %3190 = vmatpush1.msra.mxu0 %v3156
    %3191 = vmatprep.subr.mxu0 0.0
    %3192 = vmatpush1.msra.mxu0 %v3157
    %3193 = vmatprep.subr.mxu0 0.0
    %3194 = vmatpush1.msra.mxu0 %v3158
    %3195 = vmatprep.subr.mxu0 0.0
    %3196 = vmatpush1.msra.mxu0 %v3159
    %3197 = vmatprep.subr.mxu0 0.0
    %3198 = vmatpush1.msra.mxu0 %v3160
    %3199 = vmatprep.subr.mxu0 0.0
    %3200 = vmatpush1.msra.mxu0 %v3161
    %3201 = vmatprep.subr.mxu0 0.0
    %3202 = vmatpush1.msra.mxu0 0.0
    %3203 = vmatprep.subr.mxu0 0.0
    %3204 = vmatpush1.msra.mxu0 0.0
    %3205 = vmatprep.subr.mxu0 0.0
    %3206 = vmatpush1.msra.mxu0 0.0
    %3207 = vmatprep.subr.mxu0 0.0
    %3208 = vmatpush1.msra.mxu0 0.0
    %3209 = vmatprep.subr.mxu0 0.0
    %3210 = vmatpush1.msra.mxu0 0.0
    %3211 = vmatprep.subr.mxu0 0.0
    %3212 = vmatpush1.msra.mxu0 0.0
    %3213 = vmatprep.subr.mxu0 0.0
    %3214 = vmatpush1.msra.mxu0 0.0
    %3215 = vmatprep.subr.mxu0 0.0
    %3216 = vmatpush1.msra.mxu0 0.0
    %3217 = vmatprep.subr.mxu0 0.0
    %3218 = vmatpush1.msra.mxu0 0.0
    %3219 = vmatprep.subr.mxu0 0.0
    %3220 = vmatpush1.msra.mxu0 0.0
    %3221 = vmatprep.subr.mxu0 0.0
    %3222 = vmatpush1.msra.mxu0 0.0
    %3223 = vmatprep.subr.mxu0 0.0
    %3224 = vmatpush1.msra.mxu0 0.0
    %3225 = vmatprep.subr.mxu0 0.0
    %3226 = vmatpush1.msra.mxu0 0.0
    %3227 = vmatprep.subr.mxu0 0.0
    %3228 = vmatpush1.msra.mxu0 0.0
    %3229 = vmatprep.subr.mxu0 0.0
    %3230 = vmatpush1.msra.mxu0 0.0
    %3231 = vmatprep.subr.mxu0 0.0
    %3232 = vmatpush1.msra.mxu0 0.0
    %3233 = vmatprep.mubr.f32.mxu0 0.0
    %3234 = vmatmul.mubr.f32.gmra.mrb[0].mxu0 %v3143
    %v3235 = vpop.f32.mrb[0].mxu0
    %v3236 = vadd.f32 %v3167, %v3235
    %v3237 = vpop.f32.mrb[0].mxu0
    %3238 = vdwg.mxu0
    %3239 = vst [vmem:[#allocation2] sm:$0xff] %v3236
    %v3240 = vld [vmem:[%s21] sm:$0xff]
    %v3241 = vld [vmem:[%s21 + $0x8] sm:$0xff]
    %v3242 = vld [vmem:[%s21 + $0x10] sm:$0xff]
    %v3243 = vld [vmem:[%s21 + $0x18] sm:$0xff]
    %v3244 = vld [vmem:[%s21 + $0x20] sm:$0xff]
    %v3245 = vld [vmem:[%s21 + $0x28] sm:$0xff]
    %v3246 = vld [vmem:[%s21 + $0x30] sm:$0xff]
    %v3247 = vld [vmem:[%s21 + $0x38] sm:$0xff]
    %v3248 = vld [vmem:[%s21 + $0x40] sm:$0xff]
    %v3249 = vld [vmem:[%s21 + $0x48] sm:$0xff]
    %v3250 = vld [vmem:[%s21 + $0x50] sm:$0xff]
    %v3251 = vld [vmem:[%s21 + $0x58] sm:$0xff]
    %v3252 = vld [vmem:[%s21 + $0x60] sm:$0xff]
    %v3253 = vld [vmem:[%s21 + $0x68] sm:$0xff]
    %v3254 = vld [vmem:[%s21 + $0x70] sm:$0xff]
    %v3255 = vld [vmem:[%s21 + $0x78] sm:$0xff]
    %v3256 = vld [vmem:[%s22] sm:$0x1]
    %v3258 = vlaneseq
    %v3259 = vshrl.u32 %v3258, 7
    %v3260 = vsub.s32 0, %v3259
    %v3261 = vrot.slane %v3256, %v3260
    %3263 = vmatprep.subr.mxu0 0.0
    %3264 = vmatpush1.msra.mxu0 %v3240
    %3265 = vmatprep.subr.mxu0 0.0
    %3266 = vmatpush1.msra.mxu0 %v3241
    %3267 = vmatprep.subr.mxu0 0.0
    %3268 = vmatpush1.msra.mxu0 %v3242
    %3269 = vmatprep.subr.mxu0 0.0
    %3270 = vmatpush1.msra.mxu0 %v3243
    %3271 = vmatprep.subr.mxu0 0.0
    %3272 = vmatpush1.msra.mxu0 %v3244
    %3273 = vmatprep.subr.mxu0 0.0
    %3274 = vmatpush1.msra.mxu0 %v3245
    %3275 = vmatprep.subr.mxu0 0.0
    %3276 = vmatpush1.msra.mxu0 %v3246
    %3277 = vmatprep.subr.mxu0 0.0
    %3278 = vmatpush1.msra.mxu0 %v3247
    %3279 = vmatprep.subr.mxu0 0.0
    %3280 = vmatpush1.msra.mxu0 %v3248
    %3281 = vmatprep.subr.mxu0 0.0
    %3282 = vmatpush1.msra.mxu0 %v3249
    %3283 = vmatprep.subr.mxu0 0.0
    %3284 = vmatpush1.msra.mxu0 %v3250
    %3285 = vmatprep.subr.mxu0 0.0
    %3286 = vmatpush1.msra.mxu0 %v3251
    %3287 = vmatprep.subr.mxu0 0.0
    %3288 = vmatpush1.msra.mxu0 %v3252
    %3289 = vmatprep.subr.mxu0 0.0
    %3290 = vmatpush1.msra.mxu0 %v3253
    %3291 = vmatprep.subr.mxu0 0.0
    %3292 = vmatpush1.msra.mxu0 %v3254
    %3293 = vmatprep.subr.mxu0 0.0
    %3294 = vmatpush1.msra.mxu0 %v3255
    %3295 = vmatprep.subr.mxu0 0.0
    %3296 = vmatpush1.msra.mxu0 0.0
    %3297 = vmatprep.subr.mxu0 0.0
    %3298 = vmatpush1.msra.mxu0 0.0
    %3299 = vmatprep.subr.mxu0 0.0
    %3300 = vmatpush1.msra.mxu0 0.0
    %3301 = vmatprep.subr.mxu0 0.0
    %3302 = vmatpush1.msra.mxu0 0.0
    %3303 = vmatprep.subr.mxu0 0.0
    %3304 = vmatpush1.msra.mxu0 0.0
    %3305 = vmatprep.subr.mxu0 0.0
    %3306 = vmatpush1.msra.mxu0 0.0
    %3307 = vmatprep.subr.mxu0 0.0
    %3308 = vmatpush1.msra.mxu0 0.0
    %3309 = vmatprep.subr.mxu0 0.0
    %3310 = vmatpush1.msra.mxu0 0.0
    %3311 = vmatprep.subr.mxu0 0.0
    %3312 = vmatpush1.msra.mxu0 0.0
    %3313 = vmatprep.subr.mxu0 0.0
    %3314 = vmatpush1.msra.mxu0 0.0
    %3315 = vmatprep.subr.mxu0 0.0
    %3316 = vmatpush1.msra.mxu0 0.0
    %3317 = vmatprep.subr.mxu0 0.0
    %3318 = vmatpush1.msra.mxu0 0.0
    %3319 = vmatprep.subr.mxu0 0.0
    %3320 = vmatpush1.msra.mxu0 0.0
    %3321 = vmatprep.subr.mxu0 0.0
    %3322 = vmatpush1.msra.mxu0 0.0
    %3323 = vmatprep.subr.mxu0 0.0
    %3324 = vmatpush1.msra.mxu0 0.0
    %3325 = vmatprep.subr.mxu0 0.0
    %3326 = vmatpush1.msra.mxu0 0.0
    %3327 = vmatprep.mubr.f32.mxu0 0.0
    %3328 = vmatmul.mubr.f32.gmra.mrb[0].mxu0 %v3145
    %v3329 = vpop.f32.mrb[0].mxu0
    %v3330 = vadd.f32 %v3261, %v3329
    %v3331 = vpop.f32.mrb[0].mxu0
    %3332 = vdwg.mxu0
    %3333 = vst [vmem:[%s24] sm:$0xff] %v3330
    // Predicated region
    $region94: #{gnn_forward.1} parent=1 // pred_check
      _
    $region95: #{gnn_forward.1} parent=1 // pred_check_branch
      %3335 = sbr.rel (0) target = $region97
    $region96: #{gnn_forward.1} parent=1 // pred_region
      %s3337 = ssub.s32 128, 128
      %3338 = vsyncadd [#allocation3], %s3337
      %s3340 = sshll.u32 [#allocation2], 4
      %s3341 = int_to_ptr.vmem [resolvable:$true] %s3340
      %3343 = dma.vmem_to_hbm [thread:$0]  %s3341, 128, %s23, [#allocation3]
    $region97: #{gnn_forward.1} parent=1 // pred_fallthru
      _
    // Predicated region
    $region98: #{gnn_forward.1} parent=1 // pred_check
      _
    $region99: #{gnn_forward.1} parent=1 // pred_check_branch
      %3345 = sbr.rel (0) target = $region101
    $region100: #{gnn_forward.1} parent=1 // pred_region
      _
    $region101: #{gnn_forward.1} parent=1 // pred_fallthru
      _
    // Predicated region
    $region102: #{gnn_forward.1} parent=1 // pred_check
      _
    $region103: #{gnn_forward.1} parent=1 // pred_check_branch
      %3347 = sbr.rel (0) target = $region105
    $region104: #{gnn_forward.1} parent=1 // pred_region
      %3348 = dma.done [#allocation3], 128
    $region105: #{gnn_forward.1} parent=1 // pred_fallthru
      _
    // Predicated region
    $region106: #{gnn_forward.1} parent=1 // pred_check
      _
    $region107: #{gnn_forward.1} parent=1 // pred_check_branch
      %3350 = sbr.rel (0) target = $region109
    $region108: #{gnn_forward.1} parent=1 // pred_region
      _
    $region109: #{gnn_forward.1} parent=1 // pred_fallthru
      _
    %3351 = vsyncpa [#allocation3], 1

</llo_original>
